<compile_context>
chip_gen: v5e
topology: v5e:2x2
jax: 0.10.0
libtpu: 0.0.40
codegen_flags: <defaults>
</compile_context>

<pallas_src>
import functools

import jax
import jax.numpy as jnp
from jax.experimental import pallas as pl
from jax.experimental.pallas import tpu as pltpu


# ----------------------------------------------------------------------------- utils
def _round_up(x, m):
    return ((x + m - 1) // m) * m


def _ceil_div(a, b):
    return -(-a // b)


@functools.lru_cache(maxsize=1)
def _num_tensorcores():
    """Heuristic TensorCore count per chip (v5e/v6e: 1; v4 megacore / v7x: 2)."""
    try:
        kind = jax.devices()[0].device_kind.lower()
    except Exception:
        return 1
    if ("v7" in kind) or ("7x" in kind) or ("v4" in kind):
        return 2
    return 1


def _choose_tm(m_groups, num_tc):
    """Pick the M tile: one fat tile per TensorCore for the largest group."""
    m_max = max(m_groups)
    tm = _ceil_div(m_max, 2) if num_tc >= 2 else m_max
    tm = min(tm, 512)                      # keep per-tile VMEM small & pipeline-able
    return max(16, _round_up(tm, 16))      # 16-row alignment for bf16 sublane packing


# ----------------------------------------------------------------------------- Pallas kernel
def _gmm_kernel(gid_ref, x_ref, w_ref, b_ref, o_ref, *, activation):
    """One M tile of a grouped matmul:  o = act(x @ W[g] + b[g]).

    gid_ref : (T,) int32 in SMEM (scalar prefetch; consumed by index_maps only)
    x_ref   : (tm, Kp)   bf16  im2col rows for this tile
    w_ref   : (1, Kp, Np) bf16 weights of this tile's group (selected by index_map)
    b_ref   : (1, 1, Np)  f32  bias of this tile's group
    o_ref   : (tm, Np)   bf16  lane-dense (Np = multiple of 128) output tile
    """
    del gid_ref  # only used by the index_maps
    acc = jnp.dot(x_ref[...], w_ref[0], preferred_element_type=jnp.float32)
    out = acc + b_ref[0]
    if activation == "relu":
        out = jnp.maximum(out, 0.0)
    o_ref[...] = out.astype(o_ref.dtype)   # minimal epilogue: bias + ReLU + cast only


def _grouped_matmul(slabs, wmats, biases, activation):
    """One pallas_call computing act(slab_g @ W_g + b_g) for every group g.

    slabs  : list of (M_g, K_g) bf16 im2col matrices
    wmats  : list of (K_g, Cout) weights (same Cout for all groups)
    biases : list of (Cout,) biases
    Returns a list of (M_g, Cout) bf16 results.
    """
    G = len(slabs)
    cout = wmats[0].shape[1]
    Kp = _round_up(max(a.shape[1] for a in slabs), 16)   # bf16: K multiple of 16
    Np = _round_up(cout, 128)                            # lane-dense output
    num_tc = _num_tensorcores()
    m_groups = [int(a.shape[0]) for a in slabs]
    tm = _choose_tm(m_groups, num_tc)

    # Pad every group slab to K=Kp and M=multiple of tm, concat along M, record the
    # group id of every M tile (consumed by the weight/bias index_maps via prefetch).
    x_parts, gid_parts, m_padded = [], [], []
    for g, a in enumerate(slabs):
        mg, kg = a.shape
        mg_pad = _round_up(mg, tm)
        x_parts.append(jnp.pad(a, ((0, mg_pad - mg), (0, Kp - kg))))
        gid_parts.extend([g] * (mg_pad // tm))
        m_padded.append(mg_pad)
    x_all = jnp.concatenate(x_parts, axis=0) if G > 1 else x_parts[0]
    num_tiles = len(gid_parts)
    gids = jnp.asarray(gid_parts, dtype=jnp.int32)

    w_stack = jnp.stack([
        jnp.pad(w.astype(jnp.bfloat16), ((0, Kp - w.shape[0]), (0, Np - cout)))
        for w in wmats])                                             # (G, Kp, Np)
    b_stack = jnp.stack([
        jnp.pad(b.astype(jnp.float32), (0, Np - cout)).reshape(1, Np)
        for b in biases])                                            # (G, 1, Np)

    bytes_step = tm * Kp * 2 + Kp * Np * 2 + Np * 4 + tm * Np * 2
    vmem_limit = int(min(56 * 1024 * 1024, max(8 * 1024 * 1024, 4 * bytes_step)))

    kernel = functools.partial(_gmm_kernel, activation=activation)
    out = pl.pallas_call(
        kernel,
        out_shape=jax.ShapeDtypeStruct((num_tiles * tm, Np), jnp.bfloat16),
        grid_spec=pltpu.PrefetchScalarGridSpec(
            num_scalar_prefetch=1,
            grid=(num_tiles,),
            in_specs=[
                pl.BlockSpec((tm, Kp), lambda i, gid: (i, 0)),
                pl.BlockSpec((1, Kp, Np), lambda i, gid: (gid[i], 0, 0)),
                pl.BlockSpec((1, 1, Np), lambda i, gid: (gid[i], 0, 0)),
            ],
            out_specs=pl.BlockSpec((tm, Np), lambda i, gid: (i, 0)),
        ),
        compiler_params=pltpu.CompilerParams(
            dimension_semantics=("parallel",),
            vmem_limit_bytes=vmem_limit),
    )(gids, x_all, w_stack, b_stack)

    # Split back per group; these slices fuse into the consumers under jit.
    results, off = [], 0
    for mg, mg_pad in zip(m_groups, m_padded):
        results.append(out[off:off + mg, :cout])
        off += mg_pad
    return results


# ----------------------------------------------------------------------------- conv wrappers
def _im2col(x, kh, kw, stride, pad):
    """NHWC bf16 -> (B*Ho*Wo, kh*kw*C) bf16 patch matrix (fused jnp under jit)."""
    B, H, W, C = x.shape
    Ho = (H + 2 * pad - kh) // stride + 1
    Wo = (W + 2 * pad - kw) // stride + 1
    xp = jnp.pad(x, ((0, 0), (pad, pad), (pad, pad), (0, 0)))
    cols = [xp[:, i:i + stride * Ho:stride, j:j + stride * Wo:stride, :]
            for i in range(kh) for j in range(kw)]
    a = jnp.concatenate(cols, axis=-1).reshape(B * Ho * Wo, kh * kw * C)
    return a, Ho, Wo


def conv2d_grouped(xs, ws, bs, stride, pad, activation=None):
    """G same-shaped-kernel convs (different weights / Cin / spatial) in ONE launch."""
    kh, kw = ws[0].shape[0], ws[0].shape[1]
    cout = ws[0].shape[3]
    assert all(w.shape[0] == kh and w.shape[1] == kw and w.shape[3] == cout for w in ws)
    slabs, shapes = [], []
    for x in xs:
        a, Ho, Wo = _im2col(x.astype(jnp.bfloat16), kh, kw, stride, pad)
        slabs.append(a)
        shapes.append((x.shape[0], Ho, Wo))
    wmats = [w.reshape(kh * kw * w.shape[2], cout) for w in ws]
    outs = _grouped_matmul(slabs, wmats, bs, activation)
    return [o.reshape(B, Ho, Wo, cout) for o, (B, Ho, Wo) in zip(outs, shapes)]


def conv2d(x, w, b, stride, pad, activation=None):
    return conv2d_grouped([x], [w], [b], stride, pad, activation)[0]


def upsample2x_nearest(x):
    return jnp.repeat(jnp.repeat(x, 2, axis=1), 2, axis=2)


# ----------------------------------------------------------------------------- parameter init
def _init_conv(key, kh, kw, cin, cout):
    wk, bk = jax.random.split(key)
    fan_in = kh * kw * cin
    w = jax.random.normal(wk, (kh, kw, cin, cout), jnp.float32) / jnp.sqrt(float(fan_in))
    b = 0.01 * jax.random.normal(bk, (cout,), jnp.float32)
    return w, b


# ----------------------------------------------------------------------------- forward
def _forward(params, img, has_neck):
    x = jnp.transpose(img, (0, 2, 3, 1)).astype(jnp.bfloat16)   # NCHW -> NHWC, bf16 path
    feats = []
    for (w, b) in params["backbone"]:
        x = conv2d(x, w, b, stride=2, pad=1, activation="relu")
        feats.append(x)
    if has_neck:
        # all three 1x1 laterals in ONE pallas_call (per-group Cin zero-padded to a
        # common K inside the grouped matmul)
        lat_ws = [w for (w, _) in params["laterals"]]
        lat_bs = [b for (_, b) in params["laterals"]]
        lats = conv2d_grouped(feats, lat_ws, lat_bs, stride=1, pad=0, activation=None)
        for i in range(len(lats) - 2, -1, -1):                   # top-down pathway
            lats[i] = lats[i] + upsample2x_nearest(lats[i + 1])
        # all three 3x3 FPN output convs in ONE pallas_call
        fpn_ws = [w for (w, _) in params["fpn"]]
        fpn_bs = [b for (_, b) in params["fpn"]]
        feats = conv2d_grouped(lats, fpn_ws, fpn_bs, stride=1, pad=1, activation=None)
    w, b = params["head_conv"]
    x = conv2d(feats[0], w, b, stride=1, pad=1, activation="relu")
    # GAP + tiny FC tail stays in plain jnp (f32): a padded pallas_call would cost far
    # more in launch / HBM overhead than the ~2 KFLOPs of real work.
    pooled = jnp.mean(x.astype(jnp.float32), axis=(1, 2))        # (B, C)
    preds = pooled @ params["fc_w"] + params["fc_b"]             # (B, num_outputs) f32
    return {"lane_preds": preds}


def _reference_forward(params, img, has_neck):
    """Pure-jnp f32 reference of the same forward (loose bf16-tolerant check)."""
    def conv(x, w, b, stride, pad, relu):
        out = jax.lax.conv_general_dilated(
            x, w, window_strides=(stride, stride),
            padding=((pad, pad), (pad, pad)),
            dimension_numbers=("NHWC", "HWIO", "NHWC"))
        out = out + b
        return jnp.maximum(out, 0.0) if relu else out

    x = jnp.transpose(img, (0, 2, 3, 1)).astype(jnp.float32)
    feats = []
    for (w, b) in params["backbone"]:
        x = conv(x, w, b, 2, 1, True)
        feats.append(x)
    if has_neck:
        lats = [conv(f, w, b, 1, 0, False) for f, (w, b) in zip(feats, params["laterals"])]
        for i in range(len(lats) - 2, -1, -1):
            lats[i] = lats[i] + upsample2x_nearest(lats[i + 1])
        feats = [conv(l, w, b, 1, 1, False) for l, (w, b) in zip(lats, params["fpn"])]
    w, b = params["head_conv"]
    x = conv(feats[0], w, b, 1, 1, True)
    pooled = jnp.mean(x, axis=(1, 2))
    return pooled @ params["fc_w"] + params["fc_b"]


# ----------------------------------------------------------------------------- cfg / Detector
class Cfg:
    def __init__(self, **kwargs):
        self.__dict__.update(kwargs)

    def haskey(self, key):
        return key in self.__dict__


class Detector:
    """JAX/Pallas re-implementation of the CLRNet Detector forward pass:
       fea = backbone(img); fea = neck(fea) if neck; output = heads(fea)  (eval mode)."""

    def __init__(self, cfg, key):
        self.cfg = cfg
        self.training = False  # forward implements the eval path: heads(fea)
        self.has_neck = cfg.haskey("neck")

        bb_chs = cfg.backbone_channels
        fpn_ch = cfg.fpn_channels
        keys = iter(jax.random.split(key, 3 * len(bb_chs) + 2))

        params = {}
        # backbone: 3 stride-2 3x3 conv stages
        backbone = []
        cin = cfg.in_channels
        for cout in bb_chs:
            backbone.append(_init_conv(next(keys), 3, 3, cin, cout))
            cin = cout
        params["backbone"] = backbone

        # neck (FPN): 1x1 laterals + 3x3 output convs
        if self.has_neck:
            params["laterals"] = [_init_conv(next(keys), 1, 1, c, fpn_ch) for c in bb_chs]
            params["fpn"] = [_init_conv(next(keys), 3, 3, fpn_ch, fpn_ch) for _ in bb_chs]
            head_ch = fpn_ch
        else:
            head_ch = bb_chs[0]

        # head: 3x3 conv + GAP + linear
        params["head_conv"] = _init_conv(next(keys), 3, 3, head_ch, head_ch)
        wk, bk = jax.random.split(next(keys))
        params["fc_w"] = (jax.random.normal(wk, (head_ch, cfg.num_outputs), jnp.float32)
                          / jnp.sqrt(float(head_ch)))
        params["fc_b"] = 0.01 * jax.random.normal(bk, (cfg.num_outputs,), jnp.float32)

        self.params = params
        self._fwd = jax.jit(functools.partial(_forward, has_neck=self.has_neck))

    # ---- Detector.forward ----
    def forward(self, batch):
        img = batch["img"] if isinstance(batch, dict) else batch
        # TODO(synk): training branch heads(fea, batch=batch) (loss computation) and
        # get_lanes() decoding not implemented; eval-mode forward only.
        return self._fwd(self.params, img)


# ----------------------------------------------------------------------------- main
if __name__ == "__main__":
    key = jax.random.PRNGKey(0)
    pkey, xkey = jax.random.split(key)

    cfg = Cfg(
        in_channels=3,
        backbone_channels=[8, 16, 32],
        neck=dict(type="FPN"),
        fpn_channels=16,
        num_outputs=64,
    )

    detector = Detector(cfg, pkey)
    img = jax.random.normal(xkey, (2, 3, 32, 32), jnp.float32)  # NCHW like PyTorch

    out = detector.forward({"img": img})
    out = jax.tree_util.tree_map(jax.block_until_ready, out)
    assert out["lane_preds"].shape == (2, cfg.num_outputs)
    assert jnp.all(jnp.isfinite(out["lane_preds"]))

    # loose correctness check vs a pure-jnp f32 reference (bf16 data path in the kernels)
    ref = _reference_forward(detector.params, img, detector.has_neck)
    max_err = float(jnp.max(jnp.abs(out["lane_preds"] - ref)))
    assert jnp.allclose(out["lane_preds"], ref, atol=1e-1, rtol=1e-1), max_err

    print("KERNEL_OK")
</pallas_src>

<mosaic_0001>
module attributes {stable_mosaic.version = 11 : i64} {
  func.func @_gmm_kernel(%arg0: i32, %arg1: memref<1xi32, #tpu.memory_space<smem>>, %arg2: memref<512x32xbf16, #tpu.memory_space<vmem>>, %arg3: memref<1x32x128xbf16, #tpu.memory_space<vmem>>, %arg4: memref<1x1x128xf32, #tpu.memory_space<vmem>>, %arg5: memref<512x128xbf16, #tpu.memory_space<vmem>>) attributes {dimension_semantics = [#tpu.dimension_semantics<parallel>], iteration_bounds = array<i64: 1>, scalar_prefetch = 1 : i64, scratch_operands = 0 : i64, tpu.core_type = #tpu.core_type<tc>, window_params = [{transform_indices = @transform_0, window_bounds = array<i64: 512, 32>}, {transform_indices = @transform_1, window_bounds = array<i64: 1, 32, 128>}, {transform_indices = @transform_2, window_bounds = array<i64: 1, 1, 128>}, {transform_indices = @transform_3, window_bounds = array<i64: 512, 128>}]} {
    %c0 = arith.constant 0 : index
    %c0_0 = arith.constant 0 : index
    %0 = vector.load %arg2[%c0, %c0_0] : memref<512x32xbf16, #tpu.memory_space<vmem>>, vector<512x32xbf16>
    %c0_1 = arith.constant 0 : index
    %c0_2 = arith.constant 0 : index
    %c0_3 = arith.constant 0 : index
    %1 = vector.load %arg3[%c0_1, %c0_2, %c0_3] : memref<1x32x128xbf16, #tpu.memory_space<vmem>>, vector<1x32x128xbf16>
    %2 = vector.shape_cast %1 : vector<1x32x128xbf16> to vector<32x128xbf16>
    %cst = arith.constant dense<0.000000e+00> : vector<512x128xf32>
    %3 = tpu.matmul %0, %2, %cst {dimension_numbers = #tpu.dot_dimension_numbers<[1], [0], [0], [1], [0, 0, 1, 1], [], []>} : vector<512x32xbf16>, vector<32x128xbf16>, vector<512x128xf32> -> vector<512x128xf32>
    %c0_4 = arith.constant 0 : index
    %c0_5 = arith.constant 0 : index
    %c0_6 = arith.constant 0 : index
    %4 = vector.load %arg4[%c0_4, %c0_5, %c0_6] : memref<1x1x128xf32, #tpu.memory_space<vmem>>, vector<1x1x128xf32>
    %5 = vector.shape_cast %4 : vector<1x1x128xf32> to vector<1x128xf32>
    %6 = vector.broadcast %5 : vector<1x128xf32> to vector<512x128xf32>
    %7 = arith.addf %3, %6 : vector<512x128xf32>
    %cst_7 = arith.constant 0.000000e+00 : f32
    %8 = vector.broadcast %cst_7 : f32 to vector<512x128xf32>
    %9 = arith.maximumf %7, %8 : vector<512x128xf32>
    %10 = arith.truncf %9 : vector<512x128xf32> to vector<512x128xbf16>
    %c0_8 = arith.constant 0 : index
    %c0_9 = arith.constant 0 : index
    %11 = vector.load %arg5[%c0_8, %c0_9] : memref<512x128xbf16, #tpu.memory_space<vmem>>, vector<512x128xbf16>
    tpu.vector_store %arg5[%c0_8, %c0_9], %10 {strides = array<i32>} : memref<512x128xbf16, #tpu.memory_space<vmem>>, vector<512x128xbf16>,
    return
  }
  func.func @transform_0(%arg0: i32, %arg1: memref<1xi32, #tpu.memory_space<smem>>) -> (i32, i32) {
    %c0_i32 = arith.constant 0 : i32
    %c0_i32_0 = arith.constant 0 : i32
    return %arg0, %c0_i32 : i32, i32
  }
  func.func @transform_1(%arg0: i32, %arg1: memref<1xi32, #tpu.memory_space<smem>>) -> (i32, i32, i32) {
    %0 = arith.index_cast %arg0 : i32 to index
    %1 = memref.load %arg1[%0] : memref<1xi32, #tpu.memory_space<smem>>
    %c0_i32 = arith.constant 0 : i32
    %c0_i32_0 = arith.constant 0 : i32
    %c0_i32_1 = arith.constant 0 : i32
    return %1, %c0_i32, %c0_i32_0 : i32, i32, i32
  }
  func.func @transform_2(%arg0: i32, %arg1: memref<1xi32, #tpu.memory_space<smem>>) -> (i32, i32, i32) {
    %0 = arith.index_cast %arg0 : i32 to index
    %1 = memref.load %arg1[%0] : memref<1xi32, #tpu.memory_space<smem>>
    %c0_i32 = arith.constant 0 : i32
    %c0_i32_0 = arith.constant 0 : i32
    %c0_i32_1 = arith.constant 0 : i32
    return %1, %c0_i32, %c0_i32_0 : i32, i32, i32
  }
  func.func @transform_3(%arg0: i32, %arg1: memref<1xi32, #tpu.memory_space<smem>>) -> (i32, i32) {
    %c0_i32 = arith.constant 0 : i32
    %c0_i32_0 = arith.constant 0 : i32
    return %arg0, %c0_i32 : i32, i32
  }
}

module attributes {stable_mosaic.version = 11 : i64} {
  func.func @_gmm_kernel(%arg0: i32, %arg1: memref<1xi32, #tpu.memory_space<smem>>, %arg2: memref<128x80xbf16, #tpu.memory_space<vmem>>, %arg3: memref<1x80x128xbf16, #tpu.memory_space<vmem>>, %arg4: memref<1x1x128xf32, #tpu.memory_space<vmem>>, %arg5: memref<128x128xbf16, #tpu.memory_space<vmem>>) attributes {dimension_semantics = [#tpu.dimension_semantics<parallel>], iteration_bounds = array<i64: 1>, scalar_prefetch = 1 : i64, scratch_operands = 0 : i64, tpu.core_type = #tpu.core_type<tc>, window_params = [{transform_indices = @transform_0, window_bounds = array<i64: 128, 80>}, {transform_indices = @transform_1, window_bounds = array<i64: 1, 80, 128>}, {transform_indices = @transform_2, window_bounds = array<i64: 1, 1, 128>}, {transform_indices = @transform_3, window_bounds = array<i64: 128, 128>}]} {
    %c0 = arith.constant 0 : index
    %c0_0 = arith.constant 0 : index
    %0 = vector.load %arg2[%c0, %c0_0] : memref<128x80xbf16, #tpu.memory_space<vmem>>, vector<128x80xbf16>
    %c0_1 = arith.constant 0 : index
    %c0_2 = arith.constant 0 : index
    %c0_3 = arith.constant 0 : index
    %1 = vector.load %arg3[%c0_1, %c0_2, %c0_3] : memref<1x80x128xbf16, #tpu.memory_space<vmem>>, vector<1x80x128xbf16>
    %2 = vector.shape_cast %1 : vector<1x80x128xbf16> to vector<80x128xbf16>
    %cst = arith.constant dense<0.000000e+00> : vector<128x128xf32>
    %3 = tpu.matmul %0, %2, %cst {dimension_numbers = #tpu.dot_dimension_numbers<[1], [0], [0], [1], [0, 0, 1, 1], [], []>} : vector<128x80xbf16>, vector<80x128xbf16>, vector<128x128xf32> -> vector<128x128xf32>
    %c0_4 = arith.constant 0 : index
    %c0_5 = arith.constant 0 : index
    %c0_6 = arith.constant 0 : index
    %4 = vector.load %arg4[%c0_4, %c0_5, %c0_6] : memref<1x1x128xf32, #tpu.memory_space<vmem>>, vector<1x1x128xf32>
    %5 = vector.shape_cast %4 : vector<1x1x128xf32> to vector<1x128xf32>
    %6 = vector.broadcast %5 : vector<1x128xf32> to vector<128x128xf32>
    %7 = arith.addf %3, %6 : vector<128x128xf32>
    %cst_7 = arith.constant 0.000000e+00 : f32
    %8 = vector.broadcast %cst_7 : f32 to vector<128x128xf32>
    %9 = arith.maximumf %7, %8 : vector<128x128xf32>
    %10 = arith.truncf %9 : vector<128x128xf32> to vector<128x128xbf16>
    %c0_8 = arith.constant 0 : index
    %c0_9 = arith.constant 0 : index
    %11 = vector.load %arg5[%c0_8, %c0_9] : memref<128x128xbf16, #tpu.memory_space<vmem>>, vector<128x128xbf16>
    tpu.vector_store %arg5[%c0_8, %c0_9], %10 {strides = array<i32>} : memref<128x128xbf16, #tpu.memory_space<vmem>>, vector<128x128xbf16>,
    return
  }
  func.func @transform_0(%arg0: i32, %arg1: memref<1xi32, #tpu.memory_space<smem>>) -> (i32, i32) {
    %c0_i32 = arith.constant 0 : i32
    %c0_i32_0 = arith.constant 0 : i32
    return %arg0, %c0_i32 : i32, i32
  }
  func.func @transform_1(%arg0: i32, %arg1: memref<1xi32, #tpu.memory_space<smem>>) -> (i32, i32, i32) {
    %0 = arith.index_cast %arg0 : i32 to index
    %1 = memref.load %arg1[%0] : memref<1xi32, #tpu.memory_space<smem>>
    %c0_i32 = arith.constant 0 : i32
    %c0_i32_0 = arith.constant 0 : i32
    %c0_i32_1 = arith.constant 0 : i32
    return %1, %c0_i32, %c0_i32_0 : i32, i32, i32
  }
  func.func @transform_2(%arg0: i32, %arg1: memref<1xi32, #tpu.memory_space<smem>>) -> (i32, i32, i32) {
    %0 = arith.index_cast %arg0 : i32 to index
    %1 = memref.load %arg1[%0] : memref<1xi32, #tpu.memory_space<smem>>
    %c0_i32 = arith.constant 0 : i32
    %c0_i32_0 = arith.constant 0 : i32
    %c0_i32_1 = arith.constant 0 : i32
    return %1, %c0_i32, %c0_i32_0 : i32, i32, i32
  }
  func.func @transform_3(%arg0: i32, %arg1: memref<1xi32, #tpu.memory_space<smem>>) -> (i32, i32) {
    %c0_i32 = arith.constant 0 : i32
    %c0_i32_0 = arith.constant 0 : i32
    return %arg0, %c0_i32 : i32, i32
  }
}

module attributes {stable_mosaic.version = 11 : i64} {
  func.func @_gmm_kernel(%arg0: i32, %arg1: memref<1xi32, #tpu.memory_space<smem>>, %arg2: memref<32x144xbf16, #tpu.memory_space<vmem>>, %arg3: memref<1x144x128xbf16, #tpu.memory_space<vmem>>, %arg4: memref<1x1x128xf32, #tpu.memory_space<vmem>>, %arg5: memref<32x128xbf16, #tpu.memory_space<vmem>>) attributes {dimension_semantics = [#tpu.dimension_semantics<parallel>], iteration_bounds = array<i64: 1>, scalar_prefetch = 1 : i64, scratch_operands = 0 : i64, tpu.core_type = #tpu.core_type<tc>, window_params = [{transform_indices = @transform_0, window_bounds = array<i64: 32, 144>}, {transform_indices = @transform_1, window_bounds = array<i64: 1, 144, 128>}, {transform_indices = @transform_2, window_bounds = array<i64: 1, 1, 128>}, {transform_indices = @transform_3, window_bounds = array<i64: 32, 128>}]} {
    %c0 = arith.constant 0 : index
    %c0_0 = arith.constant 0 : index
    %0 = vector.load %arg2[%c0, %c0_0] : memref<32x144xbf16, #tpu.memory_space<vmem>>, vector<32x144xbf16>
    %c0_1 = arith.constant 0 : index
    %c0_2 = arith.constant 0 : index
    %c0_3 = arith.constant 0 : index
    %1 = vector.load %arg3[%c0_1, %c0_2, %c0_3] : memref<1x144x128xbf16, #tpu.memory_space<vmem>>, vector<1x144x128xbf16>
    %2 = vector.shape_cast %1 : vector<1x144x128xbf16> to vector<144x128xbf16>
    %cst = arith.constant dense<0.000000e+00> : vector<32x128xf32>
    %3 = tpu.matmul %0, %2, %cst {dimension_numbers = #tpu.dot_dimension_numbers<[1], [0], [0], [1], [0, 0, 1, 1], [], []>} : vector<32x144xbf16>, vector<144x128xbf16>, vector<32x128xf32> -> vector<32x128xf32>
    %c0_4 = arith.constant 0 : index
    %c0_5 = arith.constant 0 : index
    %c0_6 = arith.constant 0 : index
    %4 = vector.load %arg4[%c0_4, %c0_5, %c0_6] : memref<1x1x128xf32, #tpu.memory_space<vmem>>, vector<1x1x128xf32>
    %5 = vector.shape_cast %4 : vector<1x1x128xf32> to vector<1x128xf32>
    %6 = vector.broadcast %5 : vector<1x128xf32> to vector<32x128xf32>
    %7 = arith.addf %3, %6 : vector<32x128xf32>
    %cst_7 = arith.constant 0.000000e+00 : f32
    %8 = vector.broadcast %cst_7 : f32 to vector<32x128xf32>
    %9 = arith.maximumf %7, %8 : vector<32x128xf32>
    %10 = arith.truncf %9 : vector<32x128xf32> to vector<32x128xbf16>
    %c0_8 = arith.constant 0 : index
    %c0_9 = arith.constant 0 : index
    %11 = vector.load %arg5[%c0_8, %c0_9] : memref<32x128xbf16, #tpu.memory_space<vmem>>, vector<32x128xbf16>
    tpu.vector_store %arg5[%c0_8, %c0_9], %10 {strides = array<i32>} : memref<32x128xbf16, #tpu.memory_space<vmem>>, vector<32x128xbf16>,
    return
  }
  func.func @transform_0(%arg0: i32, %arg1: memref<1xi32, #tpu.memory_space<smem>>) -> (i32, i32) {
    %c0_i32 = arith.constant 0 : i32
    %c0_i32_0 = arith.constant 0 : i32
    return %arg0, %c0_i32 : i32, i32
  }
  func.func @transform_1(%arg0: i32, %arg1: memref<1xi32, #tpu.memory_space<smem>>) -> (i32, i32, i32) {
    %0 = arith.index_cast %arg0 : i32 to index
    %1 = memref.load %arg1[%0] : memref<1xi32, #tpu.memory_space<smem>>
    %c0_i32 = arith.constant 0 : i32
    %c0_i32_0 = arith.constant 0 : i32
    %c0_i32_1 = arith.constant 0 : i32
    return %1, %c0_i32, %c0_i32_0 : i32, i32, i32
  }
  func.func @transform_2(%arg0: i32, %arg1: memref<1xi32, #tpu.memory_space<smem>>) -> (i32, i32, i32) {
    %0 = arith.index_cast %arg0 : i32 to index
    %1 = memref.load %arg1[%0] : memref<1xi32, #tpu.memory_space<smem>>
    %c0_i32 = arith.constant 0 : i32
    %c0_i32_0 = arith.constant 0 : i32
    %c0_i32_1 = arith.constant 0 : i32
    return %1, %c0_i32, %c0_i32_0 : i32, i32, i32
  }
  func.func @transform_3(%arg0: i32, %arg1: memref<1xi32, #tpu.memory_space<smem>>) -> (i32, i32) {
    %c0_i32 = arith.constant 0 : i32
    %c0_i32_0 = arith.constant 0 : i32
    return %arg0, %c0_i32 : i32, i32
  }
}

module attributes {stable_mosaic.version = 11 : i64} {
  func.func @_gmm_kernel(%arg0: i32, %arg1: memref<3xi32, #tpu.memory_space<smem>>, %arg2: memref<512x32xbf16, #tpu.memory_space<vmem>>, %arg3: memref<1x32x128xbf16, #tpu.memory_space<vmem>>, %arg4: memref<1x1x128xf32, #tpu.memory_space<vmem>>, %arg5: memref<512x128xbf16, #tpu.memory_space<vmem>>) attributes {dimension_semantics = [#tpu.dimension_semantics<parallel>], iteration_bounds = array<i64: 3>, scalar_prefetch = 1 : i64, scratch_operands = 0 : i64, tpu.core_type = #tpu.core_type<tc>, window_params = [{transform_indices = @transform_0, window_bounds = array<i64: 512, 32>}, {transform_indices = @transform_1, window_bounds = array<i64: 1, 32, 128>}, {transform_indices = @transform_2, window_bounds = array<i64: 1, 1, 128>}, {transform_indices = @transform_3, window_bounds = array<i64: 512, 128>}]} {
    %c0 = arith.constant 0 : index
    %c0_0 = arith.constant 0 : index
    %0 = vector.load %arg2[%c0, %c0_0] : memref<512x32xbf16, #tpu.memory_space<vmem>>, vector<512x32xbf16>
    %c0_1 = arith.constant 0 : index
    %c0_2 = arith.constant 0 : index
    %c0_3 = arith.constant 0 : index
    %1 = vector.load %arg3[%c0_1, %c0_2, %c0_3] : memref<1x32x128xbf16, #tpu.memory_space<vmem>>, vector<1x32x128xbf16>
    %2 = vector.shape_cast %1 : vector<1x32x128xbf16> to vector<32x128xbf16>
    %cst = arith.constant dense<0.000000e+00> : vector<512x128xf32>
    %3 = tpu.matmul %0, %2, %cst {dimension_numbers = #tpu.dot_dimension_numbers<[1], [0], [0], [1], [0, 0, 1, 1], [], []>} : vector<512x32xbf16>, vector<32x128xbf16>, vector<512x128xf32> -> vector<512x128xf32>
    %c0_4 = arith.constant 0 : index
    %c0_5 = arith.constant 0 : index
    %c0_6 = arith.constant 0 : index
    %4 = vector.load %arg4[%c0_4, %c0_5, %c0_6] : memref<1x1x128xf32, #tpu.memory_space<vmem>>, vector<1x1x128xf32>
    %5 = vector.shape_cast %4 : vector<1x1x128xf32> to vector<1x128xf32>
    %6 = vector.broadcast %5 : vector<1x128xf32> to vector<512x128xf32>
    %7 = arith.addf %3, %6 : vector<512x128xf32>
    %8 = arith.truncf %7 : vector<512x128xf32> to vector<512x128xbf16>
    %c0_7 = arith.constant 0 : index
    %c0_8 = arith.constant 0 : index
    %9 = vector.load %arg5[%c0_7, %c0_8] : memref<512x128xbf16, #tpu.memory_space<vmem>>, vector<512x128xbf16>
    tpu.vector_store %arg5[%c0_7, %c0_8], %8 {strides = array<i32>} : memref<512x128xbf16, #tpu.memory_space<vmem>>, vector<512x128xbf16>,
    return
  }
  func.func @transform_0(%arg0: i32, %arg1: memref<3xi32, #tpu.memory_space<smem>>) -> (i32, i32) {
    %c0_i32 = arith.constant 0 : i32
    %c0_i32_0 = arith.constant 0 : i32
    return %arg0, %c0_i32 : i32, i32
  }
  func.func @transform_1(%arg0: i32, %arg1: memref<3xi32, #tpu.memory_space<smem>>) -> (i32, i32, i32) {
    %0 = arith.index_cast %arg0 : i32 to index
    %1 = memref.load %arg1[%0] : memref<3xi32, #tpu.memory_space<smem>>
    %c0_i32 = arith.constant 0 : i32
    %c0_i32_0 = arith.constant 0 : i32
    %c0_i32_1 = arith.constant 0 : i32
    return %1, %c0_i32, %c0_i32_0 : i32, i32, i32
  }
  func.func @transform_2(%arg0: i32, %arg1: memref<3xi32, #tpu.memory_space<smem>>) -> (i32, i32, i32) {
    %0 = arith.index_cast %arg0 : i32 to index
    %1 = memref.load %arg1[%0] : memref<3xi32, #tpu.memory_space<smem>>
    %c0_i32 = arith.constant 0 : i32
    %c0_i32_0 = arith.constant 0 : i32
    %c0_i32_1 = arith.constant 0 : i32
    return %1, %c0_i32, %c0_i32_0 : i32, i32, i32
  }
  func.func @transform_3(%arg0: i32, %arg1: memref<3xi32, #tpu.memory_space<smem>>) -> (i32, i32) {
    %c0_i32 = arith.constant 0 : i32
    %c0_i32_0 = arith.constant 0 : i32
    return %arg0, %c0_i32 : i32, i32
  }
}

module attributes {stable_mosaic.version = 11 : i64} {
  func.func @_gmm_kernel(%arg0: i32, %arg1: memref<3xi32, #tpu.memory_space<smem>>, %arg2: memref<512x144xbf16, #tpu.memory_space<vmem>>, %arg3: memref<1x144x128xbf16, #tpu.memory_space<vmem>>, %arg4: memref<1x1x128xf32, #tpu.memory_space<vmem>>, %arg5: memref<512x128xbf16, #tpu.memory_space<vmem>>) attributes {dimension_semantics = [#tpu.dimension_semantics<parallel>], iteration_bounds = array<i64: 3>, scalar_prefetch = 1 : i64, scratch_operands = 0 : i64, tpu.core_type = #tpu.core_type<tc>, window_params = [{transform_indices = @transform_0, window_bounds = array<i64: 512, 144>}, {transform_indices = @transform_1, window_bounds = array<i64: 1, 144, 128>}, {transform_indices = @transform_2, window_bounds = array<i64: 1, 1, 128>}, {transform_indices = @transform_3, window_bounds = array<i64: 512, 128>}]} {
    %c0 = arith.constant 0 : index
    %c0_0 = arith.constant 0 : index
    %0 = vector.load %arg2[%c0, %c0_0] : memref<512x144xbf16, #tpu.memory_space<vmem>>, vector<512x144xbf16>
    %c0_1 = arith.constant 0 : index
    %c0_2 = arith.constant 0 : index
    %c0_3 = arith.constant 0 : index
    %1 = vector.load %arg3[%c0_1, %c0_2, %c0_3] : memref<1x144x128xbf16, #tpu.memory_space<vmem>>, vector<1x144x128xbf16>
    %2 = vector.shape_cast %1 : vector<1x144x128xbf16> to vector<144x128xbf16>
    %cst = arith.constant dense<0.000000e+00> : vector<512x128xf32>
    %3 = tpu.matmul %0, %2, %cst {dimension_numbers = #tpu.dot_dimension_numbers<[1], [0], [0], [1], [0, 0, 1, 1], [], []>} : vector<512x144xbf16>, vector<144x128xbf16>, vector<512x128xf32> -> vector<512x128xf32>
    %c0_4 = arith.constant 0 : index
    %c0_5 = arith.constant 0 : index
    %c0_6 = arith.constant 0 : index
    %4 = vector.load %arg4[%c0_4, %c0_5, %c0_6] : memref<1x1x128xf32, #tpu.memory_space<vmem>>, vector<1x1x128xf32>
    %5 = vector.shape_cast %4 : vector<1x1x128xf32> to vector<1x128xf32>
    %6 = vector.broadcast %5 : vector<1x128xf32> to vector<512x128xf32>
    %7 = arith.addf %3, %6 : vector<512x128xf32>
    %8 = arith.truncf %7 : vector<512x128xf32> to vector<512x128xbf16>
    %c0_7 = arith.constant 0 : index
    %c0_8 = arith.constant 0 : index
    %9 = vector.load %arg5[%c0_7, %c0_8] : memref<512x128xbf16, #tpu.memory_space<vmem>>, vector<512x128xbf16>
    tpu.vector_store %arg5[%c0_7, %c0_8], %8 {strides = array<i32>} : memref<512x128xbf16, #tpu.memory_space<vmem>>, vector<512x128xbf16>,
    return
  }
  func.func @transform_0(%arg0: i32, %arg1: memref<3xi32, #tpu.memory_space<smem>>) -> (i32, i32) {
    %c0_i32 = arith.constant 0 : i32
    %c0_i32_0 = arith.constant 0 : i32
    return %arg0, %c0_i32 : i32, i32
  }
  func.func @transform_1(%arg0: i32, %arg1: memref<3xi32, #tpu.memory_space<smem>>) -> (i32, i32, i32) {
    %0 = arith.index_cast %arg0 : i32 to index
    %1 = memref.load %arg1[%0] : memref<3xi32, #tpu.memory_space<smem>>
    %c0_i32 = arith.constant 0 : i32
    %c0_i32_0 = arith.constant 0 : i32
    %c0_i32_1 = arith.constant 0 : i32
    return %1, %c0_i32, %c0_i32_0 : i32, i32, i32
  }
  func.func @transform_2(%arg0: i32, %arg1: memref<3xi32, #tpu.memory_space<smem>>) -> (i32, i32, i32) {
    %0 = arith.index_cast %arg0 : i32 to index
    %1 = memref.load %arg1[%0] : memref<3xi32, #tpu.memory_space<smem>>
    %c0_i32 = arith.constant 0 : i32
    %c0_i32_0 = arith.constant 0 : i32
    %c0_i32_1 = arith.constant 0 : i32
    return %1, %c0_i32, %c0_i32_0 : i32, i32, i32
  }
  func.func @transform_3(%arg0: i32, %arg1: memref<3xi32, #tpu.memory_space<smem>>) -> (i32, i32) {
    %c0_i32 = arith.constant 0 : i32
    %c0_i32_0 = arith.constant 0 : i32
    return %arg0, %c0_i32 : i32, i32
  }
}

module attributes {stable_mosaic.version = 11 : i64} {
  func.func @_gmm_kernel(%arg0: i32, %arg1: memref<1xi32, #tpu.memory_space<smem>>, %arg2: memref<512x144xbf16, #tpu.memory_space<vmem>>, %arg3: memref<1x144x128xbf16, #tpu.memory_space<vmem>>, %arg4: memref<1x1x128xf32, #tpu.memory_space<vmem>>, %arg5: memref<512x128xbf16, #tpu.memory_space<vmem>>) attributes {dimension_semantics = [#tpu.dimension_semantics<parallel>], iteration_bounds = array<i64: 1>, scalar_prefetch = 1 : i64, scratch_operands = 0 : i64, tpu.core_type = #tpu.core_type<tc>, window_params = [{transform_indices = @transform_0, window_bounds = array<i64: 512, 144>}, {transform_indices = @transform_1, window_bounds = array<i64: 1, 144, 128>}, {transform_indices = @transform_2, window_bounds = array<i64: 1, 1, 128>}, {transform_indices = @transform_3, window_bounds = array<i64: 512, 128>}]} {
    %c0 = arith.constant 0 : index
    %c0_0 = arith.constant 0 : index
    %0 = vector.load %arg2[%c0, %c0_0] : memref<512x144xbf16, #tpu.memory_space<vmem>>, vector<512x144xbf16>
    %c0_1 = arith.constant 0 : index
    %c0_2 = arith.constant 0 : index
    %c0_3 = arith.constant 0 : index
    %1 = vector.load %arg3[%c0_1, %c0_2, %c0_3] : memref<1x144x128xbf16, #tpu.memory_space<vmem>>, vector<1x144x128xbf16>
    %2 = vector.shape_cast %1 : vector<1x144x128xbf16> to vector<144x128xbf16>
    %cst = arith.constant dense<0.000000e+00> : vector<512x128xf32>
    %3 = tpu.matmul %0, %2, %cst {dimension_numbers = #tpu.dot_dimension_numbers<[1], [0], [0], [1], [0, 0, 1, 1], [], []>} : vector<512x144xbf16>, vector<144x128xbf16>, vector<512x128xf32> -> vector<512x128xf32>
    %c0_4 = arith.constant 0 : index
    %c0_5 = arith.constant 0 : index
    %c0_6 = arith.constant 0 : index
    %4 = vector.load %arg4[%c0_4, %c0_5, %c0_6] : memref<1x1x128xf32, #tpu.memory_space<vmem>>, vector<1x1x128xf32>
    %5 = vector.shape_cast %4 : vector<1x1x128xf32> to vector<1x128xf32>
    %6 = vector.broadcast %5 : vector<1x128xf32> to vector<512x128xf32>
    %7 = arith.addf %3, %6 : vector<512x128xf32>
    %cst_7 = arith.constant 0.000000e+00 : f32
    %8 = vector.broadcast %cst_7 : f32 to vector<512x128xf32>
    %9 = arith.maximumf %7, %8 : vector<512x128xf32>
    %10 = arith.truncf %9 : vector<512x128xf32> to vector<512x128xbf16>
    %c0_8 = arith.constant 0 : index
    %c0_9 = arith.constant 0 : index
    %11 = vector.load %arg5[%c0_8, %c0_9] : memref<512x128xbf16, #tpu.memory_space<vmem>>, vector<512x128xbf16>
    tpu.vector_store %arg5[%c0_8, %c0_9], %10 {strides = array<i32>} : memref<512x128xbf16, #tpu.memory_space<vmem>>, vector<512x128xbf16>,
    return
  }
  func.func @transform_0(%arg0: i32, %arg1: memref<1xi32, #tpu.memory_space<smem>>) -> (i32, i32) {
    %c0_i32 = arith.constant 0 : i32
    %c0_i32_0 = arith.constant 0 : i32
    return %arg0, %c0_i32 : i32, i32
  }
  func.func @transform_1(%arg0: i32, %arg1: memref<1xi32, #tpu.memory_space<smem>>) -> (i32, i32, i32) {
    %0 = arith.index_cast %arg0 : i32 to index
    %1 = memref.load %arg1[%0] : memref<1xi32, #tpu.memory_space<smem>>
    %c0_i32 = arith.constant 0 : i32
    %c0_i32_0 = arith.constant 0 : i32
    %c0_i32_1 = arith.constant 0 : i32
    return %1, %c0_i32, %c0_i32_0 : i32, i32, i32
  }
  func.func @transform_2(%arg0: i32, %arg1: memref<1xi32, #tpu.memory_space<smem>>) -> (i32, i32, i32) {
    %0 = arith.index_cast %arg0 : i32 to index
    %1 = memref.load %arg1[%0] : memref<1xi32, #tpu.memory_space<smem>>
    %c0_i32 = arith.constant 0 : i32
    %c0_i32_0 = arith.constant 0 : i32
    %c0_i32_1 = arith.constant 0 : i32
    return %1, %c0_i32, %c0_i32_0 : i32, i32, i32
  }
  func.func @transform_3(%arg0: i32, %arg1: memref<1xi32, #tpu.memory_space<smem>>) -> (i32, i32) {
    %c0_i32 = arith.constant 0 : i32
    %c0_i32_0 = arith.constant 0 : i32
    return %arg0, %c0_i32 : i32, i32
  }
}

</mosaic_0001>

<llo_original>
// kernel: _forward.6
$region0: #{_forward.6}
  #allocation0 [shape = 'u32[]', space=smem, size = 0x4, offset = 0x4, fixed_abs, tag = 'smem constant byte address 0x4 - core index']
  #allocation1 [shape = 'u32[72,128]{1,0:T(1,128)}', space=vmem, size = 0x9000, scoped, tag = 'internal scratch']
  #allocation2 [shape = 's32[1]{0}', space=sflag, size = 0x4, scoped, tag = 'scoped memory for _forward.6']
  #allocation3 [shape = 's32[1]{0:T(128)S(6)}', space=smem, size = 0x200, scoped, tag = 'prefetched SMEM operand 0']
  %s0 = inlined_call_operand.<no memory space> [shape: s32[1], index: 0, kind: input, shape index: {}]
  %s1 = inlined_call_operand.vmem [shape: bf16[512,32], index: 1, kind: input, shape index: {}]
  %s2 = inlined_call_operand.vmem [shape: bf16[1,32,128], index: 2, kind: input, shape index: {}]
  %s3 = inlined_call_operand.vmem [shape: f32[1,1,128], index: 3, kind: input, shape index: {}]
  %s4 = inlined_call_operand.vmem [shape: bf16[512,128], index: 4, kind: output, shape index: {}]
  %s5 = sld [smem:[#allocation0]]
  $region22: #{_forward.6} parent=0
    _
  %s7 = ssub.s32 1, %s5
  %s8 = scalar_select 0, %s7, %s5
  %9 = sst [smem:[#allocation3]] %s0
  // Predicated region
  $region2: #{_forward.6} parent=0 // pred_check
    _
  $region3: #{_forward.6} parent=0 // pred_check_branch
    %11 = sbr.rel (0) target = $region5
  $region4: #{_forward.6} parent=0 // pred_region
    _
  $region5: #{_forward.6} parent=0 // pred_fallthru
    _
  // Predicated region
  $region6: #{_forward.6} parent=0 // pred_check
    _
  $region7: #{_forward.6} parent=0 // pred_check_branch
    %13 = sbr.rel (0) target = $region9
  $region8: #{_forward.6} parent=0 // pred_region
    %s14 = sld [smem:[#allocation3]]
    %p15 = scmp.lt.s32.totalorder %s14, 0
    %s16 = scalar_select %p15, %s14, 0
    %s17 = smul.addr %s16, 4
    %s18 = smul.addr %s17, 4
    %s19 = scalar_lea.vmem %s2, %s18
    %s20 = sld [smem:[#allocation3]]
  $region9: #{_forward.6} parent=0 // pred_fallthru
    _
  // Predicated region
  $region10: #{_forward.6} parent=0 // pred_check
    _
  $region11: #{_forward.6} parent=0 // pred_check_branch
    %22 = sbr.rel (0) target = $region13
  $region12: #{_forward.6} parent=0 // pred_region
    %s23 = sld [smem:[#allocation3]]
    %p24 = scmp.lt.s32.totalorder %s23, 0
    %s25 = scalar_select %p24, %s23, 0
    %s26 = scalar_lea.vmem %s3, %s25
    %s27 = sld [smem:[#allocation3]]
  $region13: #{_forward.6} parent=0 // pred_fallthru
    _
  %s28 = sld [smem:[#allocation3]]
  %p29 = scmp.lt.s32.totalorder %s28, 0
  %s30 = scalar_select %p29, %s28, 0
  %s31 = smul.addr %s30, 4
  %s32 = smul.addr %s31, 4
  %s33 = scalar_lea.vmem %s2, %s32
  %s34 = sld [smem:[#allocation3]]
  %p35 = scmp.lt.s32.totalorder %s34, 0
  %s36 = scalar_select %p35, %s34, 0
  %s37 = scalar_lea.vmem %s3, %s36
  %s38 = sld [smem:[#allocation3]]
  %p39 = scmp.lt.s32.totalorder %s38, 0
  %s40 = scalar_select %p39, %s38, 0
  %s41 = smul.addr %s40, 4
  %s42 = smul.addr %s41, 4
  %s43 = scalar_lea.vmem %s2, %s42
  %s44 = sld [smem:[#allocation3]]
  %s45 = sld [smem:[#allocation3]]
  %p46 = scmp.lt.s32.totalorder %s45, 0
  %s47 = scalar_select %p46, %s45, 0
  %s48 = scalar_lea.vmem %s3, %s47
  %s49 = sld [smem:[#allocation3]]
  %v51 = vld [vmem:[%s1] sm:$0xf]
  %v52 = vld [vmem:[%s1 + $0x4] sm:$0xf]
  %v53 = vld [vmem:[%s1 + $0x8] sm:$0xf]
  %v54 = vld [vmem:[%s1 + $0xc] sm:$0xf]
  %v55 = vld [vmem:[%s1 + $0x10] sm:$0xf]
  %v56 = vld [vmem:[%s1 + $0x14] sm:$0xf]
  %v57 = vld [vmem:[%s1 + $0x18] sm:$0xf]
  %v58 = vld [vmem:[%s1 + $0x1c] sm:$0xf]
  %v59 = vld [vmem:[%s1 + $0x20] sm:$0xf]
  %v60 = vld [vmem:[%s1 + $0x24] sm:$0xf]
  %v61 = vld [vmem:[%s1 + $0x28] sm:$0xf]
  %v62 = vld [vmem:[%s1 + $0x2c] sm:$0xf]
  %v63 = vld [vmem:[%s1 + $0x30] sm:$0xf]
  %v64 = vld [vmem:[%s1 + $0x34] sm:$0xf]
  %v65 = vld [vmem:[%s1 + $0x38] sm:$0xf]
  %v66 = vld [vmem:[%s1 + $0x3c] sm:$0xf]
  %v67 = vld [vmem:[%s1 + $0x40] sm:$0xf]
  %v68 = vld [vmem:[%s1 + $0x44] sm:$0xf]
  %v69 = vld [vmem:[%s1 + $0x48] sm:$0xf]
  %v70 = vld [vmem:[%s1 + $0x4c] sm:$0xf]
  %v71 = vld [vmem:[%s1 + $0x50] sm:$0xf]
  %v72 = vld [vmem:[%s1 + $0x54] sm:$0xf]
  %v73 = vld [vmem:[%s1 + $0x58] sm:$0xf]
  %v74 = vld [vmem:[%s1 + $0x5c] sm:$0xf]
  %v75 = vld [vmem:[%s1 + $0x60] sm:$0xf]
  %v76 = vld [vmem:[%s1 + $0x64] sm:$0xf]
  %v77 = vld [vmem:[%s1 + $0x68] sm:$0xf]
  %v78 = vld [vmem:[%s1 + $0x6c] sm:$0xf]
  %v79 = vld [vmem:[%s1 + $0x70] sm:$0xf]
  %v80 = vld [vmem:[%s1 + $0x74] sm:$0xf]
  %v81 = vld [vmem:[%s1 + $0x78] sm:$0xf]
  %v82 = vld [vmem:[%s1 + $0x7c] sm:$0xf]
  %v83 = vld [vmem:[%s1 + $0x80] sm:$0xf]
  %v84 = vld [vmem:[%s1 + $0x84] sm:$0xf]
  %v85 = vld [vmem:[%s1 + $0x88] sm:$0xf]
  %v86 = vld [vmem:[%s1 + $0x8c] sm:$0xf]
  %v87 = vld [vmem:[%s1 + $0x90] sm:$0xf]
  %v88 = vld [vmem:[%s1 + $0x94] sm:$0xf]
  %v89 = vld [vmem:[%s1 + $0x98] sm:$0xf]
  %v90 = vld [vmem:[%s1 + $0x9c] sm:$0xf]
  %v91 = vld [vmem:[%s1 + $0xa0] sm:$0xf]
  %v92 = vld [vmem:[%s1 + $0xa4] sm:$0xf]
  %v93 = vld [vmem:[%s1 + $0xa8] sm:$0xf]
  %v94 = vld [vmem:[%s1 + $0xac] sm:$0xf]
  %v95 = vld [vmem:[%s1 + $0xb0] sm:$0xf]
  %v96 = vld [vmem:[%s1 + $0xb4] sm:$0xf]
  %v97 = vld [vmem:[%s1 + $0xb8] sm:$0xf]
  %v98 = vld [vmem:[%s1 + $0xbc] sm:$0xf]
  %v99 = vld [vmem:[%s1 + $0xc0] sm:$0xf]
  %v100 = vld [vmem:[%s1 + $0xc4] sm:$0xf]
  %v101 = vld [vmem:[%s1 + $0xc8] sm:$0xf]
  %v102 = vld [vmem:[%s1 + $0xcc] sm:$0xf]
  %v103 = vld [vmem:[%s1 + $0xd0] sm:$0xf]
  %v104 = vld [vmem:[%s1 + $0xd4] sm:$0xf]
  %v105 = vld [vmem:[%s1 + $0xd8] sm:$0xf]
  %v106 = vld [vmem:[%s1 + $0xdc] sm:$0xf]
  %v107 = vld [vmem:[%s1 + $0xe0] sm:$0xf]
  %v108 = vld [vmem:[%s1 + $0xe4] sm:$0xf]
  %v109 = vld [vmem:[%s1 + $0xe8] sm:$0xf]
  %v110 = vld [vmem:[%s1 + $0xec] sm:$0xf]
  %v111 = vld [vmem:[%s1 + $0xf0] sm:$0xf]
  %v112 = vld [vmem:[%s1 + $0xf4] sm:$0xf]
  %v113 = vld [vmem:[%s1 + $0xf8] sm:$0xf]
  %v114 = vld [vmem:[%s1 + $0xfc] sm:$0xf]
  %v115 = vld [vmem:[%s43] sm:$0xf]
  %v116 = vld [vmem:[%s43 + $0x4] sm:$0xf]
  %v117 = vld [vmem:[%s43 + $0x8] sm:$0xf]
  %v118 = vld [vmem:[%s43 + $0xc] sm:$0xf]
  %v119 = vld [vmem:[%s48] sm:$0x1]
  %v121 = vperm.slane %v119, 0
  %v187 = vunpack.c.l.b16 %v51
  %v188 = vunpack.c.l.b16 %v52
  %v189 = vunpack.c.l.b16 %v53
  %v190 = vunpack.c.l.b16 %v54
  %v191 = vunpack.c.l.b16 %v55
  %v192 = vunpack.c.l.b16 %v56
  %v193 = vunpack.c.l.b16 %v57
  %v194 = vunpack.c.l.b16 %v58
  %v195 = vunpack.c.l.b16 %v59
  %v196 = vunpack.c.l.b16 %v60
  %v197 = vunpack.c.l.b16 %v61
  %v198 = vunpack.c.l.b16 %v62
  %v199 = vunpack.c.l.b16 %v63
  %v200 = vunpack.c.l.b16 %v64
  %v201 = vunpack.c.l.b16 %v65
  %v202 = vunpack.c.l.b16 %v66
  %v203 = vunpack.c.l.b16 %v67
  %v204 = vunpack.c.l.b16 %v68
  %v205 = vunpack.c.l.b16 %v69
  %v206 = vunpack.c.l.b16 %v70
  %v207 = vunpack.c.l.b16 %v71
  %v208 = vunpack.c.l.b16 %v72
  %v209 = vunpack.c.l.b16 %v73
  %v210 = vunpack.c.l.b16 %v74
  %v211 = vunpack.c.l.b16 %v75
  %v212 = vunpack.c.l.b16 %v76
  %v213 = vunpack.c.l.b16 %v77
  %v214 = vunpack.c.l.b16 %v78
  %v215 = vunpack.c.l.b16 %v79
  %v216 = vunpack.c.l.b16 %v80
  %v217 = vunpack.c.l.b16 %v81
  %v218 = vunpack.c.l.b16 %v82
  %v219 = vunpack.c.l.b16 %v83
  %v220 = vunpack.c.l.b16 %v84
  %v221 = vunpack.c.l.b16 %v85
  %v222 = vunpack.c.l.b16 %v86
  %v223 = vunpack.c.l.b16 %v87
  %v224 = vunpack.c.l.b16 %v88
  %v225 = vunpack.c.l.b16 %v89
  %v226 = vunpack.c.l.b16 %v90
  %v227 = vunpack.c.l.b16 %v91
  %v228 = vunpack.c.l.b16 %v92
  %v229 = vunpack.c.l.b16 %v93
  %v230 = vunpack.c.l.b16 %v94
  %v231 = vunpack.c.l.b16 %v95
  %v232 = vunpack.c.l.b16 %v96
  %v233 = vunpack.c.l.b16 %v97
  %v234 = vunpack.c.l.b16 %v98
  %v235 = vunpack.c.l.b16 %v99
  %v236 = vunpack.c.l.b16 %v100
  %v237 = vunpack.c.l.b16 %v101
  %v238 = vunpack.c.l.b16 %v102
  %v239 = vunpack.c.l.b16 %v103
  %v240 = vunpack.c.l.b16 %v104
  %v241 = vunpack.c.l.b16 %v105
  %v242 = vunpack.c.l.b16 %v106
  %v243 = vunpack.c.l.b16 %v107
  %v244 = vunpack.c.l.b16 %v108
  %v245 = vunpack.c.l.b16 %v109
  %v246 = vunpack.c.l.b16 %v110
  %v247 = vunpack.c.l.b16 %v111
  %v248 = vunpack.c.l.b16 %v112
  %v249 = vunpack.c.l.b16 %v113
  %v250 = vunpack.c.l.b16 %v114
  %v251 = vpack.c.b16 %v188, %v187
  %v252 = vpack.c.b16 %v190, %v189
  %v253 = vpack.c.b16 %v192, %v191
  %v254 = vpack.c.b16 %v194, %v193
  %v255 = vpack.c.b16 %v196, %v195
  %v256 = vpack.c.b16 %v198, %v197
  %v257 = vpack.c.b16 %v200, %v199
  %v258 = vpack.c.b16 %v202, %v201
  %v259 = vpack.c.b16 %v204, %v203
  %v260 = vpack.c.b16 %v206, %v205
  %v261 = vpack.c.b16 %v208, %v207
  %v262 = vpack.c.b16 %v210, %v209
  %v263 = vpack.c.b16 %v212, %v211
  %v264 = vpack.c.b16 %v214, %v213
  %v265 = vpack.c.b16 %v216, %v215
  %v266 = vpack.c.b16 %v218, %v217
  %v267 = vpack.c.b16 %v220, %v219
  %v268 = vpack.c.b16 %v222, %v221
  %v269 = vpack.c.b16 %v224, %v223
  %v270 = vpack.c.b16 %v226, %v225
  %v271 = vpack.c.b16 %v228, %v227
  %v272 = vpack.c.b16 %v230, %v229
  %v273 = vpack.c.b16 %v232, %v231
  %v274 = vpack.c.b16 %v234, %v233
  %v275 = vpack.c.b16 %v236, %v235
  %v276 = vpack.c.b16 %v238, %v237
  %v277 = vpack.c.b16 %v240, %v239
  %v278 = vpack.c.b16 %v242, %v241
  %v279 = vpack.c.b16 %v244, %v243
  %v280 = vpack.c.b16 %v246, %v245
  %v281 = vpack.c.b16 %v248, %v247
  %v282 = vpack.c.b16 %v250, %v249
  %v287 = vunpack.c.l.b16 %v115
  %v288 = vunpack.c.l.b16 %v116
  %v289 = vunpack.c.l.b16 %v117
  %v290 = vunpack.c.l.b16 %v118
  %v291 = vpack.c.b16 %v288, %v287
  %v292 = vpack.c.b16 %v290, %v289
  %vm295 = vcmask 261120
  %v297 = vsel %vm295, %v251, 0
  %v300 = vsel %vm295, %v252, 0
  %v303 = vsel %vm295, %v253, 0
  %v306 = vsel %vm295, %v254, 0
  %v309 = vsel %vm295, %v255, 0
  %v312 = vsel %vm295, %v256, 0
  %v315 = vsel %vm295, %v257, 0
  %v318 = vsel %vm295, %v258, 0
  %v321 = vsel %vm295, %v259, 0
  %v324 = vsel %vm295, %v260, 0
  %v327 = vsel %vm295, %v261, 0
  %v330 = vsel %vm295, %v262, 0
  %v333 = vsel %vm295, %v263, 0
  %v336 = vsel %vm295, %v264, 0
  %v339 = vsel %vm295, %v265, 0
  %v342 = vsel %vm295, %v266, 0
  %v345 = vsel %vm295, %v267, 0
  %v348 = vsel %vm295, %v268, 0
  %v351 = vsel %vm295, %v269, 0
  %v354 = vsel %vm295, %v270, 0
  %v357 = vsel %vm295, %v271, 0
  %v360 = vsel %vm295, %v272, 0
  %v363 = vsel %vm295, %v273, 0
  %v366 = vsel %vm295, %v274, 0
  %v369 = vsel %vm295, %v275, 0
  %v372 = vsel %vm295, %v276, 0
  %v375 = vsel %vm295, %v277, 0
  %v378 = vsel %vm295, %v278, 0
  %v381 = vsel %vm295, %v279, 0
  %v384 = vsel %vm295, %v280, 0
  %v387 = vsel %vm295, %v281, 0
  %v390 = vsel %vm295, %v282, 0
  %392 = vmatpush.bf16.msra.mxu0 0
  %393 = vmatpush.bf16.msra.mxu0 0
  %394 = vmatpush.bf16.msra.mxu0 0
  %395 = vmatpush.bf16.msra.mxu0 0
  %396 = vmatpush.bf16.msra.mxu0 0
  %397 = vmatpush.bf16.msra.mxu0 0
  %398 = vmatpush.bf16.msra.mxu0 %v292
  %399 = vmatpush.bf16.msra.mxu0 %v291
  %400 = vmatmul.bf16.gmra.mxu0 %v297
  %v401 = vpop.f32.mrf.mxu0
  %v402 = vadd.f32 %v121, %v401
  %v403 = vpop.f32.mrf.mxu0
  %v404 = vadd.f32 %v121, %v403
  %405 = vmatmul.bf16.gmra.mxu0 %v300
  %v406 = vpop.f32.mrf.mxu0
  %v407 = vadd.f32 %v121, %v406
  %v408 = vpop.f32.mrf.mxu0
  %v409 = vadd.f32 %v121, %v408
  %410 = vmatmul.bf16.gmra.mxu0 %v303
  %v411 = vpop.f32.mrf.mxu0
  %v412 = vadd.f32 %v121, %v411
  %v413 = vpop.f32.mrf.mxu0
  %v414 = vadd.f32 %v121, %v413
  %415 = vmatmul.bf16.gmra.mxu0 %v306
  %v416 = vpop.f32.mrf.mxu0
  %v417 = vadd.f32 %v121, %v416
  %v418 = vpop.f32.mrf.mxu0
  %v419 = vadd.f32 %v121, %v418
  %420 = vmatmul.bf16.gmra.mxu0 %v309
  %v421 = vpop.f32.mrf.mxu0
  %v422 = vadd.f32 %v121, %v421
  %v423 = vpop.f32.mrf.mxu0
  %v424 = vadd.f32 %v121, %v423
  %425 = vmatmul.bf16.gmra.mxu0 %v312
  %v426 = vpop.f32.mrf.mxu0
  %v427 = vadd.f32 %v121, %v426
  %v428 = vpop.f32.mrf.mxu0
  %v429 = vadd.f32 %v121, %v428
  %430 = vmatmul.bf16.gmra.mxu0 %v315
  %v431 = vpop.f32.mrf.mxu0
  %v432 = vadd.f32 %v121, %v431
  %v433 = vpop.f32.mrf.mxu0
  %v434 = vadd.f32 %v121, %v433
  %435 = vmatmul.bf16.gmra.mxu0 %v318
  %v436 = vpop.f32.mrf.mxu0
  %v437 = vadd.f32 %v121, %v436
  %v438 = vpop.f32.mrf.mxu0
  %v439 = vadd.f32 %v121, %v438
  %440 = vmatmul.bf16.gmra.mxu0 %v321
  %v441 = vpop.f32.mrf.mxu0
  %v442 = vadd.f32 %v121, %v441
  %v443 = vpop.f32.mrf.mxu0
  %v444 = vadd.f32 %v121, %v443
  %445 = vmatmul.bf16.gmra.mxu0 %v324
  %v446 = vpop.f32.mrf.mxu0
  %v447 = vadd.f32 %v121, %v446
  %v448 = vpop.f32.mrf.mxu0
  %v449 = vadd.f32 %v121, %v448
  %450 = vmatmul.bf16.gmra.mxu0 %v327
  %v451 = vpop.f32.mrf.mxu0
  %v452 = vadd.f32 %v121, %v451
  %v453 = vpop.f32.mrf.mxu0
  %v454 = vadd.f32 %v121, %v453
  %455 = vmatmul.bf16.gmra.mxu0 %v330
  %v456 = vpop.f32.mrf.mxu0
  %v457 = vadd.f32 %v121, %v456
  %v458 = vpop.f32.mrf.mxu0
  %v459 = vadd.f32 %v121, %v458
  %460 = vmatmul.bf16.gmra.mxu0 %v333
  %v461 = vpop.f32.mrf.mxu0
  %v462 = vadd.f32 %v121, %v461
  %v463 = vpop.f32.mrf.mxu0
  %v464 = vadd.f32 %v121, %v463
  %465 = vmatmul.bf16.gmra.mxu0 %v336
  %v466 = vpop.f32.mrf.mxu0
  %v467 = vadd.f32 %v121, %v466
  %v468 = vpop.f32.mrf.mxu0
  %v469 = vadd.f32 %v121, %v468
  %470 = vmatmul.bf16.gmra.mxu0 %v339
  %v471 = vpop.f32.mrf.mxu0
  %v472 = vadd.f32 %v121, %v471
  %v473 = vpop.f32.mrf.mxu0
  %v474 = vadd.f32 %v121, %v473
  %475 = vmatmul.bf16.gmra.mxu0 %v342
  %v476 = vpop.f32.mrf.mxu0
  %v477 = vadd.f32 %v121, %v476
  %v478 = vpop.f32.mrf.mxu0
  %v479 = vadd.f32 %v121, %v478
  %480 = vmatmul.bf16.gmra.mxu0 %v345
  %v481 = vpop.f32.mrf.mxu0
  %v482 = vadd.f32 %v121, %v481
  %v483 = vpop.f32.mrf.mxu0
  %v484 = vadd.f32 %v121, %v483
  %485 = vmatmul.bf16.gmra.mxu0 %v348
  %v486 = vpop.f32.mrf.mxu0
  %v487 = vadd.f32 %v121, %v486
  %v488 = vpop.f32.mrf.mxu0
  %v489 = vadd.f32 %v121, %v488
  %490 = vmatmul.bf16.gmra.mxu0 %v351
  %v491 = vpop.f32.mrf.mxu0
  %v492 = vadd.f32 %v121, %v491
  %v493 = vpop.f32.mrf.mxu0
  %v494 = vadd.f32 %v121, %v493
  %495 = vmatmul.bf16.gmra.mxu0 %v354
  %v496 = vpop.f32.mrf.mxu0
  %v497 = vadd.f32 %v121, %v496
  %v498 = vpop.f32.mrf.mxu0
  %v499 = vadd.f32 %v121, %v498
  %500 = vmatmul.bf16.gmra.mxu0 %v357
  %v501 = vpop.f32.mrf.mxu0
  %v502 = vadd.f32 %v121, %v501
  %v503 = vpop.f32.mrf.mxu0
  %v504 = vadd.f32 %v121, %v503
  %505 = vmatmul.bf16.gmra.mxu0 %v360
  %v506 = vpop.f32.mrf.mxu0
  %v507 = vadd.f32 %v121, %v506
  %v508 = vpop.f32.mrf.mxu0
  %v509 = vadd.f32 %v121, %v508
  %510 = vmatmul.bf16.gmra.mxu0 %v363
  %v511 = vpop.f32.mrf.mxu0
  %v512 = vadd.f32 %v121, %v511
  %v513 = vpop.f32.mrf.mxu0
  %v514 = vadd.f32 %v121, %v513
  %515 = vmatmul.bf16.gmra.mxu0 %v366
  %v516 = vpop.f32.mrf.mxu0
  %v517 = vadd.f32 %v121, %v516
  %v518 = vpop.f32.mrf.mxu0
  %v519 = vadd.f32 %v121, %v518
  %520 = vmatmul.bf16.gmra.mxu0 %v369
  %v521 = vpop.f32.mrf.mxu0
  %v522 = vadd.f32 %v121, %v521
  %v523 = vpop.f32.mrf.mxu0
  %v524 = vadd.f32 %v121, %v523
  %525 = vmatmul.bf16.gmra.mxu0 %v372
  %v526 = vpop.f32.mrf.mxu0
  %v527 = vadd.f32 %v121, %v526
  %v528 = vpop.f32.mrf.mxu0
  %v529 = vadd.f32 %v121, %v528
  %530 = vmatmul.bf16.gmra.mxu0 %v375
  %v531 = vpop.f32.mrf.mxu0
  %v532 = vadd.f32 %v121, %v531
  %v533 = vpop.f32.mrf.mxu0
  %v534 = vadd.f32 %v121, %v533
  %535 = vmatmul.bf16.gmra.mxu0 %v378
  %v536 = vpop.f32.mrf.mxu0
  %v537 = vadd.f32 %v121, %v536
  %v538 = vpop.f32.mrf.mxu0
  %v539 = vadd.f32 %v121, %v538
  %540 = vmatmul.bf16.gmra.mxu0 %v381
  %v541 = vpop.f32.mrf.mxu0
  %v542 = vadd.f32 %v121, %v541
  %v543 = vpop.f32.mrf.mxu0
  %v544 = vadd.f32 %v121, %v543
  %545 = vmatmul.bf16.gmra.mxu0 %v384
  %v546 = vpop.f32.mrf.mxu0
  %v547 = vadd.f32 %v121, %v546
  %v548 = vpop.f32.mrf.mxu0
  %v549 = vadd.f32 %v121, %v548
  %550 = vmatmul.bf16.gmra.mxu0 %v387
  %v551 = vpop.f32.mrf.mxu0
  %v552 = vadd.f32 %v121, %v551
  %v553 = vpop.f32.mrf.mxu0
  %v554 = vadd.f32 %v121, %v553
  %555 = vmatmul.bf16.gmra.mxu0 %v390
  %v556 = vpop.f32.mrf.mxu0
  %v557 = vadd.f32 %v121, %v556
  %v558 = vpop.f32.mrf.mxu0
  %v559 = vadd.f32 %v121, %v558
  %560 = vdwg.mxu0
  %v561 = vmax.f32 %v402, 0.0
  %v562 = vmax.f32 %v404, 0.0
  %v563 = vmax.f32 %v407, 0.0
  %v564 = vmax.f32 %v409, 0.0
  %v565 = vmax.f32 %v412, 0.0
  %v566 = vmax.f32 %v414, 0.0
  %v567 = vmax.f32 %v417, 0.0
  %v568 = vmax.f32 %v419, 0.0
  %v569 = vmax.f32 %v422, 0.0
  %v570 = vmax.f32 %v424, 0.0
  %v571 = vmax.f32 %v427, 0.0
  %v572 = vmax.f32 %v429, 0.0
  %v573 = vmax.f32 %v432, 0.0
  %v574 = vmax.f32 %v434, 0.0
  %v575 = vmax.f32 %v437, 0.0
  %v576 = vmax.f32 %v439, 0.0
  %v577 = vmax.f32 %v442, 0.0
  %v578 = vmax.f32 %v444, 0.0
  %v579 = vmax.f32 %v447, 0.0
  %v580 = vmax.f32 %v449, 0.0
  %v581 = vmax.f32 %v452, 0.0
  %v582 = vmax.f32 %v454, 0.0
  %v583 = vmax.f32 %v457, 0.0
  %v584 = vmax.f32 %v459, 0.0
  %v585 = vmax.f32 %v462, 0.0
  %v586 = vmax.f32 %v464, 0.0
  %v587 = vmax.f32 %v467, 0.0
  %v588 = vmax.f32 %v469, 0.0
  %v589 = vmax.f32 %v472, 0.0
  %v590 = vmax.f32 %v474, 0.0
  %v591 = vmax.f32 %v477, 0.0
  %v592 = vmax.f32 %v479, 0.0
  %v593 = vmax.f32 %v482, 0.0
  %v594 = vmax.f32 %v484, 0.0
  %v595 = vmax.f32 %v487, 0.0
  %v596 = vmax.f32 %v489, 0.0
  %v597 = vmax.f32 %v492, 0.0
  %v598 = vmax.f32 %v494, 0.0
  %v599 = vmax.f32 %v497, 0.0
  %v600 = vmax.f32 %v499, 0.0
  %v601 = vmax.f32 %v502, 0.0
  %v602 = vmax.f32 %v504, 0.0
  %v603 = vmax.f32 %v507, 0.0
  %v604 = vmax.f32 %v509, 0.0
  %v605 = vmax.f32 %v512, 0.0
  %v606 = vmax.f32 %v514, 0.0
  %v607 = vmax.f32 %v517, 0.0
  %v608 = vmax.f32 %v519, 0.0
  %v609 = vmax.f32 %v522, 0.0
  %v610 = vmax.f32 %v524, 0.0
  %v611 = vmax.f32 %v527, 0.0
  %v612 = vmax.f32 %v529, 0.0
  %v613 = vmax.f32 %v532, 0.0
  %v614 = vmax.f32 %v534, 0.0
  %v615 = vmax.f32 %v537, 0.0
  %v616 = vmax.f32 %v539, 0.0
  %v617 = vmax.f32 %v542, 0.0
  %v618 = vmax.f32 %v544, 0.0
  %v619 = vmax.f32 %v547, 0.0
  %v620 = vmax.f32 %v549, 0.0
  %v621 = vmax.f32 %v552, 0.0
  %v622 = vmax.f32 %v554, 0.0
  %v623 = vmax.f32 %v557, 0.0
  %v624 = vmax.f32 %v559, 0.0
  %v625 = vpack.c.bf16 %v561, %v561
  %v626 = vpack.c.bf16 %v562, %v562
  %v627 = vpack.c.bf16 %v563, %v563
  %v628 = vpack.c.bf16 %v564, %v564
  %v629 = vpack.c.bf16 %v565, %v565
  %v630 = vpack.c.bf16 %v566, %v566
  %v631 = vpack.c.bf16 %v567, %v567
  %v632 = vpack.c.bf16 %v568, %v568
  %v633 = vpack.c.bf16 %v569, %v569
  %v634 = vpack.c.bf16 %v570, %v570
  %v635 = vpack.c.bf16 %v571, %v571
  %v636 = vpack.c.bf16 %v572, %v572
  %v637 = vpack.c.bf16 %v573, %v573
  %v638 = vpack.c.bf16 %v574, %v574
  %v639 = vpack.c.bf16 %v575, %v575
  %v640 = vpack.c.bf16 %v576, %v576
  %v641 = vpack.c.bf16 %v577, %v577
  %v642 = vpack.c.bf16 %v578, %v578
  %v643 = vpack.c.bf16 %v579, %v579
  %v644 = vpack.c.bf16 %v580, %v580
  %v645 = vpack.c.bf16 %v581, %v581
  %v646 = vpack.c.bf16 %v582, %v582
  %v647 = vpack.c.bf16 %v583, %v583
  %v648 = vpack.c.bf16 %v584, %v584
  %v649 = vpack.c.bf16 %v585, %v585
  %v650 = vpack.c.bf16 %v586, %v586
  %v651 = vpack.c.bf16 %v587, %v587
  %v652 = vpack.c.bf16 %v588, %v588
  %v653 = vpack.c.bf16 %v589, %v589
  %v654 = vpack.c.bf16 %v590, %v590
  %v655 = vpack.c.bf16 %v591, %v591
  %v656 = vpack.c.bf16 %v592, %v592
  %v657 = vpack.c.bf16 %v593, %v593
  %v658 = vpack.c.bf16 %v594, %v594
  %v659 = vpack.c.bf16 %v595, %v595
  %v660 = vpack.c.bf16 %v596, %v596
  %v661 = vpack.c.bf16 %v597, %v597
  %v662 = vpack.c.bf16 %v598, %v598
  %v663 = vpack.c.bf16 %v599, %v599
  %v664 = vpack.c.bf16 %v600, %v600
  %v665 = vpack.c.bf16 %v601, %v601
  %v666 = vpack.c.bf16 %v602, %v602
  %v667 = vpack.c.bf16 %v603, %v603
  %v668 = vpack.c.bf16 %v604, %v604
  %v669 = vpack.c.bf16 %v605, %v605
  %v670 = vpack.c.bf16 %v606, %v606
  %v671 = vpack.c.bf16 %v607, %v607
  %v672 = vpack.c.bf16 %v608, %v608
  %v673 = vpack.c.bf16 %v609, %v609
  %v674 = vpack.c.bf16 %v610, %v610
  %v675 = vpack.c.bf16 %v611, %v611
  %v676 = vpack.c.bf16 %v612, %v612
  %v677 = vpack.c.bf16 %v613, %v613
  %v678 = vpack.c.bf16 %v614, %v614
  %v679 = vpack.c.bf16 %v615, %v615
  %v680 = vpack.c.bf16 %v616, %v616
  %v681 = vpack.c.bf16 %v617, %v617
  %v682 = vpack.c.bf16 %v618, %v618
  %v683 = vpack.c.bf16 %v619, %v619
  %v684 = vpack.c.bf16 %v620, %v620
  %v685 = vpack.c.bf16 %v621, %v621
  %v686 = vpack.c.bf16 %v622, %v622
  %v687 = vpack.c.bf16 %v623, %v623
  %v688 = vpack.c.bf16 %v624, %v624
  %689 = vst [vmem:[%s4] sm:$0xf] %v625
  %690 = vst [vmem:[%s4 + $0x4] sm:$0xf] %v626
  %691 = vst [vmem:[%s4 + $0x8] sm:$0xf] %v627
  %692 = vst [vmem:[%s4 + $0xc] sm:$0xf] %v628
  %693 = vst [vmem:[%s4 + $0x10] sm:$0xf] %v629
  %694 = vst [vmem:[%s4 + $0x14] sm:$0xf] %v630
  %695 = vst [vmem:[%s4 + $0x18] sm:$0xf] %v631
  %696 = vst [vmem:[%s4 + $0x1c] sm:$0xf] %v632
  %697 = vst [vmem:[%s4 + $0x20] sm:$0xf] %v633
  %698 = vst [vmem:[%s4 + $0x24] sm:$0xf] %v634
  %699 = vst [vmem:[%s4 + $0x28] sm:$0xf] %v635
  %700 = vst [vmem:[%s4 + $0x2c] sm:$0xf] %v636
  %701 = vst [vmem:[%s4 + $0x30] sm:$0xf] %v637
  %702 = vst [vmem:[%s4 + $0x34] sm:$0xf] %v638
  %703 = vst [vmem:[%s4 + $0x38] sm:$0xf] %v639
  %704 = vst [vmem:[%s4 + $0x3c] sm:$0xf] %v640
  %705 = vst [vmem:[%s4 + $0x40] sm:$0xf] %v641
  %706 = vst [vmem:[%s4 + $0x44] sm:$0xf] %v642
  %707 = vst [vmem:[%s4 + $0x48] sm:$0xf] %v643
  %708 = vst [vmem:[%s4 + $0x4c] sm:$0xf] %v644
  %709 = vst [vmem:[%s4 + $0x50] sm:$0xf] %v645
  %710 = vst [vmem:[%s4 + $0x54] sm:$0xf] %v646
  %711 = vst [vmem:[%s4 + $0x58] sm:$0xf] %v647
  %712 = vst [vmem:[%s4 + $0x5c] sm:$0xf] %v648
  %713 = vst [vmem:[%s4 + $0x60] sm:$0xf] %v649
  %714 = vst [vmem:[%s4 + $0x64] sm:$0xf] %v650
  %715 = vst [vmem:[%s4 + $0x68] sm:$0xf] %v651
  %716 = vst [vmem:[%s4 + $0x6c] sm:$0xf] %v652
  %717 = vst [vmem:[%s4 + $0x70] sm:$0xf] %v653
  %718 = vst [vmem:[%s4 + $0x74] sm:$0xf] %v654
  %719 = vst [vmem:[%s4 + $0x78] sm:$0xf] %v655
  %720 = vst [vmem:[%s4 + $0x7c] sm:$0xf] %v656
  %721 = vst [vmem:[%s4 + $0x80] sm:$0xf] %v657
  %722 = vst [vmem:[%s4 + $0x84] sm:$0xf] %v658
  %723 = vst [vmem:[%s4 + $0x88] sm:$0xf] %v659
  %724 = vst [vmem:[%s4 + $0x8c] sm:$0xf] %v660
  %725 = vst [vmem:[%s4 + $0x90] sm:$0xf] %v661
  %726 = vst [vmem:[%s4 + $0x94] sm:$0xf] %v662
  %727 = vst [vmem:[%s4 + $0x98] sm:$0xf] %v663
  %728 = vst [vmem:[%s4 + $0x9c] sm:$0xf] %v664
  %729 = vst [vmem:[%s4 + $0xa0] sm:$0xf] %v665
  %730 = vst [vmem:[%s4 + $0xa4] sm:$0xf] %v666
  %731 = vst [vmem:[%s4 + $0xa8] sm:$0xf] %v667
  %732 = vst [vmem:[%s4 + $0xac] sm:$0xf] %v668
  %733 = vst [vmem:[%s4 + $0xb0] sm:$0xf] %v669
  %734 = vst [vmem:[%s4 + $0xb4] sm:$0xf] %v670
  %735 = vst [vmem:[%s4 + $0xb8] sm:$0xf] %v671
  %736 = vst [vmem:[%s4 + $0xbc] sm:$0xf] %v672
  %737 = vst [vmem:[%s4 + $0xc0] sm:$0xf] %v673
  %738 = vst [vmem:[%s4 + $0xc4] sm:$0xf] %v674
  %739 = vst [vmem:[%s4 + $0xc8] sm:$0xf] %v675
  %740 = vst [vmem:[%s4 + $0xcc] sm:$0xf] %v676
  %741 = vst [vmem:[%s4 + $0xd0] sm:$0xf] %v677
  %742 = vst [vmem:[%s4 + $0xd4] sm:$0xf] %v678
  %743 = vst [vmem:[%s4 + $0xd8] sm:$0xf] %v679
  %744 = vst [vmem:[%s4 + $0xdc] sm:$0xf] %v680
  %745 = vst [vmem:[%s4 + $0xe0] sm:$0xf] %v681
  %746 = vst [vmem:[%s4 + $0xe4] sm:$0xf] %v682
  %747 = vst [vmem:[%s4 + $0xe8] sm:$0xf] %v683
  %748 = vst [vmem:[%s4 + $0xec] sm:$0xf] %v684
  %749 = vst [vmem:[%s4 + $0xf0] sm:$0xf] %v685
  %750 = vst [vmem:[%s4 + $0xf4] sm:$0xf] %v686
  %751 = vst [vmem:[%s4 + $0xf8] sm:$0xf] %v687
  %752 = vst [vmem:[%s4 + $0xfc] sm:$0xf] %v688
  // Predicated region
  $region14: #{_forward.6} parent=0 // pred_check
    _
  $region15: #{_forward.6} parent=0 // pred_check_branch
    %754 = sbr.rel (0) target = $region17
  $region16: #{_forward.6} parent=0 // pred_region
    _
  $region17: #{_forward.6} parent=0 // pred_fallthru
    _
  // Predicated region
  $region18: #{_forward.6} parent=0 // pred_check
    _
  $region19: #{_forward.6} parent=0 // pred_check_branch
    %756 = sbr.rel (0) target = $region21
  $region20: #{_forward.6} parent=0 // pred_region
    _
  $region21: #{_forward.6} parent=0 // pred_fallthru
    _

// kernel: _forward.7
$region0: #{_forward.7}
  #allocation0 [shape = 'u32[]', space=smem, size = 0x4, offset = 0x4, fixed_abs, tag = 'smem constant byte address 0x4 - core index']
  #allocation1 [shape = 'u32[72,128]{1,0:T(1,128)}', space=vmem, size = 0x9000, scoped, tag = 'internal scratch']
  #allocation2 [shape = 's32[1]{0}', space=sflag, size = 0x4, scoped, tag = 'scoped memory for _forward.7']
  #allocation3 [shape = 's32[1]{0:T(128)S(6)}', space=smem, size = 0x200, scoped, tag = 'prefetched SMEM operand 0']
  %s0 = inlined_call_operand.<no memory space> [shape: s32[1], index: 0, kind: input, shape index: {}]
  %s1 = inlined_call_operand.vmem [shape: bf16[128,80], index: 1, kind: input, shape index: {}]
  %s2 = inlined_call_operand.vmem [shape: bf16[1,80,128], index: 2, kind: input, shape index: {}]
  %s3 = inlined_call_operand.vmem [shape: f32[1,1,128], index: 3, kind: input, shape index: {}]
  %s4 = inlined_call_operand.vmem [shape: bf16[128,128], index: 4, kind: output, shape index: {}]
  %s5 = sld [smem:[#allocation0]]
  $region22: #{_forward.7} parent=0
    _
  %s7 = ssub.s32 1, %s5
  %s8 = scalar_select 0, %s7, %s5
  %9 = sst [smem:[#allocation3]] %s0
  // Predicated region
  $region2: #{_forward.7} parent=0 // pred_check
    _
  $region3: #{_forward.7} parent=0 // pred_check_branch
    %11 = sbr.rel (0) target = $region5
  $region4: #{_forward.7} parent=0 // pred_region
    _
  $region5: #{_forward.7} parent=0 // pred_fallthru
    _
  // Predicated region
  $region6: #{_forward.7} parent=0 // pred_check
    _
  $region7: #{_forward.7} parent=0 // pred_check_branch
    %13 = sbr.rel (0) target = $region9
  $region8: #{_forward.7} parent=0 // pred_region
    %s14 = sld [smem:[#allocation3]]
    %p15 = scmp.lt.s32.totalorder %s14, 0
    %s16 = scalar_select %p15, %s14, 0
    %s17 = smul.addr %s16, 10
    %s18 = smul.addr %s17, 4
    %s19 = scalar_lea.vmem %s2, %s18
    %s20 = sld [smem:[#allocation3]]
  $region9: #{_forward.7} parent=0 // pred_fallthru
    _
  // Predicated region
  $region10: #{_forward.7} parent=0 // pred_check
    _
  $region11: #{_forward.7} parent=0 // pred_check_branch
    %22 = sbr.rel (0) target = $region13
  $region12: #{_forward.7} parent=0 // pred_region
    %s23 = sld [smem:[#allocation3]]
    %p24 = scmp.lt.s32.totalorder %s23, 0
    %s25 = scalar_select %p24, %s23, 0
    %s26 = scalar_lea.vmem %s3, %s25
    %s27 = sld [smem:[#allocation3]]
  $region13: #{_forward.7} parent=0 // pred_fallthru
    _
  %s28 = sld [smem:[#allocation3]]
  %p29 = scmp.lt.s32.totalorder %s28, 0
  %s30 = scalar_select %p29, %s28, 0
  %s31 = smul.addr %s30, 10
  %s32 = smul.addr %s31, 4
  %s33 = scalar_lea.vmem %s2, %s32
  %s34 = sld [smem:[#allocation3]]
  %p35 = scmp.lt.s32.totalorder %s34, 0
  %s36 = scalar_select %p35, %s34, 0
  %s37 = scalar_lea.vmem %s3, %s36
  %s38 = sld [smem:[#allocation3]]
  %p39 = scmp.lt.s32.totalorder %s38, 0
  %s40 = scalar_select %p39, %s38, 0
  %s41 = smul.addr %s40, 10
  %s42 = smul.addr %s41, 4
  %s43 = scalar_lea.vmem %s2, %s42
  %s44 = sld [smem:[#allocation3]]
  %s45 = sld [smem:[#allocation3]]
  %p46 = scmp.lt.s32.totalorder %s45, 0
  %s47 = scalar_select %p46, %s45, 0
  %s48 = scalar_lea.vmem %s3, %s47
  %s49 = sld [smem:[#allocation3]]
  %v51 = vld [vmem:[%s1] sm:$0xf]
  %v52 = vld [vmem:[%s1 + $0x4] sm:$0xf]
  %v53 = vld [vmem:[%s1 + $0x8] sm:$0xf]
  %v54 = vld [vmem:[%s1 + $0xc] sm:$0xf]
  %v55 = vld [vmem:[%s1 + $0x10] sm:$0xf]
  %v56 = vld [vmem:[%s1 + $0x14] sm:$0xf]
  %v57 = vld [vmem:[%s1 + $0x18] sm:$0xf]
  %v58 = vld [vmem:[%s1 + $0x1c] sm:$0xf]
  %v59 = vld [vmem:[%s1 + $0x20] sm:$0xf]
  %v60 = vld [vmem:[%s1 + $0x24] sm:$0xf]
  %v61 = vld [vmem:[%s1 + $0x28] sm:$0xf]
  %v62 = vld [vmem:[%s1 + $0x2c] sm:$0xf]
  %v63 = vld [vmem:[%s1 + $0x30] sm:$0xf]
  %v64 = vld [vmem:[%s1 + $0x34] sm:$0xf]
  %v65 = vld [vmem:[%s1 + $0x38] sm:$0xf]
  %v66 = vld [vmem:[%s1 + $0x3c] sm:$0xf]
  %v67 = vld [vmem:[%s43] sm:$0xf]
  %v68 = vld [vmem:[%s43 + $0x4] sm:$0xf]
  %v69 = vld [vmem:[%s43 + $0x8] sm:$0xf]
  %v70 = vld [vmem:[%s43 + $0xc] sm:$0xf]
  %v71 = vld [vmem:[%s43 + $0x10] sm:$0xf]
  %v72 = vld [vmem:[%s43 + $0x14] sm:$0xf]
  %v73 = vld [vmem:[%s43 + $0x18] sm:$0xf]
  %v74 = vld [vmem:[%s43 + $0x1c] sm:$0xf]
  %v75 = vld [vmem:[%s43 + $0x20] sm:$0xf]
  %v76 = vld [vmem:[%s43 + $0x24] sm:$0xf]
  %v77 = vld [vmem:[%s48] sm:$0x1]
  %v79 = vperm.slane %v77, 0
  %v97 = vunpack.c.l.b16 %v51
  %v98 = vunpack.c.l.b16 %v52
  %v99 = vunpack.c.l.b16 %v53
  %v100 = vunpack.c.l.b16 %v54
  %v101 = vunpack.c.l.b16 %v55
  %v102 = vunpack.c.l.b16 %v56
  %v103 = vunpack.c.l.b16 %v57
  %v104 = vunpack.c.l.b16 %v58
  %v105 = vunpack.c.l.b16 %v59
  %v106 = vunpack.c.l.b16 %v60
  %v107 = vunpack.c.l.b16 %v61
  %v108 = vunpack.c.l.b16 %v62
  %v109 = vunpack.c.l.b16 %v63
  %v110 = vunpack.c.l.b16 %v64
  %v111 = vunpack.c.l.b16 %v65
  %v112 = vunpack.c.l.b16 %v66
  %v113 = vpack.c.b16 %v98, %v97
  %v114 = vpack.c.b16 %v100, %v99
  %v115 = vpack.c.b16 %v102, %v101
  %v116 = vpack.c.b16 %v104, %v103
  %v117 = vpack.c.b16 %v106, %v105
  %v118 = vpack.c.b16 %v108, %v107
  %v119 = vpack.c.b16 %v110, %v109
  %v120 = vpack.c.b16 %v112, %v111
  %v131 = vunpack.c.l.b16 %v67
  %v132 = vunpack.c.l.b16 %v68
  %v133 = vunpack.c.l.b16 %v69
  %v134 = vunpack.c.l.b16 %v70
  %v135 = vunpack.c.l.b16 %v71
  %v136 = vunpack.c.l.b16 %v72
  %v137 = vunpack.c.l.b16 %v73
  %v138 = vunpack.c.l.b16 %v74
  %v139 = vunpack.c.l.b16 %v75
  %v140 = vunpack.c.l.b16 %v76
  %v141 = vpack.c.b16 %v132, %v131
  %v142 = vpack.c.b16 %v134, %v133
  %v143 = vpack.c.b16 %v136, %v135
  %v144 = vpack.c.b16 %v138, %v137
  %v145 = vpack.c.b16 %v140, %v139
  %vm151 = vcmask 654336
  %v153 = vsel %vm151, %v113, 0
  %v156 = vsel %vm151, %v114, 0
  %v159 = vsel %vm151, %v115, 0
  %v162 = vsel %vm151, %v116, 0
  %v165 = vsel %vm151, %v117, 0
  %v168 = vsel %vm151, %v118, 0
  %v171 = vsel %vm151, %v119, 0
  %v174 = vsel %vm151, %v120, 0
  %176 = vmatpush.bf16.msra.mxu0 0
  %177 = vmatpush.bf16.msra.mxu0 0
  %178 = vmatpush.bf16.msra.mxu0 0
  %179 = vmatpush.bf16.msra.mxu0 %v145
  %180 = vmatpush.bf16.msra.mxu0 %v144
  %181 = vmatpush.bf16.msra.mxu0 %v143
  %182 = vmatpush.bf16.msra.mxu0 %v142
  %183 = vmatpush.bf16.msra.mxu0 %v141
  %184 = vmatmul.bf16.gmra.mxu0 %v153
  %v185 = vpop.f32.mrf.mxu0
  %v186 = vadd.f32 %v79, %v185
  %v187 = vpop.f32.mrf.mxu0
  %v188 = vadd.f32 %v79, %v187
  %189 = vmatmul.bf16.gmra.mxu0 %v156
  %v190 = vpop.f32.mrf.mxu0
  %v191 = vadd.f32 %v79, %v190
  %v192 = vpop.f32.mrf.mxu0
  %v193 = vadd.f32 %v79, %v192
  %194 = vmatmul.bf16.gmra.mxu0 %v159
  %v195 = vpop.f32.mrf.mxu0
  %v196 = vadd.f32 %v79, %v195
  %v197 = vpop.f32.mrf.mxu0
  %v198 = vadd.f32 %v79, %v197
  %199 = vmatmul.bf16.gmra.mxu0 %v162
  %v200 = vpop.f32.mrf.mxu0
  %v201 = vadd.f32 %v79, %v200
  %v202 = vpop.f32.mrf.mxu0
  %v203 = vadd.f32 %v79, %v202
  %204 = vmatmul.bf16.gmra.mxu0 %v165
  %v205 = vpop.f32.mrf.mxu0
  %v206 = vadd.f32 %v79, %v205
  %v207 = vpop.f32.mrf.mxu0
  %v208 = vadd.f32 %v79, %v207
  %209 = vmatmul.bf16.gmra.mxu0 %v168
  %v210 = vpop.f32.mrf.mxu0
  %v211 = vadd.f32 %v79, %v210
  %v212 = vpop.f32.mrf.mxu0
  %v213 = vadd.f32 %v79, %v212
  %214 = vmatmul.bf16.gmra.mxu0 %v171
  %v215 = vpop.f32.mrf.mxu0
  %v216 = vadd.f32 %v79, %v215
  %v217 = vpop.f32.mrf.mxu0
  %v218 = vadd.f32 %v79, %v217
  %219 = vmatmul.bf16.gmra.mxu0 %v174
  %v220 = vpop.f32.mrf.mxu0
  %v221 = vadd.f32 %v79, %v220
  %v222 = vpop.f32.mrf.mxu0
  %v223 = vadd.f32 %v79, %v222
  %224 = vdwg.mxu0
  %v225 = vmax.f32 %v186, 0.0
  %v226 = vmax.f32 %v188, 0.0
  %v227 = vmax.f32 %v191, 0.0
  %v228 = vmax.f32 %v193, 0.0
  %v229 = vmax.f32 %v196, 0.0
  %v230 = vmax.f32 %v198, 0.0
  %v231 = vmax.f32 %v201, 0.0
  %v232 = vmax.f32 %v203, 0.0
  %v233 = vmax.f32 %v206, 0.0
  %v234 = vmax.f32 %v208, 0.0
  %v235 = vmax.f32 %v211, 0.0
  %v236 = vmax.f32 %v213, 0.0
  %v237 = vmax.f32 %v216, 0.0
  %v238 = vmax.f32 %v218, 0.0
  %v239 = vmax.f32 %v221, 0.0
  %v240 = vmax.f32 %v223, 0.0
  %v241 = vpack.c.bf16 %v225, %v225
  %v242 = vpack.c.bf16 %v226, %v226
  %v243 = vpack.c.bf16 %v227, %v227
  %v244 = vpack.c.bf16 %v228, %v228
  %v245 = vpack.c.bf16 %v229, %v229
  %v246 = vpack.c.bf16 %v230, %v230
  %v247 = vpack.c.bf16 %v231, %v231
  %v248 = vpack.c.bf16 %v232, %v232
  %v249 = vpack.c.bf16 %v233, %v233
  %v250 = vpack.c.bf16 %v234, %v234
  %v251 = vpack.c.bf16 %v235, %v235
  %v252 = vpack.c.bf16 %v236, %v236
  %v253 = vpack.c.bf16 %v237, %v237
  %v254 = vpack.c.bf16 %v238, %v238
  %v255 = vpack.c.bf16 %v239, %v239
  %v256 = vpack.c.bf16 %v240, %v240
  %257 = vst [vmem:[%s4] sm:$0xf] %v241
  %258 = vst [vmem:[%s4 + $0x4] sm:$0xf] %v242
  %259 = vst [vmem:[%s4 + $0x8] sm:$0xf] %v243
  %260 = vst [vmem:[%s4 + $0xc] sm:$0xf] %v244
  %261 = vst [vmem:[%s4 + $0x10] sm:$0xf] %v245
  %262 = vst [vmem:[%s4 + $0x14] sm:$0xf] %v246
  %263 = vst [vmem:[%s4 + $0x18] sm:$0xf] %v247
  %264 = vst [vmem:[%s4 + $0x1c] sm:$0xf] %v248
  %265 = vst [vmem:[%s4 + $0x20] sm:$0xf] %v249
  %266 = vst [vmem:[%s4 + $0x24] sm:$0xf] %v250
  %267 = vst [vmem:[%s4 + $0x28] sm:$0xf] %v251
  %268 = vst [vmem:[%s4 + $0x2c] sm:$0xf] %v252
  %269 = vst [vmem:[%s4 + $0x30] sm:$0xf] %v253
  %270 = vst [vmem:[%s4 + $0x34] sm:$0xf] %v254
  %271 = vst [vmem:[%s4 + $0x38] sm:$0xf] %v255
  %272 = vst [vmem:[%s4 + $0x3c] sm:$0xf] %v256
  // Predicated region
  $region14: #{_forward.7} parent=0 // pred_check
    _
  $region15: #{_forward.7} parent=0 // pred_check_branch
    %274 = sbr.rel (0) target = $region17
  $region16: #{_forward.7} parent=0 // pred_region
    _
  $region17: #{_forward.7} parent=0 // pred_fallthru
    _
  // Predicated region
  $region18: #{_forward.7} parent=0 // pred_check
    _
  $region19: #{_forward.7} parent=0 // pred_check_branch
    %276 = sbr.rel (0) target = $region21
  $region20: #{_forward.7} parent=0 // pred_region
    _
  $region21: #{_forward.7} parent=0 // pred_fallthru
    _

// kernel: _forward.8
$region0: #{_forward.8}
  #allocation0 [shape = 'u32[]', space=smem, size = 0x4, offset = 0x4, fixed_abs, tag = 'smem constant byte address 0x4 - core index']
  #allocation1 [shape = 'u32[72,128]{1,0:T(1,128)}', space=vmem, size = 0x9000, scoped, tag = 'internal scratch']
  #allocation2 [shape = 's32[1]{0}', space=sflag, size = 0x4, scoped, tag = 'scoped memory for _forward.8']
  #allocation3 [shape = 's32[1]{0:T(128)S(6)}', space=smem, size = 0x200, scoped, tag = 'prefetched SMEM operand 0']
  %s0 = inlined_call_operand.<no memory space> [shape: s32[1], index: 0, kind: input, shape index: {}]
  %s1 = inlined_call_operand.vmem [shape: bf16[32,144], index: 1, kind: input, shape index: {}]
  %s2 = inlined_call_operand.vmem [shape: bf16[1,144,128], index: 2, kind: input, shape index: {}]
  %s3 = inlined_call_operand.vmem [shape: f32[1,1,128], index: 3, kind: input, shape index: {}]
  %s4 = inlined_call_operand.vmem [shape: bf16[32,128], index: 4, kind: output, shape index: {}]
  %s5 = sld [smem:[#allocation0]]
  $region22: #{_forward.8} parent=0
    _
  %s7 = ssub.s32 1, %s5
  %s8 = scalar_select 0, %s7, %s5
  %9 = sst [smem:[#allocation3]] %s0
  // Predicated region
  $region2: #{_forward.8} parent=0 // pred_check
    _
  $region3: #{_forward.8} parent=0 // pred_check_branch
    %11 = sbr.rel (0) target = $region5
  $region4: #{_forward.8} parent=0 // pred_region
    _
  $region5: #{_forward.8} parent=0 // pred_fallthru
    _
  // Predicated region
  $region6: #{_forward.8} parent=0 // pred_check
    _
  $region7: #{_forward.8} parent=0 // pred_check_branch
    %13 = sbr.rel (0) target = $region9
  $region8: #{_forward.8} parent=0 // pred_region
    %s14 = sld [smem:[#allocation3]]
    %p15 = scmp.lt.s32.totalorder %s14, 0
    %s16 = scalar_select %p15, %s14, 0
    %s17 = smul.addr %s16, 18
    %s18 = smul.addr %s17, 4
    %s19 = scalar_lea.vmem %s2, %s18
    %s20 = sld [smem:[#allocation3]]
  $region9: #{_forward.8} parent=0 // pred_fallthru
    _
  // Predicated region
  $region10: #{_forward.8} parent=0 // pred_check
    _
  $region11: #{_forward.8} parent=0 // pred_check_branch
    %22 = sbr.rel (0) target = $region13
  $region12: #{_forward.8} parent=0 // pred_region
    %s23 = sld [smem:[#allocation3]]
    %p24 = scmp.lt.s32.totalorder %s23, 0
    %s25 = scalar_select %p24, %s23, 0
    %s26 = scalar_lea.vmem %s3, %s25
    %s27 = sld [smem:[#allocation3]]
  $region13: #{_forward.8} parent=0 // pred_fallthru
    _
  %s28 = sld [smem:[#allocation3]]
  %p29 = scmp.lt.s32.totalorder %s28, 0
  %s30 = scalar_select %p29, %s28, 0
  %s31 = smul.addr %s30, 18
  %s32 = smul.addr %s31, 4
  %s33 = scalar_lea.vmem %s2, %s32
  %s34 = sld [smem:[#allocation3]]
  %p35 = scmp.lt.s32.totalorder %s34, 0
  %s36 = scalar_select %p35, %s34, 0
  %s37 = scalar_lea.vmem %s3, %s36
  %s38 = sld [smem:[#allocation3]]
  %p39 = scmp.lt.s32.totalorder %s38, 0
  %s40 = scalar_select %p39, %s38, 0
  %s41 = smul.addr %s40, 18
  %s42 = smul.addr %s41, 4
  %s43 = scalar_lea.vmem %s2, %s42
  %s44 = sld [smem:[#allocation3]]
  %s45 = sld [smem:[#allocation3]]
  %p46 = scmp.lt.s32.totalorder %s45, 0
  %s47 = scalar_select %p46, %s45, 0
  %s48 = scalar_lea.vmem %s3, %s47
  %s49 = sld [smem:[#allocation3]]
  %v51 = vld [vmem:[%s1] sm:$0xff]
  %v52 = vld [vmem:[%s1 + $0x8] sm:$0xff]
  %v53 = vld [vmem:[%s1 + $0x10] sm:$0xff]
  %v54 = vld [vmem:[%s1 + $0x18] sm:$0xff]
  %v55 = vld [vmem:[%s43] sm:$0xf]
  %v56 = vld [vmem:[%s43 + $0x4] sm:$0xf]
  %v57 = vld [vmem:[%s43 + $0x8] sm:$0xf]
  %v58 = vld [vmem:[%s43 + $0xc] sm:$0xf]
  %v59 = vld [vmem:[%s43 + $0x10] sm:$0xf]
  %v60 = vld [vmem:[%s43 + $0x14] sm:$0xf]
  %v61 = vld [vmem:[%s43 + $0x18] sm:$0xf]
  %v62 = vld [vmem:[%s43 + $0x1c] sm:$0xf]
  %v63 = vld [vmem:[%s43 + $0x20] sm:$0xf]
  %v64 = vld [vmem:[%s43 + $0x24] sm:$0xf]
  %v65 = vld [vmem:[%s43 + $0x28] sm:$0xf]
  %v66 = vld [vmem:[%s43 + $0x2c] sm:$0xf]
  %v67 = vld [vmem:[%s43 + $0x30] sm:$0xf]
  %v68 = vld [vmem:[%s43 + $0x34] sm:$0xf]
  %v69 = vld [vmem:[%s43 + $0x38] sm:$0xf]
  %v70 = vld [vmem:[%s43 + $0x3c] sm:$0xf]
  %v71 = vld [vmem:[%s43 + $0x40] sm:$0xf]
  %v72 = vld [vmem:[%s43 + $0x44] sm:$0xf]
  %v73 = vld [vmem:[%s48] sm:$0x1]
  %v75 = vperm.slane %v73, 0
  %v81 = vunpack.c.l.b16 %v51
  %v82 = vunpack.c.h.b16 %v51
  %v83 = vunpack.c.l.b16 %v52
  %v84 = vunpack.c.h.b16 %v52
  %v85 = vunpack.c.l.b16 %v53
  %v86 = vunpack.c.h.b16 %v53
  %v87 = vunpack.c.l.b16 %v54
  %v88 = vunpack.c.h.b16 %v54
  %v89 = vpack.c.b16 %v83, %v81
  %v90 = vpack.c.b16 %v84, %v82
  %v91 = vpack.c.b16 %v87, %v85
  %v92 = vpack.c.b16 %v88, %v86
  %v113 = vunpack.c.l.b16 %v55
  %v114 = vunpack.c.l.b16 %v56
  %v115 = vunpack.c.l.b16 %v57
  %v116 = vunpack.c.l.b16 %v58
  %v117 = vunpack.c.l.b16 %v59
  %v118 = vunpack.c.l.b16 %v60
  %v119 = vunpack.c.l.b16 %v61
  %v120 = vunpack.c.l.b16 %v62
  %v121 = vunpack.c.l.b16 %v63
  %v122 = vunpack.c.l.b16 %v64
  %v123 = vunpack.c.l.b16 %v65
  %v124 = vunpack.c.l.b16 %v66
  %v125 = vunpack.c.l.b16 %v67
  %v126 = vunpack.c.l.b16 %v68
  %v127 = vunpack.c.l.b16 %v69
  %v128 = vunpack.c.l.b16 %v70
  %v129 = vunpack.c.l.b16 %v71
  %v130 = vunpack.c.l.b16 %v72
  %v131 = vpack.c.b16 %v114, %v113
  %v132 = vpack.c.b16 %v116, %v115
  %v133 = vpack.c.b16 %v118, %v117
  %v134 = vpack.c.b16 %v120, %v119
  %v135 = vpack.c.b16 %v122, %v121
  %v136 = vpack.c.b16 %v124, %v123
  %v137 = vpack.c.b16 %v126, %v125
  %v138 = vpack.c.b16 %v128, %v127
  %v139 = vpack.c.b16 %v130, %v129
  %vm149 = vcmask 130048
  %v151 = vsel %vm149, %v90, 0
  %v154 = vsel %vm149, %v92, 0
  %156 = vmatpush.bf16.msra.mxu0 %v138
  %157 = vmatpush.bf16.msra.mxu0 %v137
  %158 = vmatpush.bf16.msra.mxu0 %v136
  %159 = vmatpush.bf16.msra.mxu0 %v135
  %160 = vmatpush.bf16.msra.mxu0 %v134
  %161 = vmatpush.bf16.msra.mxu0 %v133
  %162 = vmatpush.bf16.msra.mxu0 %v132
  %163 = vmatpush.bf16.msra.mxu0 %v131
  %164 = vmatmul.bf16.gmra.mxu0 %v89
  %v165 = vpop.f32.mrf.mxu0
  %v166 = vadd.f32 %v75, %v165
  %v167 = vpop.f32.mrf.mxu0
  %v168 = vadd.f32 %v75, %v167
  %169 = vmatmul.bf16.gmra.mxu0 %v91
  %v170 = vpop.f32.mrf.mxu0
  %v171 = vadd.f32 %v75, %v170
  %v172 = vpop.f32.mrf.mxu0
  %v173 = vadd.f32 %v75, %v172
  %174 = vdwg.mxu0
  %175 = vmatpush.bf16.msra.mxu0 0
  %176 = vmatpush.bf16.msra.mxu0 0
  %177 = vmatpush.bf16.msra.mxu0 0
  %178 = vmatpush.bf16.msra.mxu0 0
  %179 = vmatpush.bf16.msra.mxu0 0
  %180 = vmatpush.bf16.msra.mxu0 0
  %181 = vmatpush.bf16.msra.mxu0 0
  %182 = vmatpush.bf16.msra.mxu0 %v139
  %183 = vmatmul.bf16.gmra.mxu0 %v151
  %v184 = vpop.f32.mrf.mxu0
  %v185 = vadd.f32 %v166, %v184
  %v186 = vpop.f32.mrf.mxu0
  %v187 = vadd.f32 %v168, %v186
  %188 = vmatmul.bf16.gmra.mxu0 %v154
  %v189 = vpop.f32.mrf.mxu0
  %v190 = vadd.f32 %v171, %v189
  %v191 = vpop.f32.mrf.mxu0
  %v192 = vadd.f32 %v173, %v191
  %193 = vdwg.mxu0
  %v194 = vmax.f32 %v185, 0.0
  %v195 = vmax.f32 %v187, 0.0
  %v196 = vmax.f32 %v190, 0.0
  %v197 = vmax.f32 %v192, 0.0
  %v198 = vpack.c.bf16 %v194, %v194
  %v199 = vpack.c.bf16 %v195, %v195
  %v200 = vpack.c.bf16 %v196, %v196
  %v201 = vpack.c.bf16 %v197, %v197
  %202 = vst [vmem:[%s4] sm:$0xf] %v198
  %203 = vst [vmem:[%s4 + $0x4] sm:$0xf] %v199
  %204 = vst [vmem:[%s4 + $0x8] sm:$0xf] %v200
  %205 = vst [vmem:[%s4 + $0xc] sm:$0xf] %v201
  // Predicated region
  $region14: #{_forward.8} parent=0 // pred_check
    _
  $region15: #{_forward.8} parent=0 // pred_check_branch
    %207 = sbr.rel (0) target = $region17
  $region16: #{_forward.8} parent=0 // pred_region
    _
  $region17: #{_forward.8} parent=0 // pred_fallthru
    _
  // Predicated region
  $region18: #{_forward.8} parent=0 // pred_check
    _
  $region19: #{_forward.8} parent=0 // pred_check_branch
    %209 = sbr.rel (0) target = $region21
  $region20: #{_forward.8} parent=0 // pred_region
    _
  $region21: #{_forward.8} parent=0 // pred_fallthru
    _

// kernel: _forward.9
$region0: #{_forward.9}
  #allocation0 [shape = 'u32[]', space=smem, size = 0x4, offset = 0x4, fixed_abs, tag = 'smem constant byte address 0x4 - core index']
  #allocation1 [shape = 'u32[72,128]{1,0:T(1,128)}', space=vmem, size = 0x9000, scoped, tag = 'internal scratch']
  #allocation2 [shape = 's32[1]{0}', space=sflag, size = 0x4, scoped, tag = 'scoped memory for _forward.9']
  #allocation3 [shape = 'u8[512]{0}', space=smem, size = 0x200, scoped, tag = 'prefetched SMEM operand 0']
  %s0 = inlined_call_operand.vmem [shape: s32[3], index: 0, kind: input, shape index: {}]
  %s1 = inlined_call_operand.vmem [shape: bf16[1536,32], index: 1, kind: input, shape index: {}]
  %s2 = inlined_call_operand.vmem [shape: bf16[3,32,128], index: 2, kind: input, shape index: {}]
  %s3 = inlined_call_operand.vmem [shape: f32[3,1,128], index: 3, kind: input, shape index: {}]
  %s4 = inlined_call_operand.vmem [shape: bf16[1536,128], index: 4, kind: output, shape index: {}]
  %s5 = sld [smem:[#allocation0]]
  $region45: #{_forward.9} parent=0
    _
  %s7 = ssub.s32 1, %s5
  %s8 = scalar_select 0, %s7, %s5
  %s10 = sshll.u32 %s0, 4
  %s11 = int_to_ptr.vmem [resolvable:$true] %s10
  %13 = dma.vmem_to_smem %s11, 16, [#allocation3], [#allocation2]
  %15 = dma.done [#allocation2], 16
  %16 = sfence
  loop: start=0, step=1, limit=5
  $region2: #{_forward.9} parent=0 // loop_pre_header
    _
  $region3: #{_forward.9} parent=0 // loop_header
    %s18 = sphi 0, %s22
    %p19 = scmp.ge.s32.totalorder %s18, 5
    %s28 = sphi 0, %s30
    %s31 = sphi 0, %s28
    %s32 = sphi 0, %s31
    %s48 = sphi 0, %s32
    %s56 = sphi 0, %s58
    %s59 = sphi 0, %s56
    %s60 = sphi 0, %s59
    %s76 = sphi 0, %s60
    %s84 = sphi 0, %s86
    %s87 = sphi 0, %s84
    %s88 = sphi 0, %s87
    %s104 = sphi 0, %s88
    %s110 = sphi 0, %s112
    %s113 = sphi 0, %s110
    %s114 = sphi 0, %s113
    %s130 = sphi 0, %s114
  $region4: #{_forward.9} parent=0 // loop_header_branch
    %21 = sbr.rel (%p19) target = $region8
  $region5: #{_forward.9} parent=0 // loop_body
    %s23 = ssub.s32 %s18, 1
    %s24 = ssub.s32 %s18, 2
    %s25 = sadd.s32 %s18, 1
    %s26 = ssub.s32 %s18, %s25
    %p27 = scmp.eq.s32.totalorder %s26, 0
    %s29 = sadd.s32 %s28, 1
    %s30 = scalar_select %p27, %s28, %s29
    %p33 = pneg %p27
    %p34 = scmp.eq.s32.totalorder %s18, 2
    %p35 = por %p33, %p34
    %p36 = scmp.ne.s32.totalorder %s28, %s31
    %p37 = scmp.eq.s32.totalorder %s18, 0
    %p38 = por %p36, %p37
    %p39 = scmp.ne.s32.totalorder %s28, %s31
    %p40 = scmp.eq.s32.totalorder %s23, 2
    %p41 = por %p39, %p40
    %p42 = scmp.ne.s32.totalorder %s31, %s32
    %p43 = scmp.eq.s32.totalorder %s23, 0
    %p44 = por %p42, %p43
    %p45 = scmp.ne.s32.totalorder %s31, %s32
    %p46 = scmp.eq.s32.totalorder %s24, 2
    %p47 = por %p45, %p46
    %p49 = scmp.ne.s32.totalorder %s32, %s48
    %p50 = scmp.eq.s32.totalorder %s24, 0
    %p51 = por %p49, %p50
    %s52 = sld [smem:[#allocation3 + %s18]]
    %s53 = sld [smem:[#allocation3 + %s25]]
    %s54 = ssub.s32 %s52, %s53
    %p55 = scmp.eq.s32.totalorder %s54, 0
    %s57 = sadd.s32 %s56, 1
    %s58 = scalar_select %p55, %s56, %s57
    %p61 = pneg %p55
    %p62 = scmp.eq.s32.totalorder %s18, 2
    %p63 = por %p61, %p62
    %p64 = scmp.ne.s32.totalorder %s56, %s59
    %p65 = scmp.eq.s32.totalorder %s18, 0
    %p66 = por %p64, %p65
    %p67 = scmp.ne.s32.totalorder %s56, %s59
    %p68 = scmp.eq.s32.totalorder %s23, 2
    %p69 = por %p67, %p68
    %p70 = scmp.ne.s32.totalorder %s59, %s60
    %p71 = scmp.eq.s32.totalorder %s23, 0
    %p72 = por %p70, %p71
    %p73 = scmp.ne.s32.totalorder %s59, %s60
    %p74 = scmp.eq.s32.totalorder %s24, 2
    %p75 = por %p73, %p74
    %p77 = scmp.ne.s32.totalorder %s60, %s76
    %p78 = scmp.eq.s32.totalorder %s24, 0
    %p79 = por %p77, %p78
    %s80 = sld [smem:[#allocation3 + %s18]]
    %s81 = sld [smem:[#allocation3 + %s25]]
    %s82 = ssub.s32 %s80, %s81
    %p83 = scmp.eq.s32.totalorder %s82, 0
    %s85 = sadd.s32 %s84, 1
    %s86 = scalar_select %p83, %s84, %s85
    %p89 = pneg %p83
    %p90 = scmp.eq.s32.totalorder %s18, 2
    %p91 = por %p89, %p90
    %p92 = scmp.ne.s32.totalorder %s84, %s87
    %p93 = scmp.eq.s32.totalorder %s18, 0
    %p94 = por %p92, %p93
    %p95 = scmp.ne.s32.totalorder %s84, %s87
    %p96 = scmp.eq.s32.totalorder %s23, 2
    %p97 = por %p95, %p96
    %p98 = scmp.ne.s32.totalorder %s87, %s88
    %p99 = scmp.eq.s32.totalorder %s23, 0
    %p100 = por %p98, %p99
    %p101 = scmp.ne.s32.totalorder %s87, %s88
    %p102 = scmp.eq.s32.totalorder %s24, 2
    %p103 = por %p101, %p102
    %p105 = scmp.ne.s32.totalorder %s88, %s104
    %p106 = scmp.eq.s32.totalorder %s24, 0
    %p107 = por %p105, %p106
    %s108 = ssub.s32 %s18, %s25
    %p109 = scmp.eq.s32.totalorder %s108, 0
    %s111 = sadd.s32 %s110, 1
    %s112 = scalar_select %p109, %s110, %s111
    %p115 = pneg %p109
    %p116 = scmp.eq.s32.totalorder %s18, 2
    %p117 = por %p115, %p116
    %p118 = scmp.ne.s32.totalorder %s110, %s113
    %p119 = scmp.eq.s32.totalorder %s18, 0
    %p120 = por %p118, %p119
    %p121 = scmp.ne.s32.totalorder %s110, %s113
    %p122 = scmp.eq.s32.totalorder %s23, 2
    %p123 = por %p121, %p122
    %p124 = scmp.ne.s32.totalorder %s113, %s114
    %p125 = scmp.eq.s32.totalorder %s23, 0
    %p126 = por %p124, %p125
    %p127 = scmp.ne.s32.totalorder %s113, %s114
    %p128 = scmp.eq.s32.totalorder %s24, 2
    %p129 = por %p127, %p128
    %p131 = scmp.ne.s32.totalorder %s114, %s130
    %p132 = scmp.eq.s32.totalorder %s24, 0
    %p133 = por %p131, %p132
    %p134 = scmp.le.s32.totalorder 1, %s18
    %p135 = scmp.lt.s32.totalorder %s18, 4
    %p136 = pnand %p134, %p135
    %p137 = pneg %p136
    // Predicated region
    $region9: #{_forward.9} parent=5 // pred_check
      _
    $region10: #{_forward.9} parent=5 // pred_check_branch
      %139 = sbr.rel (%p136) target = $region12
    $region11: #{_forward.9} parent=5 // pred_region
      %s140 = ssub.s32 %s18, 1
    $region12: #{_forward.9} parent=5 // pred_fallthru
      _
    %p141 = scmp.lt.s32.totalorder %s18, 3
    // Predicated region
    $region13: #{_forward.9} parent=5 // pred_check
      %p142 = pneg %p141
    $region14: #{_forward.9} parent=5 // pred_check_branch
      %144 = sbr.rel (%p142) target = $region16
    $region15: #{_forward.9} parent=5 // pred_region
      // Predicated region
      $region17: #{_forward.9} parent=15 // pred_check
        %p145 = pneg %p38
      $region18: #{_forward.9} parent=15 // pred_check_branch
        %147 = sbr.rel (%p145) target = $region20
      $region19: #{_forward.9} parent=15 // pred_region
        %s148 = smul.u32 64, %s18
        %p149 = scmp.lt.s32.totalorder %s148, 191
        %s150 = scalar_select %p149, %s148, 191
        %s151 = smul.addr %s150, 4
        %s152 = scalar_lea.vmem %s1, %s151
        %s153 = smul.u32 64, %s18
      $region20: #{_forward.9} parent=15 // pred_fallthru
        _
      // Predicated region
      $region21: #{_forward.9} parent=15 // pred_check
        %p154 = pneg %p66
      $region22: #{_forward.9} parent=15 // pred_check_branch
        %156 = sbr.rel (%p154) target = $region24
      $region23: #{_forward.9} parent=15 // pred_region
        %s157 = sld [smem:[#allocation3 + %s18]]
        %p158 = scmp.lt.s32.totalorder %s157, 2
        %s159 = scalar_select %p158, %s157, 2
        %s160 = smul.addr %s159, 4
        %s161 = smul.addr %s160, 4
        %s162 = scalar_lea.vmem %s2, %s161
        %s163 = sld [smem:[#allocation3 + %s18]]
      $region24: #{_forward.9} parent=15 // pred_fallthru
        _
      // Predicated region
      $region25: #{_forward.9} parent=15 // pred_check
        %p164 = pneg %p94
      $region26: #{_forward.9} parent=15 // pred_check_branch
        %166 = sbr.rel (%p164) target = $region28
      $region27: #{_forward.9} parent=15 // pred_region
        %s167 = sld [smem:[#allocation3 + %s18]]
        %p168 = scmp.lt.s32.totalorder %s167, 2
        %s169 = scalar_select %p168, %s167, 2
        %s170 = scalar_lea.vmem %s3, %s169
        %s171 = sld [smem:[#allocation3 + %s18]]
      $region28: #{_forward.9} parent=15 // pred_fallthru
        _
    $region16: #{_forward.9} parent=5 // pred_fallthru
      _
    %p172 = scmp.le.s32.totalorder 1, %s18
    %p173 = scmp.lt.s32.totalorder %s18, 4
    %p174 = pnand %p172, %p173
    %p175 = pneg %p174
    // Predicated region
    $region29: #{_forward.9} parent=5 // pred_check
      _
    $region30: #{_forward.9} parent=5 // pred_check_branch
      %177 = sbr.rel (%p174) target = $region32
    $region31: #{_forward.9} parent=5 // pred_region
      %s178 = ssub.s32 %s18, 1
      %s179 = smul.u32 64, %s23
      %p180 = scmp.lt.s32.totalorder %s179, 191
      %s181 = scalar_select %p180, %s179, 191
      %s182 = smul.addr %s181, 4
      %s183 = scalar_lea.vmem %s1, %s182
      %p184 = pneg %p44
      %p185 = pneg %p41
      %s186 = sld [smem:[#allocation3 + %s23]]
      %p187 = scmp.lt.s32.totalorder %s186, 2
      %s188 = scalar_select %p187, %s186, 2
      %s189 = smul.addr %s188, 4
      %s190 = smul.addr %s189, 4
      %s191 = scalar_lea.vmem %s2, %s190
      %p192 = pneg %p72
      %p193 = pneg %p69
      %s194 = sld [smem:[#allocation3 + %s23]]
      %p195 = scmp.lt.s32.totalorder %s194, 2
      %s196 = scalar_select %p195, %s194, 2
      %s197 = scalar_lea.vmem %s3, %s196
      %p198 = pneg %p100
      %p199 = pneg %p97
      %p200 = pneg %p126
      %p201 = pneg %p123
      %s202 = smul.u32 64, %s23
      %p203 = scmp.lt.s32.totalorder %s202, 191
      %s204 = scalar_select %p203, %s202, 191
      %s205 = smul.addr %s204, 4
      %s206 = scalar_lea.vmem %s4, %s205
      %s207 = smul.u32 64, %s23
      %p208 = scmp.lt.s32.totalorder %s207, 191
      %s209 = scalar_select %p208, %s207, 191
      %s210 = smul.addr %s209, 4
      %s211 = scalar_lea.vmem %s1, %s210
      %s212 = smul.u32 64, %s23
      %s213 = sld [smem:[#allocation3 + %s23]]
      %p214 = scmp.lt.s32.totalorder %s213, 2
      %s215 = scalar_select %p214, %s213, 2
      %s216 = smul.addr %s215, 4
      %s217 = smul.addr %s216, 4
      %s218 = scalar_lea.vmem %s2, %s217
      %s219 = sld [smem:[#allocation3 + %s23]]
      %s220 = sld [smem:[#allocation3 + %s23]]
      %p221 = scmp.lt.s32.totalorder %s220, 2
      %s222 = scalar_select %p221, %s220, 2
      %s223 = scalar_lea.vmem %s3, %s222
      %s224 = sld [smem:[#allocation3 + %s23]]
      %s225 = smul.u32 64, %s23
      %p226 = scmp.lt.s32.totalorder %s225, 191
      %s227 = scalar_select %p226, %s225, 191
      %s228 = smul.addr %s227, 4
      %s229 = scalar_lea.vmem %s4, %s228
      %s230 = smul.u32 64, %s23
      %v232 = vld [vmem:[%s211] sm:$0xf]
      %v233 = vld [vmem:[%s211 + $0x4] sm:$0xf]
      %v234 = vld [vmem:[%s211 + $0x8] sm:$0xf]
      %v235 = vld [vmem:[%s211 + $0xc] sm:$0xf]
      %v236 = vld [vmem:[%s211 + $0x10] sm:$0xf]
      %v237 = vld [vmem:[%s211 + $0x14] sm:$0xf]
      %v238 = vld [vmem:[%s211 + $0x18] sm:$0xf]
      %v239 = vld [vmem:[%s211 + $0x1c] sm:$0xf]
      %v240 = vld [vmem:[%s211 + $0x20] sm:$0xf]
      %v241 = vld [vmem:[%s211 + $0x24] sm:$0xf]
      %v242 = vld [vmem:[%s211 + $0x28] sm:$0xf]
      %v243 = vld [vmem:[%s211 + $0x2c] sm:$0xf]
      %v244 = vld [vmem:[%s211 + $0x30] sm:$0xf]
      %v245 = vld [vmem:[%s211 + $0x34] sm:$0xf]
      %v246 = vld [vmem:[%s211 + $0x38] sm:$0xf]
      %v247 = vld [vmem:[%s211 + $0x3c] sm:$0xf]
      %v248 = vld [vmem:[%s211 + $0x40] sm:$0xf]
      %v249 = vld [vmem:[%s211 + $0x44] sm:$0xf]
      %v250 = vld [vmem:[%s211 + $0x48] sm:$0xf]
      %v251 = vld [vmem:[%s211 + $0x4c] sm:$0xf]
      %v252 = vld [vmem:[%s211 + $0x50] sm:$0xf]
      %v253 = vld [vmem:[%s211 + $0x54] sm:$0xf]
      %v254 = vld [vmem:[%s211 + $0x58] sm:$0xf]
      %v255 = vld [vmem:[%s211 + $0x5c] sm:$0xf]
      %v256 = vld [vmem:[%s211 + $0x60] sm:$0xf]
      %v257 = vld [vmem:[%s211 + $0x64] sm:$0xf]
      %v258 = vld [vmem:[%s211 + $0x68] sm:$0xf]
      %v259 = vld [vmem:[%s211 + $0x6c] sm:$0xf]
      %v260 = vld [vmem:[%s211 + $0x70] sm:$0xf]
      %v261 = vld [vmem:[%s211 + $0x74] sm:$0xf]
      %v262 = vld [vmem:[%s211 + $0x78] sm:$0xf]
      %v263 = vld [vmem:[%s211 + $0x7c] sm:$0xf]
      %v264 = vld [vmem:[%s211 + $0x80] sm:$0xf]
      %v265 = vld [vmem:[%s211 + $0x84] sm:$0xf]
      %v266 = vld [vmem:[%s211 + $0x88] sm:$0xf]
      %v267 = vld [vmem:[%s211 + $0x8c] sm:$0xf]
      %v268 = vld [vmem:[%s211 + $0x90] sm:$0xf]
      %v269 = vld [vmem:[%s211 + $0x94] sm:$0xf]
      %v270 = vld [vmem:[%s211 + $0x98] sm:$0xf]
      %v271 = vld [vmem:[%s211 + $0x9c] sm:$0xf]
      %v272 = vld [vmem:[%s211 + $0xa0] sm:$0xf]
      %v273 = vld [vmem:[%s211 + $0xa4] sm:$0xf]
      %v274 = vld [vmem:[%s211 + $0xa8] sm:$0xf]
      %v275 = vld [vmem:[%s211 + $0xac] sm:$0xf]
      %v276 = vld [vmem:[%s211 + $0xb0] sm:$0xf]
      %v277 = vld [vmem:[%s211 + $0xb4] sm:$0xf]
      %v278 = vld [vmem:[%s211 + $0xb8] sm:$0xf]
      %v279 = vld [vmem:[%s211 + $0xbc] sm:$0xf]
      %v280 = vld [vmem:[%s211 + $0xc0] sm:$0xf]
      %v281 = vld [vmem:[%s211 + $0xc4] sm:$0xf]
      %v282 = vld [vmem:[%s211 + $0xc8] sm:$0xf]
      %v283 = vld [vmem:[%s211 + $0xcc] sm:$0xf]
      %v284 = vld [vmem:[%s211 + $0xd0] sm:$0xf]
      %v285 = vld [vmem:[%s211 + $0xd4] sm:$0xf]
      %v286 = vld [vmem:[%s211 + $0xd8] sm:$0xf]
      %v287 = vld [vmem:[%s211 + $0xdc] sm:$0xf]
      %v288 = vld [vmem:[%s211 + $0xe0] sm:$0xf]
      %v289 = vld [vmem:[%s211 + $0xe4] sm:$0xf]
      %v290 = vld [vmem:[%s211 + $0xe8] sm:$0xf]
      %v291 = vld [vmem:[%s211 + $0xec] sm:$0xf]
      %v292 = vld [vmem:[%s211 + $0xf0] sm:$0xf]
      %v293 = vld [vmem:[%s211 + $0xf4] sm:$0xf]
      %v294 = vld [vmem:[%s211 + $0xf8] sm:$0xf]
      %v295 = vld [vmem:[%s211 + $0xfc] sm:$0xf]
      %v296 = vld [vmem:[%s218] sm:$0xf]
      %v297 = vld [vmem:[%s218 + $0x4] sm:$0xf]
      %v298 = vld [vmem:[%s218 + $0x8] sm:$0xf]
      %v299 = vld [vmem:[%s218 + $0xc] sm:$0xf]
      %v300 = vld [vmem:[%s223] sm:$0x1]
      %v302 = vperm.slane %v300, 0
      %v368 = vunpack.c.l.b16 %v232
      %v369 = vunpack.c.l.b16 %v233
      %v370 = vunpack.c.l.b16 %v234
      %v371 = vunpack.c.l.b16 %v235
      %v372 = vunpack.c.l.b16 %v236
      %v373 = vunpack.c.l.b16 %v237
      %v374 = vunpack.c.l.b16 %v238
      %v375 = vunpack.c.l.b16 %v239
      %v376 = vunpack.c.l.b16 %v240
      %v377 = vunpack.c.l.b16 %v241
      %v378 = vunpack.c.l.b16 %v242
      %v379 = vunpack.c.l.b16 %v243
      %v380 = vunpack.c.l.b16 %v244
      %v381 = vunpack.c.l.b16 %v245
      %v382 = vunpack.c.l.b16 %v246
      %v383 = vunpack.c.l.b16 %v247
      %v384 = vunpack.c.l.b16 %v248
      %v385 = vunpack.c.l.b16 %v249
      %v386 = vunpack.c.l.b16 %v250
      %v387 = vunpack.c.l.b16 %v251
      %v388 = vunpack.c.l.b16 %v252
      %v389 = vunpack.c.l.b16 %v253
      %v390 = vunpack.c.l.b16 %v254
      %v391 = vunpack.c.l.b16 %v255
      %v392 = vunpack.c.l.b16 %v256
      %v393 = vunpack.c.l.b16 %v257
      %v394 = vunpack.c.l.b16 %v258
      %v395 = vunpack.c.l.b16 %v259
      %v396 = vunpack.c.l.b16 %v260
      %v397 = vunpack.c.l.b16 %v261
      %v398 = vunpack.c.l.b16 %v262
      %v399 = vunpack.c.l.b16 %v263
      %v400 = vunpack.c.l.b16 %v264
      %v401 = vunpack.c.l.b16 %v265
      %v402 = vunpack.c.l.b16 %v266
      %v403 = vunpack.c.l.b16 %v267
      %v404 = vunpack.c.l.b16 %v268
      %v405 = vunpack.c.l.b16 %v269
      %v406 = vunpack.c.l.b16 %v270
      %v407 = vunpack.c.l.b16 %v271
      %v408 = vunpack.c.l.b16 %v272
      %v409 = vunpack.c.l.b16 %v273
      %v410 = vunpack.c.l.b16 %v274
      %v411 = vunpack.c.l.b16 %v275
      %v412 = vunpack.c.l.b16 %v276
      %v413 = vunpack.c.l.b16 %v277
      %v414 = vunpack.c.l.b16 %v278
      %v415 = vunpack.c.l.b16 %v279
      %v416 = vunpack.c.l.b16 %v280
      %v417 = vunpack.c.l.b16 %v281
      %v418 = vunpack.c.l.b16 %v282
      %v419 = vunpack.c.l.b16 %v283
      %v420 = vunpack.c.l.b16 %v284
      %v421 = vunpack.c.l.b16 %v285
      %v422 = vunpack.c.l.b16 %v286
      %v423 = vunpack.c.l.b16 %v287
      %v424 = vunpack.c.l.b16 %v288
      %v425 = vunpack.c.l.b16 %v289
      %v426 = vunpack.c.l.b16 %v290
      %v427 = vunpack.c.l.b16 %v291
      %v428 = vunpack.c.l.b16 %v292
      %v429 = vunpack.c.l.b16 %v293
      %v430 = vunpack.c.l.b16 %v294
      %v431 = vunpack.c.l.b16 %v295
      %v432 = vpack.c.b16 %v369, %v368
      %v433 = vpack.c.b16 %v371, %v370
      %v434 = vpack.c.b16 %v373, %v372
      %v435 = vpack.c.b16 %v375, %v374
      %v436 = vpack.c.b16 %v377, %v376
      %v437 = vpack.c.b16 %v379, %v378
      %v438 = vpack.c.b16 %v381, %v380
      %v439 = vpack.c.b16 %v383, %v382
      %v440 = vpack.c.b16 %v385, %v384
      %v441 = vpack.c.b16 %v387, %v386
      %v442 = vpack.c.b16 %v389, %v388
      %v443 = vpack.c.b16 %v391, %v390
      %v444 = vpack.c.b16 %v393, %v392
      %v445 = vpack.c.b16 %v395, %v394
      %v446 = vpack.c.b16 %v397, %v396
      %v447 = vpack.c.b16 %v399, %v398
      %v448 = vpack.c.b16 %v401, %v400
      %v449 = vpack.c.b16 %v403, %v402
      %v450 = vpack.c.b16 %v405, %v404
      %v451 = vpack.c.b16 %v407, %v406
      %v452 = vpack.c.b16 %v409, %v408
      %v453 = vpack.c.b16 %v411, %v410
      %v454 = vpack.c.b16 %v413, %v412
      %v455 = vpack.c.b16 %v415, %v414
      %v456 = vpack.c.b16 %v417, %v416
      %v457 = vpack.c.b16 %v419, %v418
      %v458 = vpack.c.b16 %v421, %v420
      %v459 = vpack.c.b16 %v423, %v422
      %v460 = vpack.c.b16 %v425, %v424
      %v461 = vpack.c.b16 %v427, %v426
      %v462 = vpack.c.b16 %v429, %v428
      %v463 = vpack.c.b16 %v431, %v430
      %v468 = vunpack.c.l.b16 %v296
      %v469 = vunpack.c.l.b16 %v297
      %v470 = vunpack.c.l.b16 %v298
      %v471 = vunpack.c.l.b16 %v299
      %v472 = vpack.c.b16 %v469, %v468
      %v473 = vpack.c.b16 %v471, %v470
      %vm476 = vcmask 261120
      %v478 = vsel %vm476, %v432, 0
      %v481 = vsel %vm476, %v433, 0
      %v484 = vsel %vm476, %v434, 0
      %v487 = vsel %vm476, %v435, 0
      %v490 = vsel %vm476, %v436, 0
      %v493 = vsel %vm476, %v437, 0
      %v496 = vsel %vm476, %v438, 0
      %v499 = vsel %vm476, %v439, 0
      %v502 = vsel %vm476, %v440, 0
      %v505 = vsel %vm476, %v441, 0
      %v508 = vsel %vm476, %v442, 0
      %v511 = vsel %vm476, %v443, 0
      %v514 = vsel %vm476, %v444, 0
      %v517 = vsel %vm476, %v445, 0
      %v520 = vsel %vm476, %v446, 0
      %v523 = vsel %vm476, %v447, 0
      %v526 = vsel %vm476, %v448, 0
      %v529 = vsel %vm476, %v449, 0
      %v532 = vsel %vm476, %v450, 0
      %v535 = vsel %vm476, %v451, 0
      %v538 = vsel %vm476, %v452, 0
      %v541 = vsel %vm476, %v453, 0
      %v544 = vsel %vm476, %v454, 0
      %v547 = vsel %vm476, %v455, 0
      %v550 = vsel %vm476, %v456, 0
      %v553 = vsel %vm476, %v457, 0
      %v556 = vsel %vm476, %v458, 0
      %v559 = vsel %vm476, %v459, 0
      %v562 = vsel %vm476, %v460, 0
      %v565 = vsel %vm476, %v461, 0
      %v568 = vsel %vm476, %v462, 0
      %v571 = vsel %vm476, %v463, 0
      %573 = vmatpush.bf16.msra.mxu0 0
      %574 = vmatpush.bf16.msra.mxu0 0
      %575 = vmatpush.bf16.msra.mxu0 0
      %576 = vmatpush.bf16.msra.mxu0 0
      %577 = vmatpush.bf16.msra.mxu0 0
      %578 = vmatpush.bf16.msra.mxu0 0
      %579 = vmatpush.bf16.msra.mxu0 %v473
      %580 = vmatpush.bf16.msra.mxu0 %v472
      %581 = vmatmul.bf16.gmra.mxu0 %v478
      %v582 = vpop.f32.mrf.mxu0
      %v583 = vadd.f32 %v302, %v582
      %v584 = vpop.f32.mrf.mxu0
      %v585 = vadd.f32 %v302, %v584
      %586 = vmatmul.bf16.gmra.mxu0 %v481
      %v587 = vpop.f32.mrf.mxu0
      %v588 = vadd.f32 %v302, %v587
      %v589 = vpop.f32.mrf.mxu0
      %v590 = vadd.f32 %v302, %v589
      %591 = vmatmul.bf16.gmra.mxu0 %v484
      %v592 = vpop.f32.mrf.mxu0
      %v593 = vadd.f32 %v302, %v592
      %v594 = vpop.f32.mrf.mxu0
      %v595 = vadd.f32 %v302, %v594
      %596 = vmatmul.bf16.gmra.mxu0 %v487
      %v597 = vpop.f32.mrf.mxu0
      %v598 = vadd.f32 %v302, %v597
      %v599 = vpop.f32.mrf.mxu0
      %v600 = vadd.f32 %v302, %v599
      %601 = vmatmul.bf16.gmra.mxu0 %v490
      %v602 = vpop.f32.mrf.mxu0
      %v603 = vadd.f32 %v302, %v602
      %v604 = vpop.f32.mrf.mxu0
      %v605 = vadd.f32 %v302, %v604
      %606 = vmatmul.bf16.gmra.mxu0 %v493
      %v607 = vpop.f32.mrf.mxu0
      %v608 = vadd.f32 %v302, %v607
      %v609 = vpop.f32.mrf.mxu0
      %v610 = vadd.f32 %v302, %v609
      %611 = vmatmul.bf16.gmra.mxu0 %v496
      %v612 = vpop.f32.mrf.mxu0
      %v613 = vadd.f32 %v302, %v612
      %v614 = vpop.f32.mrf.mxu0
      %v615 = vadd.f32 %v302, %v614
      %616 = vmatmul.bf16.gmra.mxu0 %v499
      %v617 = vpop.f32.mrf.mxu0
      %v618 = vadd.f32 %v302, %v617
      %v619 = vpop.f32.mrf.mxu0
      %v620 = vadd.f32 %v302, %v619
      %621 = vmatmul.bf16.gmra.mxu0 %v502
      %v622 = vpop.f32.mrf.mxu0
      %v623 = vadd.f32 %v302, %v622
      %v624 = vpop.f32.mrf.mxu0
      %v625 = vadd.f32 %v302, %v624
      %626 = vmatmul.bf16.gmra.mxu0 %v505
      %v627 = vpop.f32.mrf.mxu0
      %v628 = vadd.f32 %v302, %v627
      %v629 = vpop.f32.mrf.mxu0
      %v630 = vadd.f32 %v302, %v629
      %631 = vmatmul.bf16.gmra.mxu0 %v508
      %v632 = vpop.f32.mrf.mxu0
      %v633 = vadd.f32 %v302, %v632
      %v634 = vpop.f32.mrf.mxu0
      %v635 = vadd.f32 %v302, %v634
      %636 = vmatmul.bf16.gmra.mxu0 %v511
      %v637 = vpop.f32.mrf.mxu0
      %v638 = vadd.f32 %v302, %v637
      %v639 = vpop.f32.mrf.mxu0
      %v640 = vadd.f32 %v302, %v639
      %641 = vmatmul.bf16.gmra.mxu0 %v514
      %v642 = vpop.f32.mrf.mxu0
      %v643 = vadd.f32 %v302, %v642
      %v644 = vpop.f32.mrf.mxu0
      %v645 = vadd.f32 %v302, %v644
      %646 = vmatmul.bf16.gmra.mxu0 %v517
      %v647 = vpop.f32.mrf.mxu0
      %v648 = vadd.f32 %v302, %v647
      %v649 = vpop.f32.mrf.mxu0
      %v650 = vadd.f32 %v302, %v649
      %651 = vmatmul.bf16.gmra.mxu0 %v520
      %v652 = vpop.f32.mrf.mxu0
      %v653 = vadd.f32 %v302, %v652
      %v654 = vpop.f32.mrf.mxu0
      %v655 = vadd.f32 %v302, %v654
      %656 = vmatmul.bf16.gmra.mxu0 %v523
      %v657 = vpop.f32.mrf.mxu0
      %v658 = vadd.f32 %v302, %v657
      %v659 = vpop.f32.mrf.mxu0
      %v660 = vadd.f32 %v302, %v659
      %661 = vmatmul.bf16.gmra.mxu0 %v526
      %v662 = vpop.f32.mrf.mxu0
      %v663 = vadd.f32 %v302, %v662
      %v664 = vpop.f32.mrf.mxu0
      %v665 = vadd.f32 %v302, %v664
      %666 = vmatmul.bf16.gmra.mxu0 %v529
      %v667 = vpop.f32.mrf.mxu0
      %v668 = vadd.f32 %v302, %v667
      %v669 = vpop.f32.mrf.mxu0
      %v670 = vadd.f32 %v302, %v669
      %671 = vmatmul.bf16.gmra.mxu0 %v532
      %v672 = vpop.f32.mrf.mxu0
      %v673 = vadd.f32 %v302, %v672
      %v674 = vpop.f32.mrf.mxu0
      %v675 = vadd.f32 %v302, %v674
      %676 = vmatmul.bf16.gmra.mxu0 %v535
      %v677 = vpop.f32.mrf.mxu0
      %v678 = vadd.f32 %v302, %v677
      %v679 = vpop.f32.mrf.mxu0
      %v680 = vadd.f32 %v302, %v679
      %681 = vmatmul.bf16.gmra.mxu0 %v538
      %v682 = vpop.f32.mrf.mxu0
      %v683 = vadd.f32 %v302, %v682
      %v684 = vpop.f32.mrf.mxu0
      %v685 = vadd.f32 %v302, %v684
      %686 = vmatmul.bf16.gmra.mxu0 %v541
      %v687 = vpop.f32.mrf.mxu0
      %v688 = vadd.f32 %v302, %v687
      %v689 = vpop.f32.mrf.mxu0
      %v690 = vadd.f32 %v302, %v689
      %691 = vmatmul.bf16.gmra.mxu0 %v544
      %v692 = vpop.f32.mrf.mxu0
      %v693 = vadd.f32 %v302, %v692
      %v694 = vpop.f32.mrf.mxu0
      %v695 = vadd.f32 %v302, %v694
      %696 = vmatmul.bf16.gmra.mxu0 %v547
      %v697 = vpop.f32.mrf.mxu0
      %v698 = vadd.f32 %v302, %v697
      %v699 = vpop.f32.mrf.mxu0
      %v700 = vadd.f32 %v302, %v699
      %701 = vmatmul.bf16.gmra.mxu0 %v550
      %v702 = vpop.f32.mrf.mxu0
      %v703 = vadd.f32 %v302, %v702
      %v704 = vpop.f32.mrf.mxu0
      %v705 = vadd.f32 %v302, %v704
      %706 = vmatmul.bf16.gmra.mxu0 %v553
      %v707 = vpop.f32.mrf.mxu0
      %v708 = vadd.f32 %v302, %v707
      %v709 = vpop.f32.mrf.mxu0
      %v710 = vadd.f32 %v302, %v709
      %711 = vmatmul.bf16.gmra.mxu0 %v556
      %v712 = vpop.f32.mrf.mxu0
      %v713 = vadd.f32 %v302, %v712
      %v714 = vpop.f32.mrf.mxu0
      %v715 = vadd.f32 %v302, %v714
      %716 = vmatmul.bf16.gmra.mxu0 %v559
      %v717 = vpop.f32.mrf.mxu0
      %v718 = vadd.f32 %v302, %v717
      %v719 = vpop.f32.mrf.mxu0
      %v720 = vadd.f32 %v302, %v719
      %721 = vmatmul.bf16.gmra.mxu0 %v562
      %v722 = vpop.f32.mrf.mxu0
      %v723 = vadd.f32 %v302, %v722
      %v724 = vpop.f32.mrf.mxu0
      %v725 = vadd.f32 %v302, %v724
      %726 = vmatmul.bf16.gmra.mxu0 %v565
      %v727 = vpop.f32.mrf.mxu0
      %v728 = vadd.f32 %v302, %v727
      %v729 = vpop.f32.mrf.mxu0
      %v730 = vadd.f32 %v302, %v729
      %731 = vmatmul.bf16.gmra.mxu0 %v568
      %v732 = vpop.f32.mrf.mxu0
      %v733 = vadd.f32 %v302, %v732
      %v734 = vpop.f32.mrf.mxu0
      %v735 = vadd.f32 %v302, %v734
      %736 = vmatmul.bf16.gmra.mxu0 %v571
      %v737 = vpop.f32.mrf.mxu0
      %v738 = vadd.f32 %v302, %v737
      %v739 = vpop.f32.mrf.mxu0
      %v740 = vadd.f32 %v302, %v739
      %741 = vdwg.mxu0
      %v742 = vpack.c.bf16 %v583, %v583
      %v743 = vpack.c.bf16 %v585, %v585
      %v744 = vpack.c.bf16 %v588, %v588
      %v745 = vpack.c.bf16 %v590, %v590
      %v746 = vpack.c.bf16 %v593, %v593
      %v747 = vpack.c.bf16 %v595, %v595
      %v748 = vpack.c.bf16 %v598, %v598
      %v749 = vpack.c.bf16 %v600, %v600
      %v750 = vpack.c.bf16 %v603, %v603
      %v751 = vpack.c.bf16 %v605, %v605
      %v752 = vpack.c.bf16 %v608, %v608
      %v753 = vpack.c.bf16 %v610, %v610
      %v754 = vpack.c.bf16 %v613, %v613
      %v755 = vpack.c.bf16 %v615, %v615
      %v756 = vpack.c.bf16 %v618, %v618
      %v757 = vpack.c.bf16 %v620, %v620
      %v758 = vpack.c.bf16 %v623, %v623
      %v759 = vpack.c.bf16 %v625, %v625
      %v760 = vpack.c.bf16 %v628, %v628
      %v761 = vpack.c.bf16 %v630, %v630
      %v762 = vpack.c.bf16 %v633, %v633
      %v763 = vpack.c.bf16 %v635, %v635
      %v764 = vpack.c.bf16 %v638, %v638
      %v765 = vpack.c.bf16 %v640, %v640
      %v766 = vpack.c.bf16 %v643, %v643
      %v767 = vpack.c.bf16 %v645, %v645
      %v768 = vpack.c.bf16 %v648, %v648
      %v769 = vpack.c.bf16 %v650, %v650
      %v770 = vpack.c.bf16 %v653, %v653
      %v771 = vpack.c.bf16 %v655, %v655
      %v772 = vpack.c.bf16 %v658, %v658
      %v773 = vpack.c.bf16 %v660, %v660
      %v774 = vpack.c.bf16 %v663, %v663
      %v775 = vpack.c.bf16 %v665, %v665
      %v776 = vpack.c.bf16 %v668, %v668
      %v777 = vpack.c.bf16 %v670, %v670
      %v778 = vpack.c.bf16 %v673, %v673
      %v779 = vpack.c.bf16 %v675, %v675
      %v780 = vpack.c.bf16 %v678, %v678
      %v781 = vpack.c.bf16 %v680, %v680
      %v782 = vpack.c.bf16 %v683, %v683
      %v783 = vpack.c.bf16 %v685, %v685
      %v784 = vpack.c.bf16 %v688, %v688
      %v785 = vpack.c.bf16 %v690, %v690
      %v786 = vpack.c.bf16 %v693, %v693
      %v787 = vpack.c.bf16 %v695, %v695
      %v788 = vpack.c.bf16 %v698, %v698
      %v789 = vpack.c.bf16 %v700, %v700
      %v790 = vpack.c.bf16 %v703, %v703
      %v791 = vpack.c.bf16 %v705, %v705
      %v792 = vpack.c.bf16 %v708, %v708
      %v793 = vpack.c.bf16 %v710, %v710
      %v794 = vpack.c.bf16 %v713, %v713
      %v795 = vpack.c.bf16 %v715, %v715
      %v796 = vpack.c.bf16 %v718, %v718
      %v797 = vpack.c.bf16 %v720, %v720
      %v798 = vpack.c.bf16 %v723, %v723
      %v799 = vpack.c.bf16 %v725, %v725
      %v800 = vpack.c.bf16 %v728, %v728
      %v801 = vpack.c.bf16 %v730, %v730
      %v802 = vpack.c.bf16 %v733, %v733
      %v803 = vpack.c.bf16 %v735, %v735
      %v804 = vpack.c.bf16 %v738, %v738
      %v805 = vpack.c.bf16 %v740, %v740
      %806 = vst [vmem:[%s229] sm:$0xf] %v742
      %807 = vst [vmem:[%s229 + $0x4] sm:$0xf] %v743
      %808 = vst [vmem:[%s229 + $0x8] sm:$0xf] %v744
      %809 = vst [vmem:[%s229 + $0xc] sm:$0xf] %v745
      %810 = vst [vmem:[%s229 + $0x10] sm:$0xf] %v746
      %811 = vst [vmem:[%s229 + $0x14] sm:$0xf] %v747
      %812 = vst [vmem:[%s229 + $0x18] sm:$0xf] %v748
      %813 = vst [vmem:[%s229 + $0x1c] sm:$0xf] %v749
      %814 = vst [vmem:[%s229 + $0x20] sm:$0xf] %v750
      %815 = vst [vmem:[%s229 + $0x24] sm:$0xf] %v751
      %816 = vst [vmem:[%s229 + $0x28] sm:$0xf] %v752
      %817 = vst [vmem:[%s229 + $0x2c] sm:$0xf] %v753
      %818 = vst [vmem:[%s229 + $0x30] sm:$0xf] %v754
      %819 = vst [vmem:[%s229 + $0x34] sm:$0xf] %v755
      %820 = vst [vmem:[%s229 + $0x38] sm:$0xf] %v756
      %821 = vst [vmem:[%s229 + $0x3c] sm:$0xf] %v757
      %822 = vst [vmem:[%s229 + $0x40] sm:$0xf] %v758
      %823 = vst [vmem:[%s229 + $0x44] sm:$0xf] %v759
      %824 = vst [vmem:[%s229 + $0x48] sm:$0xf] %v760
      %825 = vst [vmem:[%s229 + $0x4c] sm:$0xf] %v761
      %826 = vst [vmem:[%s229 + $0x50] sm:$0xf] %v762
      %827 = vst [vmem:[%s229 + $0x54] sm:$0xf] %v763
      %828 = vst [vmem:[%s229 + $0x58] sm:$0xf] %v764
      %829 = vst [vmem:[%s229 + $0x5c] sm:$0xf] %v765
      %830 = vst [vmem:[%s229 + $0x60] sm:$0xf] %v766
      %831 = vst [vmem:[%s229 + $0x64] sm:$0xf] %v767
      %832 = vst [vmem:[%s229 + $0x68] sm:$0xf] %v768
      %833 = vst [vmem:[%s229 + $0x6c] sm:$0xf] %v769
      %834 = vst [vmem:[%s229 + $0x70] sm:$0xf] %v770
      %835 = vst [vmem:[%s229 + $0x74] sm:$0xf] %v771
      %836 = vst [vmem:[%s229 + $0x78] sm:$0xf] %v772
      %837 = vst [vmem:[%s229 + $0x7c] sm:$0xf] %v773
      %838 = vst [vmem:[%s229 + $0x80] sm:$0xf] %v774
      %839 = vst [vmem:[%s229 + $0x84] sm:$0xf] %v775
      %840 = vst [vmem:[%s229 + $0x88] sm:$0xf] %v776
      %841 = vst [vmem:[%s229 + $0x8c] sm:$0xf] %v777
      %842 = vst [vmem:[%s229 + $0x90] sm:$0xf] %v778
      %843 = vst [vmem:[%s229 + $0x94] sm:$0xf] %v779
      %844 = vst [vmem:[%s229 + $0x98] sm:$0xf] %v780
      %845 = vst [vmem:[%s229 + $0x9c] sm:$0xf] %v781
      %846 = vst [vmem:[%s229 + $0xa0] sm:$0xf] %v782
      %847 = vst [vmem:[%s229 + $0xa4] sm:$0xf] %v783
      %848 = vst [vmem:[%s229 + $0xa8] sm:$0xf] %v784
      %849 = vst [vmem:[%s229 + $0xac] sm:$0xf] %v785
      %850 = vst [vmem:[%s229 + $0xb0] sm:$0xf] %v786
      %851 = vst [vmem:[%s229 + $0xb4] sm:$0xf] %v787
      %852 = vst [vmem:[%s229 + $0xb8] sm:$0xf] %v788
      %853 = vst [vmem:[%s229 + $0xbc] sm:$0xf] %v789
      %854 = vst [vmem:[%s229 + $0xc0] sm:$0xf] %v790
      %855 = vst [vmem:[%s229 + $0xc4] sm:$0xf] %v791
      %856 = vst [vmem:[%s229 + $0xc8] sm:$0xf] %v792
      %857 = vst [vmem:[%s229 + $0xcc] sm:$0xf] %v793
      %858 = vst [vmem:[%s229 + $0xd0] sm:$0xf] %v794
      %859 = vst [vmem:[%s229 + $0xd4] sm:$0xf] %v795
      %860 = vst [vmem:[%s229 + $0xd8] sm:$0xf] %v796
      %861 = vst [vmem:[%s229 + $0xdc] sm:$0xf] %v797
      %862 = vst [vmem:[%s229 + $0xe0] sm:$0xf] %v798
      %863 = vst [vmem:[%s229 + $0xe4] sm:$0xf] %v799
      %864 = vst [vmem:[%s229 + $0xe8] sm:$0xf] %v800
      %865 = vst [vmem:[%s229 + $0xec] sm:$0xf] %v801
      %866 = vst [vmem:[%s229 + $0xf0] sm:$0xf] %v802
      %867 = vst [vmem:[%s229 + $0xf4] sm:$0xf] %v803
      %868 = vst [vmem:[%s229 + $0xf8] sm:$0xf] %v804
      %869 = vst [vmem:[%s229 + $0xfc] sm:$0xf] %v805
      %s870 = smul.u32 64, %s23
      %p871 = scmp.lt.s32.totalorder %s870, 191
      %s872 = scalar_select %p871, %s870, 191
      %s873 = smul.addr %s872, 4
      %s874 = scalar_lea.vmem %s4, %s873
      // Predicated region
      $region33: #{_forward.9} parent=31 // pred_check
        %p875 = pneg %p123
      $region34: #{_forward.9} parent=31 // pred_check_branch
        %877 = sbr.rel (%p875) target = $region36
      $region35: #{_forward.9} parent=31 // pred_region
        %s878 = smul.u32 64, %s23
      $region36: #{_forward.9} parent=31 // pred_fallthru
        _
    $region32: #{_forward.9} parent=5 // pred_fallthru
      _
    %p879 = scmp.le.s32.totalorder 2, %s18
    // Predicated region
    $region37: #{_forward.9} parent=5 // pred_check
      %p880 = pneg %p879
    $region38: #{_forward.9} parent=5 // pred_check_branch
      %882 = sbr.rel (%p880) target = $region40
    $region39: #{_forward.9} parent=5 // pred_region
      %s883 = ssub.s32 %s18, 2
      // Predicated region
      $region41: #{_forward.9} parent=39 // pred_check
        %p884 = pneg %p129
      $region42: #{_forward.9} parent=39 // pred_check_branch
        %886 = sbr.rel (%p884) target = $region44
      $region43: #{_forward.9} parent=39 // pred_region
        %s887 = smul.u32 64, %s24
        %p888 = scmp.lt.s32.totalorder %s887, 191
        %s889 = scalar_select %p888, %s887, 191
        %s890 = smul.addr %s889, 4
        %s891 = scalar_lea.vmem %s4, %s890
      $region44: #{_forward.9} parent=39 // pred_fallthru
        _
    $region40: #{_forward.9} parent=5 // pred_fallthru
      _
  $region6: #{_forward.9} parent=0 // loop_footer
    %s22 = sadd.s32 1, %s18
  $region7: #{_forward.9} parent=0 // loop_footer_branch
    %17 = sbr.rel target = $region3
  $region8: #{_forward.9} parent=0 // loop_exit
    _

// kernel: _forward.10
$region0: #{_forward.10}
  #allocation0 [shape = 'u32[]', space=smem, size = 0x4, offset = 0x4, fixed_abs, tag = 'smem constant byte address 0x4 - core index']
  #allocation1 [shape = 'u32[72,128]{1,0:T(1,128)}', space=vmem, size = 0x9000, scoped, tag = 'internal scratch']
  #allocation2 [shape = 's32[1]{0}', space=sflag, size = 0x4, scoped, tag = 'scoped memory for _forward.10']
  #allocation3 [shape = 'u8[512]{0}', space=smem, size = 0x200, scoped, tag = 'prefetched SMEM operand 0']
  %s0 = inlined_call_operand.vmem [shape: s32[3], index: 0, kind: input, shape index: {}]
  %s1 = inlined_call_operand.vmem [shape: bf16[1536,144], index: 1, kind: input, shape index: {}]
  %s2 = inlined_call_operand.vmem [shape: bf16[3,144,128], index: 2, kind: input, shape index: {}]
  %s3 = inlined_call_operand.vmem [shape: f32[3,1,128], index: 3, kind: input, shape index: {}]
  %s4 = inlined_call_operand.vmem [shape: bf16[1536,128], index: 4, kind: output, shape index: {}]
  %s5 = sld [smem:[#allocation0]]
  $region45: #{_forward.10} parent=0
    _
  %s7 = ssub.s32 1, %s5
  %s8 = scalar_select 0, %s7, %s5
  %s10 = sshll.u32 %s0, 4
  %s11 = int_to_ptr.vmem [resolvable:$true] %s10
  %13 = dma.vmem_to_smem %s11, 16, [#allocation3], [#allocation2]
  %15 = dma.done [#allocation2], 16
  %16 = sfence
  loop: start=0, step=1, limit=5
  $region2: #{_forward.10} parent=0 // loop_pre_header
    _
  $region3: #{_forward.10} parent=0 // loop_header
    %s18 = sphi 0, %s22
    %p19 = scmp.ge.s32.totalorder %s18, 5
    %s28 = sphi 0, %s30
    %s31 = sphi 0, %s28
    %s32 = sphi 0, %s31
    %s48 = sphi 0, %s32
    %s56 = sphi 0, %s58
    %s59 = sphi 0, %s56
    %s60 = sphi 0, %s59
    %s76 = sphi 0, %s60
    %s84 = sphi 0, %s86
    %s87 = sphi 0, %s84
    %s88 = sphi 0, %s87
    %s104 = sphi 0, %s88
    %s110 = sphi 0, %s112
    %s113 = sphi 0, %s110
    %s114 = sphi 0, %s113
    %s130 = sphi 0, %s114
  $region4: #{_forward.10} parent=0 // loop_header_branch
    %21 = sbr.rel (%p19) target = $region8
  $region5: #{_forward.10} parent=0 // loop_body
    %s23 = ssub.s32 %s18, 1
    %s24 = ssub.s32 %s18, 2
    %s25 = sadd.s32 %s18, 1
    %s26 = ssub.s32 %s18, %s25
    %p27 = scmp.eq.s32.totalorder %s26, 0
    %s29 = sadd.s32 %s28, 1
    %s30 = scalar_select %p27, %s28, %s29
    %p33 = pneg %p27
    %p34 = scmp.eq.s32.totalorder %s18, 2
    %p35 = por %p33, %p34
    %p36 = scmp.ne.s32.totalorder %s28, %s31
    %p37 = scmp.eq.s32.totalorder %s18, 0
    %p38 = por %p36, %p37
    %p39 = scmp.ne.s32.totalorder %s28, %s31
    %p40 = scmp.eq.s32.totalorder %s23, 2
    %p41 = por %p39, %p40
    %p42 = scmp.ne.s32.totalorder %s31, %s32
    %p43 = scmp.eq.s32.totalorder %s23, 0
    %p44 = por %p42, %p43
    %p45 = scmp.ne.s32.totalorder %s31, %s32
    %p46 = scmp.eq.s32.totalorder %s24, 2
    %p47 = por %p45, %p46
    %p49 = scmp.ne.s32.totalorder %s32, %s48
    %p50 = scmp.eq.s32.totalorder %s24, 0
    %p51 = por %p49, %p50
    %s52 = sld [smem:[#allocation3 + %s18]]
    %s53 = sld [smem:[#allocation3 + %s25]]
    %s54 = ssub.s32 %s52, %s53
    %p55 = scmp.eq.s32.totalorder %s54, 0
    %s57 = sadd.s32 %s56, 1
    %s58 = scalar_select %p55, %s56, %s57
    %p61 = pneg %p55
    %p62 = scmp.eq.s32.totalorder %s18, 2
    %p63 = por %p61, %p62
    %p64 = scmp.ne.s32.totalorder %s56, %s59
    %p65 = scmp.eq.s32.totalorder %s18, 0
    %p66 = por %p64, %p65
    %p67 = scmp.ne.s32.totalorder %s56, %s59
    %p68 = scmp.eq.s32.totalorder %s23, 2
    %p69 = por %p67, %p68
    %p70 = scmp.ne.s32.totalorder %s59, %s60
    %p71 = scmp.eq.s32.totalorder %s23, 0
    %p72 = por %p70, %p71
    %p73 = scmp.ne.s32.totalorder %s59, %s60
    %p74 = scmp.eq.s32.totalorder %s24, 2
    %p75 = por %p73, %p74
    %p77 = scmp.ne.s32.totalorder %s60, %s76
    %p78 = scmp.eq.s32.totalorder %s24, 0
    %p79 = por %p77, %p78
    %s80 = sld [smem:[#allocation3 + %s18]]
    %s81 = sld [smem:[#allocation3 + %s25]]
    %s82 = ssub.s32 %s80, %s81
    %p83 = scmp.eq.s32.totalorder %s82, 0
    %s85 = sadd.s32 %s84, 1
    %s86 = scalar_select %p83, %s84, %s85
    %p89 = pneg %p83
    %p90 = scmp.eq.s32.totalorder %s18, 2
    %p91 = por %p89, %p90
    %p92 = scmp.ne.s32.totalorder %s84, %s87
    %p93 = scmp.eq.s32.totalorder %s18, 0
    %p94 = por %p92, %p93
    %p95 = scmp.ne.s32.totalorder %s84, %s87
    %p96 = scmp.eq.s32.totalorder %s23, 2
    %p97 = por %p95, %p96
    %p98 = scmp.ne.s32.totalorder %s87, %s88
    %p99 = scmp.eq.s32.totalorder %s23, 0
    %p100 = por %p98, %p99
    %p101 = scmp.ne.s32.totalorder %s87, %s88
    %p102 = scmp.eq.s32.totalorder %s24, 2
    %p103 = por %p101, %p102
    %p105 = scmp.ne.s32.totalorder %s88, %s104
    %p106 = scmp.eq.s32.totalorder %s24, 0
    %p107 = por %p105, %p106
    %s108 = ssub.s32 %s18, %s25
    %p109 = scmp.eq.s32.totalorder %s108, 0
    %s111 = sadd.s32 %s110, 1
    %s112 = scalar_select %p109, %s110, %s111
    %p115 = pneg %p109
    %p116 = scmp.eq.s32.totalorder %s18, 2
    %p117 = por %p115, %p116
    %p118 = scmp.ne.s32.totalorder %s110, %s113
    %p119 = scmp.eq.s32.totalorder %s18, 0
    %p120 = por %p118, %p119
    %p121 = scmp.ne.s32.totalorder %s110, %s113
    %p122 = scmp.eq.s32.totalorder %s23, 2
    %p123 = por %p121, %p122
    %p124 = scmp.ne.s32.totalorder %s113, %s114
    %p125 = scmp.eq.s32.totalorder %s23, 0
    %p126 = por %p124, %p125
    %p127 = scmp.ne.s32.totalorder %s113, %s114
    %p128 = scmp.eq.s32.totalorder %s24, 2
    %p129 = por %p127, %p128
    %p131 = scmp.ne.s32.totalorder %s114, %s130
    %p132 = scmp.eq.s32.totalorder %s24, 0
    %p133 = por %p131, %p132
    %p134 = scmp.le.s32.totalorder 1, %s18
    %p135 = scmp.lt.s32.totalorder %s18, 4
    %p136 = pnand %p134, %p135
    %p137 = pneg %p136
    // Predicated region
    $region9: #{_forward.10} parent=5 // pred_check
      _
    $region10: #{_forward.10} parent=5 // pred_check_branch
      %139 = sbr.rel (%p136) target = $region12
    $region11: #{_forward.10} parent=5 // pred_region
      %s140 = ssub.s32 %s18, 1
    $region12: #{_forward.10} parent=5 // pred_fallthru
      _
    %p141 = scmp.lt.s32.totalorder %s18, 3
    // Predicated region
    $region13: #{_forward.10} parent=5 // pred_check
      %p142 = pneg %p141
    $region14: #{_forward.10} parent=5 // pred_check_branch
      %144 = sbr.rel (%p142) target = $region16
    $region15: #{_forward.10} parent=5 // pred_region
      // Predicated region
      $region17: #{_forward.10} parent=15 // pred_check
        %p145 = pneg %p38
      $region18: #{_forward.10} parent=15 // pred_check_branch
        %147 = sbr.rel (%p145) target = $region20
      $region19: #{_forward.10} parent=15 // pred_region
        %s148 = smul.u32 64, %s18
        %p149 = scmp.lt.s32.totalorder %s148, 191
        %s150 = scalar_select %p149, %s148, 191
        %s151 = smul.addr %s150, 2
        %s152 = smul.addr %s151, 4
        %s153 = scalar_lea.vmem %s1, %s152
        %s154 = smul.u32 64, %s18
      $region20: #{_forward.10} parent=15 // pred_fallthru
        _
      // Predicated region
      $region21: #{_forward.10} parent=15 // pred_check
        %p155 = pneg %p66
      $region22: #{_forward.10} parent=15 // pred_check_branch
        %157 = sbr.rel (%p155) target = $region24
      $region23: #{_forward.10} parent=15 // pred_region
        %s158 = sld [smem:[#allocation3 + %s18]]
        %p159 = scmp.lt.s32.totalorder %s158, 2
        %s160 = scalar_select %p159, %s158, 2
        %s161 = smul.addr %s160, 18
        %s162 = smul.addr %s161, 4
        %s163 = scalar_lea.vmem %s2, %s162
        %s164 = sld [smem:[#allocation3 + %s18]]
      $region24: #{_forward.10} parent=15 // pred_fallthru
        _
      // Predicated region
      $region25: #{_forward.10} parent=15 // pred_check
        %p165 = pneg %p94
      $region26: #{_forward.10} parent=15 // pred_check_branch
        %167 = sbr.rel (%p165) target = $region28
      $region27: #{_forward.10} parent=15 // pred_region
        %s168 = sld [smem:[#allocation3 + %s18]]
        %p169 = scmp.lt.s32.totalorder %s168, 2
        %s170 = scalar_select %p169, %s168, 2
        %s171 = scalar_lea.vmem %s3, %s170
        %s172 = sld [smem:[#allocation3 + %s18]]
      $region28: #{_forward.10} parent=15 // pred_fallthru
        _
    $region16: #{_forward.10} parent=5 // pred_fallthru
      _
    %p173 = scmp.le.s32.totalorder 1, %s18
    %p174 = scmp.lt.s32.totalorder %s18, 4
    %p175 = pnand %p173, %p174
    %p176 = pneg %p175
    // Predicated region
    $region29: #{_forward.10} parent=5 // pred_check
      _
    $region30: #{_forward.10} parent=5 // pred_check_branch
      %178 = sbr.rel (%p175) target = $region32
    $region31: #{_forward.10} parent=5 // pred_region
      %s179 = ssub.s32 %s18, 1
      %s180 = smul.u32 64, %s23
      %p181 = scmp.lt.s32.totalorder %s180, 191
      %s182 = scalar_select %p181, %s180, 191
      %s183 = smul.addr %s182, 2
      %s184 = smul.addr %s183, 4
      %s185 = scalar_lea.vmem %s1, %s184
      %p186 = pneg %p44
      %p187 = pneg %p41
      %s188 = sld [smem:[#allocation3 + %s23]]
      %p189 = scmp.lt.s32.totalorder %s188, 2
      %s190 = scalar_select %p189, %s188, 2
      %s191 = smul.addr %s190, 18
      %s192 = smul.addr %s191, 4
      %s193 = scalar_lea.vmem %s2, %s192
      %p194 = pneg %p72
      %p195 = pneg %p69
      %s196 = sld [smem:[#allocation3 + %s23]]
      %p197 = scmp.lt.s32.totalorder %s196, 2
      %s198 = scalar_select %p197, %s196, 2
      %s199 = scalar_lea.vmem %s3, %s198
      %p200 = pneg %p100
      %p201 = pneg %p97
      %p202 = pneg %p126
      %p203 = pneg %p123
      %s204 = smul.u32 64, %s23
      %p205 = scmp.lt.s32.totalorder %s204, 191
      %s206 = scalar_select %p205, %s204, 191
      %s207 = smul.addr %s206, 4
      %s208 = scalar_lea.vmem %s4, %s207
      %s209 = smul.u32 64, %s23
      %p210 = scmp.lt.s32.totalorder %s209, 191
      %s211 = scalar_select %p210, %s209, 191
      %s212 = smul.addr %s211, 2
      %s213 = smul.addr %s212, 4
      %s214 = scalar_lea.vmem %s1, %s213
      %s215 = smul.u32 64, %s23
      %s216 = sld [smem:[#allocation3 + %s23]]
      %p217 = scmp.lt.s32.totalorder %s216, 2
      %s218 = scalar_select %p217, %s216, 2
      %s219 = smul.addr %s218, 18
      %s220 = smul.addr %s219, 4
      %s221 = scalar_lea.vmem %s2, %s220
      %s222 = sld [smem:[#allocation3 + %s23]]
      %s223 = sld [smem:[#allocation3 + %s23]]
      %p224 = scmp.lt.s32.totalorder %s223, 2
      %s225 = scalar_select %p224, %s223, 2
      %s226 = scalar_lea.vmem %s3, %s225
      %s227 = sld [smem:[#allocation3 + %s23]]
      %s228 = smul.u32 64, %s23
      %p229 = scmp.lt.s32.totalorder %s228, 191
      %s230 = scalar_select %p229, %s228, 191
      %s231 = smul.addr %s230, 4
      %s232 = scalar_lea.vmem %s4, %s231
      %s233 = smul.u32 64, %s23
      %v235 = vld [vmem:[%s214] sm:$0xff]
      %v236 = vld [vmem:[%s214 + $0x8] sm:$0xff]
      %v237 = vld [vmem:[%s214 + $0x10] sm:$0xff]
      %v238 = vld [vmem:[%s214 + $0x18] sm:$0xff]
      %v239 = vld [vmem:[%s214 + $0x20] sm:$0xff]
      %v240 = vld [vmem:[%s214 + $0x28] sm:$0xff]
      %v241 = vld [vmem:[%s214 + $0x30] sm:$0xff]
      %v242 = vld [vmem:[%s214 + $0x38] sm:$0xff]
      %v243 = vld [vmem:[%s214 + $0x40] sm:$0xff]
      %v244 = vld [vmem:[%s214 + $0x48] sm:$0xff]
      %v245 = vld [vmem:[%s214 + $0x50] sm:$0xff]
      %v246 = vld [vmem:[%s214 + $0x58] sm:$0xff]
      %v247 = vld [vmem:[%s214 + $0x60] sm:$0xff]
      %v248 = vld [vmem:[%s214 + $0x68] sm:$0xff]
      %v249 = vld [vmem:[%s214 + $0x70] sm:$0xff]
      %v250 = vld [vmem:[%s214 + $0x78] sm:$0xff]
      %v251 = vld [vmem:[%s214 + $0x80] sm:$0xff]
      %v252 = vld [vmem:[%s214 + $0x88] sm:$0xff]
      %v253 = vld [vmem:[%s214 + $0x90] sm:$0xff]
      %v254 = vld [vmem:[%s214 + $0x98] sm:$0xff]
      %v255 = vld [vmem:[%s214 + $0xa0] sm:$0xff]
      %v256 = vld [vmem:[%s214 + $0xa8] sm:$0xff]
      %v257 = vld [vmem:[%s214 + $0xb0] sm:$0xff]
      %v258 = vld [vmem:[%s214 + $0xb8] sm:$0xff]
      %v259 = vld [vmem:[%s214 + $0xc0] sm:$0xff]
      %v260 = vld [vmem:[%s214 + $0xc8] sm:$0xff]
      %v261 = vld [vmem:[%s214 + $0xd0] sm:$0xff]
      %v262 = vld [vmem:[%s214 + $0xd8] sm:$0xff]
      %v263 = vld [vmem:[%s214 + $0xe0] sm:$0xff]
      %v264 = vld [vmem:[%s214 + $0xe8] sm:$0xff]
      %v265 = vld [vmem:[%s214 + $0xf0] sm:$0xff]
      %v266 = vld [vmem:[%s214 + $0xf8] sm:$0xff]
      %v267 = vld [vmem:[%s214 + $0x100] sm:$0xff]
      %v268 = vld [vmem:[%s214 + $0x108] sm:$0xff]
      %v269 = vld [vmem:[%s214 + $0x110] sm:$0xff]
      %v270 = vld [vmem:[%s214 + $0x118] sm:$0xff]
      %v271 = vld [vmem:[%s214 + $0x120] sm:$0xff]
      %v272 = vld [vmem:[%s214 + $0x128] sm:$0xff]
      %v273 = vld [vmem:[%s214 + $0x130] sm:$0xff]
      %v274 = vld [vmem:[%s214 + $0x138] sm:$0xff]
      %v275 = vld [vmem:[%s214 + $0x140] sm:$0xff]
      %v276 = vld [vmem:[%s214 + $0x148] sm:$0xff]
      %v277 = vld [vmem:[%s214 + $0x150] sm:$0xff]
      %v278 = vld [vmem:[%s214 + $0x158] sm:$0xff]
      %v279 = vld [vmem:[%s214 + $0x160] sm:$0xff]
      %v280 = vld [vmem:[%s214 + $0x168] sm:$0xff]
      %v281 = vld [vmem:[%s214 + $0x170] sm:$0xff]
      %v282 = vld [vmem:[%s214 + $0x178] sm:$0xff]
      %v283 = vld [vmem:[%s214 + $0x180] sm:$0xff]
      %v284 = vld [vmem:[%s214 + $0x188] sm:$0xff]
      %v285 = vld [vmem:[%s214 + $0x190] sm:$0xff]
      %v286 = vld [vmem:[%s214 + $0x198] sm:$0xff]
      %v287 = vld [vmem:[%s214 + $0x1a0] sm:$0xff]
      %v288 = vld [vmem:[%s214 + $0x1a8] sm:$0xff]
      %v289 = vld [vmem:[%s214 + $0x1b0] sm:$0xff]
      %v290 = vld [vmem:[%s214 + $0x1b8] sm:$0xff]
      %v291 = vld [vmem:[%s214 + $0x1c0] sm:$0xff]
      %v292 = vld [vmem:[%s214 + $0x1c8] sm:$0xff]
      %v293 = vld [vmem:[%s214 + $0x1d0] sm:$0xff]
      %v294 = vld [vmem:[%s214 + $0x1d8] sm:$0xff]
      %v295 = vld [vmem:[%s214 + $0x1e0] sm:$0xff]
      %v296 = vld [vmem:[%s214 + $0x1e8] sm:$0xff]
      %v297 = vld [vmem:[%s214 + $0x1f0] sm:$0xff]
      %v298 = vld [vmem:[%s214 + $0x1f8] sm:$0xff]
      %v299 = vld [vmem:[%s221] sm:$0xf]
      %v300 = vld [vmem:[%s221 + $0x4] sm:$0xf]
      %v301 = vld [vmem:[%s221 + $0x8] sm:$0xf]
      %v302 = vld [vmem:[%s221 + $0xc] sm:$0xf]
      %v303 = vld [vmem:[%s221 + $0x10] sm:$0xf]
      %v304 = vld [vmem:[%s221 + $0x14] sm:$0xf]
      %v305 = vld [vmem:[%s221 + $0x18] sm:$0xf]
      %v306 = vld [vmem:[%s221 + $0x1c] sm:$0xf]
      %v307 = vld [vmem:[%s221 + $0x20] sm:$0xf]
      %v308 = vld [vmem:[%s221 + $0x24] sm:$0xf]
      %v309 = vld [vmem:[%s221 + $0x28] sm:$0xf]
      %v310 = vld [vmem:[%s221 + $0x2c] sm:$0xf]
      %v311 = vld [vmem:[%s221 + $0x30] sm:$0xf]
      %v312 = vld [vmem:[%s221 + $0x34] sm:$0xf]
      %v313 = vld [vmem:[%s221 + $0x38] sm:$0xf]
      %v314 = vld [vmem:[%s221 + $0x3c] sm:$0xf]
      %v315 = vld [vmem:[%s221 + $0x40] sm:$0xf]
      %v316 = vld [vmem:[%s221 + $0x44] sm:$0xf]
      %v317 = vld [vmem:[%s226] sm:$0x1]
      %v319 = vperm.slane %v317, 0
      %v385 = vunpack.c.l.b16 %v235
      %v386 = vunpack.c.h.b16 %v235
      %v387 = vunpack.c.l.b16 %v236
      %v388 = vunpack.c.h.b16 %v236
      %v389 = vunpack.c.l.b16 %v237
      %v390 = vunpack.c.h.b16 %v237
      %v391 = vunpack.c.l.b16 %v238
      %v392 = vunpack.c.h.b16 %v238
      %v393 = vunpack.c.l.b16 %v239
      %v394 = vunpack.c.h.b16 %v239
      %v395 = vunpack.c.l.b16 %v240
      %v396 = vunpack.c.h.b16 %v240
      %v397 = vunpack.c.l.b16 %v241
      %v398 = vunpack.c.h.b16 %v241
      %v399 = vunpack.c.l.b16 %v242
      %v400 = vunpack.c.h.b16 %v242
      %v401 = vunpack.c.l.b16 %v243
      %v402 = vunpack.c.h.b16 %v243
      %v403 = vunpack.c.l.b16 %v244
      %v404 = vunpack.c.h.b16 %v244
      %v405 = vunpack.c.l.b16 %v245
      %v406 = vunpack.c.h.b16 %v245
      %v407 = vunpack.c.l.b16 %v246
      %v408 = vunpack.c.h.b16 %v246
      %v409 = vunpack.c.l.b16 %v247
      %v410 = vunpack.c.h.b16 %v247
      %v411 = vunpack.c.l.b16 %v248
      %v412 = vunpack.c.h.b16 %v248
      %v413 = vunpack.c.l.b16 %v249
      %v414 = vunpack.c.h.b16 %v249
      %v415 = vunpack.c.l.b16 %v250
      %v416 = vunpack.c.h.b16 %v250
      %v417 = vunpack.c.l.b16 %v251
      %v418 = vunpack.c.h.b16 %v251
      %v419 = vunpack.c.l.b16 %v252
      %v420 = vunpack.c.h.b16 %v252
      %v421 = vunpack.c.l.b16 %v253
      %v422 = vunpack.c.h.b16 %v253
      %v423 = vunpack.c.l.b16 %v254
      %v424 = vunpack.c.h.b16 %v254
      %v425 = vunpack.c.l.b16 %v255
      %v426 = vunpack.c.h.b16 %v255
      %v427 = vunpack.c.l.b16 %v256
      %v428 = vunpack.c.h.b16 %v256
      %v429 = vunpack.c.l.b16 %v257
      %v430 = vunpack.c.h.b16 %v257
      %v431 = vunpack.c.l.b16 %v258
      %v432 = vunpack.c.h.b16 %v258
      %v433 = vunpack.c.l.b16 %v259
      %v434 = vunpack.c.h.b16 %v259
      %v435 = vunpack.c.l.b16 %v260
      %v436 = vunpack.c.h.b16 %v260
      %v437 = vunpack.c.l.b16 %v261
      %v438 = vunpack.c.h.b16 %v261
      %v439 = vunpack.c.l.b16 %v262
      %v440 = vunpack.c.h.b16 %v262
      %v441 = vunpack.c.l.b16 %v263
      %v442 = vunpack.c.h.b16 %v263
      %v443 = vunpack.c.l.b16 %v264
      %v444 = vunpack.c.h.b16 %v264
      %v445 = vunpack.c.l.b16 %v265
      %v446 = vunpack.c.h.b16 %v265
      %v447 = vunpack.c.l.b16 %v266
      %v448 = vunpack.c.h.b16 %v266
      %v449 = vunpack.c.l.b16 %v267
      %v450 = vunpack.c.h.b16 %v267
      %v451 = vunpack.c.l.b16 %v268
      %v452 = vunpack.c.h.b16 %v268
      %v453 = vunpack.c.l.b16 %v269
      %v454 = vunpack.c.h.b16 %v269
      %v455 = vunpack.c.l.b16 %v270
      %v456 = vunpack.c.h.b16 %v270
      %v457 = vunpack.c.l.b16 %v271
      %v458 = vunpack.c.h.b16 %v271
      %v459 = vunpack.c.l.b16 %v272
      %v460 = vunpack.c.h.b16 %v272
      %v461 = vunpack.c.l.b16 %v273
      %v462 = vunpack.c.h.b16 %v273
      %v463 = vunpack.c.l.b16 %v274
      %v464 = vunpack.c.h.b16 %v274
      %v465 = vunpack.c.l.b16 %v275
      %v466 = vunpack.c.h.b16 %v275
      %v467 = vunpack.c.l.b16 %v276
      %v468 = vunpack.c.h.b16 %v276
      %v469 = vunpack.c.l.b16 %v277
      %v470 = vunpack.c.h.b16 %v277
      %v471 = vunpack.c.l.b16 %v278
      %v472 = vunpack.c.h.b16 %v278
      %v473 = vunpack.c.l.b16 %v279
      %v474 = vunpack.c.h.b16 %v279
      %v475 = vunpack.c.l.b16 %v280
      %v476 = vunpack.c.h.b16 %v280
      %v477 = vunpack.c.l.b16 %v281
      %v478 = vunpack.c.h.b16 %v281
      %v479 = vunpack.c.l.b16 %v282
      %v480 = vunpack.c.h.b16 %v282
      %v481 = vunpack.c.l.b16 %v283
      %v482 = vunpack.c.h.b16 %v283
      %v483 = vunpack.c.l.b16 %v284
      %v484 = vunpack.c.h.b16 %v284
      %v485 = vunpack.c.l.b16 %v285
      %v486 = vunpack.c.h.b16 %v285
      %v487 = vunpack.c.l.b16 %v286
      %v488 = vunpack.c.h.b16 %v286
      %v489 = vunpack.c.l.b16 %v287
      %v490 = vunpack.c.h.b16 %v287
      %v491 = vunpack.c.l.b16 %v288
      %v492 = vunpack.c.h.b16 %v288
      %v493 = vunpack.c.l.b16 %v289
      %v494 = vunpack.c.h.b16 %v289
      %v495 = vunpack.c.l.b16 %v290
      %v496 = vunpack.c.h.b16 %v290
      %v497 = vunpack.c.l.b16 %v291
      %v498 = vunpack.c.h.b16 %v291
      %v499 = vunpack.c.l.b16 %v292
      %v500 = vunpack.c.h.b16 %v292
      %v501 = vunpack.c.l.b16 %v293
      %v502 = vunpack.c.h.b16 %v293
      %v503 = vunpack.c.l.b16 %v294
      %v504 = vunpack.c.h.b16 %v294
      %v505 = vunpack.c.l.b16 %v295
      %v506 = vunpack.c.h.b16 %v295
      %v507 = vunpack.c.l.b16 %v296
      %v508 = vunpack.c.h.b16 %v296
      %v509 = vunpack.c.l.b16 %v297
      %v510 = vunpack.c.h.b16 %v297
      %v511 = vunpack.c.l.b16 %v298
      %v512 = vunpack.c.h.b16 %v298
      %v513 = vpack.c.b16 %v387, %v385
      %v514 = vpack.c.b16 %v388, %v386
      %v515 = vpack.c.b16 %v391, %v389
      %v516 = vpack.c.b16 %v392, %v390
      %v517 = vpack.c.b16 %v395, %v393
      %v518 = vpack.c.b16 %v396, %v394
      %v519 = vpack.c.b16 %v399, %v397
      %v520 = vpack.c.b16 %v400, %v398
      %v521 = vpack.c.b16 %v403, %v401
      %v522 = vpack.c.b16 %v404, %v402
      %v523 = vpack.c.b16 %v407, %v405
      %v524 = vpack.c.b16 %v408, %v406
      %v525 = vpack.c.b16 %v411, %v409
      %v526 = vpack.c.b16 %v412, %v410
      %v527 = vpack.c.b16 %v415, %v413
      %v528 = vpack.c.b16 %v416, %v414
      %v529 = vpack.c.b16 %v419, %v417
      %v530 = vpack.c.b16 %v420, %v418
      %v531 = vpack.c.b16 %v423, %v421
      %v532 = vpack.c.b16 %v424, %v422
      %v533 = vpack.c.b16 %v427, %v425
      %v534 = vpack.c.b16 %v428, %v426
      %v535 = vpack.c.b16 %v431, %v429
      %v536 = vpack.c.b16 %v432, %v430
      %v537 = vpack.c.b16 %v435, %v433
      %v538 = vpack.c.b16 %v436, %v434
      %v539 = vpack.c.b16 %v439, %v437
      %v540 = vpack.c.b16 %v440, %v438
      %v541 = vpack.c.b16 %v443, %v441
      %v542 = vpack.c.b16 %v444, %v442
      %v543 = vpack.c.b16 %v447, %v445
      %v544 = vpack.c.b16 %v448, %v446
      %v545 = vpack.c.b16 %v451, %v449
      %v546 = vpack.c.b16 %v452, %v450
      %v547 = vpack.c.b16 %v455, %v453
      %v548 = vpack.c.b16 %v456, %v454
      %v549 = vpack.c.b16 %v459, %v457
      %v550 = vpack.c.b16 %v460, %v458
      %v551 = vpack.c.b16 %v463, %v461
      %v552 = vpack.c.b16 %v464, %v462
      %v553 = vpack.c.b16 %v467, %v465
      %v554 = vpack.c.b16 %v468, %v466
      %v555 = vpack.c.b16 %v471, %v469
      %v556 = vpack.c.b16 %v472, %v470
      %v557 = vpack.c.b16 %v475, %v473
      %v558 = vpack.c.b16 %v476, %v474
      %v559 = vpack.c.b16 %v479, %v477
      %v560 = vpack.c.b16 %v480, %v478
      %v561 = vpack.c.b16 %v483, %v481
      %v562 = vpack.c.b16 %v484, %v482
      %v563 = vpack.c.b16 %v487, %v485
      %v564 = vpack.c.b16 %v488, %v486
      %v565 = vpack.c.b16 %v491, %v489
      %v566 = vpack.c.b16 %v492, %v490
      %v567 = vpack.c.b16 %v495, %v493
      %v568 = vpack.c.b16 %v496, %v494
      %v569 = vpack.c.b16 %v499, %v497
      %v570 = vpack.c.b16 %v500, %v498
      %v571 = vpack.c.b16 %v503, %v501
      %v572 = vpack.c.b16 %v504, %v502
      %v573 = vpack.c.b16 %v507, %v505
      %v574 = vpack.c.b16 %v508, %v506
      %v575 = vpack.c.b16 %v511, %v509
      %v576 = vpack.c.b16 %v512, %v510
      %v627 = vunpack.c.l.b16 %v299
      %v628 = vunpack.c.l.b16 %v300
      %v629 = vunpack.c.l.b16 %v301
      %v630 = vunpack.c.l.b16 %v302
      %v631 = vunpack.c.l.b16 %v303
      %v632 = vunpack.c.l.b16 %v304
      %v633 = vunpack.c.l.b16 %v305
      %v634 = vunpack.c.l.b16 %v306
      %v635 = vunpack.c.l.b16 %v307
      %v636 = vunpack.c.l.b16 %v308
      %v637 = vunpack.c.l.b16 %v309
      %v638 = vunpack.c.l.b16 %v310
      %v639 = vunpack.c.l.b16 %v311
      %v640 = vunpack.c.l.b16 %v312
      %v641 = vunpack.c.l.b16 %v313
      %v642 = vunpack.c.l.b16 %v314
      %v643 = vunpack.c.l.b16 %v315
      %v644 = vunpack.c.l.b16 %v316
      %v645 = vpack.c.b16 %v628, %v627
      %v646 = vpack.c.b16 %v630, %v629
      %v647 = vpack.c.b16 %v632, %v631
      %v648 = vpack.c.b16 %v634, %v633
      %v649 = vpack.c.b16 %v636, %v635
      %v650 = vpack.c.b16 %v638, %v637
      %v651 = vpack.c.b16 %v640, %v639
      %v652 = vpack.c.b16 %v642, %v641
      %v653 = vpack.c.b16 %v644, %v643
      %vm663 = vcmask 130048
      %v665 = vsel %vm663, %v514, 0
      %v668 = vsel %vm663, %v516, 0
      %v671 = vsel %vm663, %v518, 0
      %v674 = vsel %vm663, %v520, 0
      %v677 = vsel %vm663, %v522, 0
      %v680 = vsel %vm663, %v524, 0
      %v683 = vsel %vm663, %v526, 0
      %v686 = vsel %vm663, %v528, 0
      %v689 = vsel %vm663, %v530, 0
      %v692 = vsel %vm663, %v532, 0
      %v695 = vsel %vm663, %v534, 0
      %v698 = vsel %vm663, %v536, 0
      %v701 = vsel %vm663, %v538, 0
      %v704 = vsel %vm663, %v540, 0
      %v707 = vsel %vm663, %v542, 0
      %v710 = vsel %vm663, %v544, 0
      %v713 = vsel %vm663, %v546, 0
      %v716 = vsel %vm663, %v548, 0
      %v719 = vsel %vm663, %v550, 0
      %v722 = vsel %vm663, %v552, 0
      %v725 = vsel %vm663, %v554, 0
      %v728 = vsel %vm663, %v556, 0
      %v731 = vsel %vm663, %v558, 0
      %v734 = vsel %vm663, %v560, 0
      %v737 = vsel %vm663, %v562, 0
      %v740 = vsel %vm663, %v564, 0
      %v743 = vsel %vm663, %v566, 0
      %v746 = vsel %vm663, %v568, 0
      %v749 = vsel %vm663, %v570, 0
      %v752 = vsel %vm663, %v572, 0
      %v755 = vsel %vm663, %v574, 0
      %v758 = vsel %vm663, %v576, 0
      %760 = vmatpush.bf16.msra.mxu0 %v652
      %761 = vmatpush.bf16.msra.mxu0 %v651
      %762 = vmatpush.bf16.msra.mxu0 %v650
      %763 = vmatpush.bf16.msra.mxu0 %v649
      %764 = vmatpush.bf16.msra.mxu0 %v648
      %765 = vmatpush.bf16.msra.mxu0 %v647
      %766 = vmatpush.bf16.msra.mxu0 %v646
      %767 = vmatpush.bf16.msra.mxu0 %v645
      %768 = vmatmul.bf16.gmra.mxu0 %v513
      %v769 = vpop.f32.mrf.mxu0
      %v770 = vadd.f32 %v319, %v769
      %v771 = vpop.f32.mrf.mxu0
      %v772 = vadd.f32 %v319, %v771
      %773 = vmatmul.bf16.gmra.mxu0 %v515
      %v774 = vpop.f32.mrf.mxu0
      %v775 = vadd.f32 %v319, %v774
      %v776 = vpop.f32.mrf.mxu0
      %v777 = vadd.f32 %v319, %v776
      %778 = vmatmul.bf16.gmra.mxu0 %v517
      %v779 = vpop.f32.mrf.mxu0
      %v780 = vadd.f32 %v319, %v779
      %v781 = vpop.f32.mrf.mxu0
      %v782 = vadd.f32 %v319, %v781
      %783 = vmatmul.bf16.gmra.mxu0 %v519
      %v784 = vpop.f32.mrf.mxu0
      %v785 = vadd.f32 %v319, %v784
      %v786 = vpop.f32.mrf.mxu0
      %v787 = vadd.f32 %v319, %v786
      %788 = vmatmul.bf16.gmra.mxu0 %v521
      %v789 = vpop.f32.mrf.mxu0
      %v790 = vadd.f32 %v319, %v789
      %v791 = vpop.f32.mrf.mxu0
      %v792 = vadd.f32 %v319, %v791
      %793 = vmatmul.bf16.gmra.mxu0 %v523
      %v794 = vpop.f32.mrf.mxu0
      %v795 = vadd.f32 %v319, %v794
      %v796 = vpop.f32.mrf.mxu0
      %v797 = vadd.f32 %v319, %v796
      %798 = vmatmul.bf16.gmra.mxu0 %v525
      %v799 = vpop.f32.mrf.mxu0
      %v800 = vadd.f32 %v319, %v799
      %v801 = vpop.f32.mrf.mxu0
      %v802 = vadd.f32 %v319, %v801
      %803 = vmatmul.bf16.gmra.mxu0 %v527
      %v804 = vpop.f32.mrf.mxu0
      %v805 = vadd.f32 %v319, %v804
      %v806 = vpop.f32.mrf.mxu0
      %v807 = vadd.f32 %v319, %v806
      %808 = vmatmul.bf16.gmra.mxu0 %v529
      %v809 = vpop.f32.mrf.mxu0
      %v810 = vadd.f32 %v319, %v809
      %v811 = vpop.f32.mrf.mxu0
      %v812 = vadd.f32 %v319, %v811
      %813 = vmatmul.bf16.gmra.mxu0 %v531
      %v814 = vpop.f32.mrf.mxu0
      %v815 = vadd.f32 %v319, %v814
      %v816 = vpop.f32.mrf.mxu0
      %v817 = vadd.f32 %v319, %v816
      %818 = vmatmul.bf16.gmra.mxu0 %v533
      %v819 = vpop.f32.mrf.mxu0
      %v820 = vadd.f32 %v319, %v819
      %v821 = vpop.f32.mrf.mxu0
      %v822 = vadd.f32 %v319, %v821
      %823 = vmatmul.bf16.gmra.mxu0 %v535
      %v824 = vpop.f32.mrf.mxu0
      %v825 = vadd.f32 %v319, %v824
      %v826 = vpop.f32.mrf.mxu0
      %v827 = vadd.f32 %v319, %v826
      %828 = vmatmul.bf16.gmra.mxu0 %v537
      %v829 = vpop.f32.mrf.mxu0
      %v830 = vadd.f32 %v319, %v829
      %v831 = vpop.f32.mrf.mxu0
      %v832 = vadd.f32 %v319, %v831
      %833 = vmatmul.bf16.gmra.mxu0 %v539
      %v834 = vpop.f32.mrf.mxu0
      %v835 = vadd.f32 %v319, %v834
      %v836 = vpop.f32.mrf.mxu0
      %v837 = vadd.f32 %v319, %v836
      %838 = vmatmul.bf16.gmra.mxu0 %v541
      %v839 = vpop.f32.mrf.mxu0
      %v840 = vadd.f32 %v319, %v839
      %v841 = vpop.f32.mrf.mxu0
      %v842 = vadd.f32 %v319, %v841
      %843 = vmatmul.bf16.gmra.mxu0 %v543
      %v844 = vpop.f32.mrf.mxu0
      %v845 = vadd.f32 %v319, %v844
      %v846 = vpop.f32.mrf.mxu0
      %v847 = vadd.f32 %v319, %v846
      %848 = vmatmul.bf16.gmra.mxu0 %v545
      %v849 = vpop.f32.mrf.mxu0
      %v850 = vadd.f32 %v319, %v849
      %v851 = vpop.f32.mrf.mxu0
      %v852 = vadd.f32 %v319, %v851
      %853 = vmatmul.bf16.gmra.mxu0 %v547
      %v854 = vpop.f32.mrf.mxu0
      %v855 = vadd.f32 %v319, %v854
      %v856 = vpop.f32.mrf.mxu0
      %v857 = vadd.f32 %v319, %v856
      %858 = vmatmul.bf16.gmra.mxu0 %v549
      %v859 = vpop.f32.mrf.mxu0
      %v860 = vadd.f32 %v319, %v859
      %v861 = vpop.f32.mrf.mxu0
      %v862 = vadd.f32 %v319, %v861
      %863 = vmatmul.bf16.gmra.mxu0 %v551
      %v864 = vpop.f32.mrf.mxu0
      %v865 = vadd.f32 %v319, %v864
      %v866 = vpop.f32.mrf.mxu0
      %v867 = vadd.f32 %v319, %v866
      %868 = vmatmul.bf16.gmra.mxu0 %v553
      %v869 = vpop.f32.mrf.mxu0
      %v870 = vadd.f32 %v319, %v869
      %v871 = vpop.f32.mrf.mxu0
      %v872 = vadd.f32 %v319, %v871
      %873 = vmatmul.bf16.gmra.mxu0 %v555
      %v874 = vpop.f32.mrf.mxu0
      %v875 = vadd.f32 %v319, %v874
      %v876 = vpop.f32.mrf.mxu0
      %v877 = vadd.f32 %v319, %v876
      %878 = vmatmul.bf16.gmra.mxu0 %v557
      %v879 = vpop.f32.mrf.mxu0
      %v880 = vadd.f32 %v319, %v879
      %v881 = vpop.f32.mrf.mxu0
      %v882 = vadd.f32 %v319, %v881
      %883 = vmatmul.bf16.gmra.mxu0 %v559
      %v884 = vpop.f32.mrf.mxu0
      %v885 = vadd.f32 %v319, %v884
      %v886 = vpop.f32.mrf.mxu0
      %v887 = vadd.f32 %v319, %v886
      %888 = vmatmul.bf16.gmra.mxu0 %v561
      %v889 = vpop.f32.mrf.mxu0
      %v890 = vadd.f32 %v319, %v889
      %v891 = vpop.f32.mrf.mxu0
      %v892 = vadd.f32 %v319, %v891
      %893 = vmatmul.bf16.gmra.mxu0 %v563
      %v894 = vpop.f32.mrf.mxu0
      %v895 = vadd.f32 %v319, %v894
      %v896 = vpop.f32.mrf.mxu0
      %v897 = vadd.f32 %v319, %v896
      %898 = vmatmul.bf16.gmra.mxu0 %v565
      %v899 = vpop.f32.mrf.mxu0
      %v900 = vadd.f32 %v319, %v899
      %v901 = vpop.f32.mrf.mxu0
      %v902 = vadd.f32 %v319, %v901
      %903 = vmatmul.bf16.gmra.mxu0 %v567
      %v904 = vpop.f32.mrf.mxu0
      %v905 = vadd.f32 %v319, %v904
      %v906 = vpop.f32.mrf.mxu0
      %v907 = vadd.f32 %v319, %v906
      %908 = vmatmul.bf16.gmra.mxu0 %v569
      %v909 = vpop.f32.mrf.mxu0
      %v910 = vadd.f32 %v319, %v909
      %v911 = vpop.f32.mrf.mxu0
      %v912 = vadd.f32 %v319, %v911
      %913 = vmatmul.bf16.gmra.mxu0 %v571
      %v914 = vpop.f32.mrf.mxu0
      %v915 = vadd.f32 %v319, %v914
      %v916 = vpop.f32.mrf.mxu0
      %v917 = vadd.f32 %v319, %v916
      %918 = vmatmul.bf16.gmra.mxu0 %v573
      %v919 = vpop.f32.mrf.mxu0
      %v920 = vadd.f32 %v319, %v919
      %v921 = vpop.f32.mrf.mxu0
      %v922 = vadd.f32 %v319, %v921
      %923 = vmatmul.bf16.gmra.mxu0 %v575
      %v924 = vpop.f32.mrf.mxu0
      %v925 = vadd.f32 %v319, %v924
      %v926 = vpop.f32.mrf.mxu0
      %v927 = vadd.f32 %v319, %v926
      %928 = vdwg.mxu0
      %929 = vmatpush.bf16.msra.mxu0 0
      %930 = vmatpush.bf16.msra.mxu0 0
      %931 = vmatpush.bf16.msra.mxu0 0
      %932 = vmatpush.bf16.msra.mxu0 0
      %933 = vmatpush.bf16.msra.mxu0 0
      %934 = vmatpush.bf16.msra.mxu0 0
      %935 = vmatpush.bf16.msra.mxu0 0
      %936 = vmatpush.bf16.msra.mxu0 %v653
      %937 = vmatmul.bf16.gmra.mxu0 %v665
      %v938 = vpop.f32.mrf.mxu0
      %v939 = vadd.f32 %v770, %v938
      %v940 = vpop.f32.mrf.mxu0
      %v941 = vadd.f32 %v772, %v940
      %942 = vmatmul.bf16.gmra.mxu0 %v668
      %v943 = vpop.f32.mrf.mxu0
      %v944 = vadd.f32 %v775, %v943
      %v945 = vpop.f32.mrf.mxu0
      %v946 = vadd.f32 %v777, %v945
      %947 = vmatmul.bf16.gmra.mxu0 %v671
      %v948 = vpop.f32.mrf.mxu0
      %v949 = vadd.f32 %v780, %v948
      %v950 = vpop.f32.mrf.mxu0
      %v951 = vadd.f32 %v782, %v950
      %952 = vmatmul.bf16.gmra.mxu0 %v674
      %v953 = vpop.f32.mrf.mxu0
      %v954 = vadd.f32 %v785, %v953
      %v955 = vpop.f32.mrf.mxu0
      %v956 = vadd.f32 %v787, %v955
      %957 = vmatmul.bf16.gmra.mxu0 %v677
      %v958 = vpop.f32.mrf.mxu0
      %v959 = vadd.f32 %v790, %v958
      %v960 = vpop.f32.mrf.mxu0
      %v961 = vadd.f32 %v792, %v960
      %962 = vmatmul.bf16.gmra.mxu0 %v680
      %v963 = vpop.f32.mrf.mxu0
      %v964 = vadd.f32 %v795, %v963
      %v965 = vpop.f32.mrf.mxu0
      %v966 = vadd.f32 %v797, %v965
      %967 = vmatmul.bf16.gmra.mxu0 %v683
      %v968 = vpop.f32.mrf.mxu0
      %v969 = vadd.f32 %v800, %v968
      %v970 = vpop.f32.mrf.mxu0
      %v971 = vadd.f32 %v802, %v970
      %972 = vmatmul.bf16.gmra.mxu0 %v686
      %v973 = vpop.f32.mrf.mxu0
      %v974 = vadd.f32 %v805, %v973
      %v975 = vpop.f32.mrf.mxu0
      %v976 = vadd.f32 %v807, %v975
      %977 = vmatmul.bf16.gmra.mxu0 %v689
      %v978 = vpop.f32.mrf.mxu0
      %v979 = vadd.f32 %v810, %v978
      %v980 = vpop.f32.mrf.mxu0
      %v981 = vadd.f32 %v812, %v980
      %982 = vmatmul.bf16.gmra.mxu0 %v692
      %v983 = vpop.f32.mrf.mxu0
      %v984 = vadd.f32 %v815, %v983
      %v985 = vpop.f32.mrf.mxu0
      %v986 = vadd.f32 %v817, %v985
      %987 = vmatmul.bf16.gmra.mxu0 %v695
      %v988 = vpop.f32.mrf.mxu0
      %v989 = vadd.f32 %v820, %v988
      %v990 = vpop.f32.mrf.mxu0
      %v991 = vadd.f32 %v822, %v990
      %992 = vmatmul.bf16.gmra.mxu0 %v698
      %v993 = vpop.f32.mrf.mxu0
      %v994 = vadd.f32 %v825, %v993
      %v995 = vpop.f32.mrf.mxu0
      %v996 = vadd.f32 %v827, %v995
      %997 = vmatmul.bf16.gmra.mxu0 %v701
      %v998 = vpop.f32.mrf.mxu0
      %v999 = vadd.f32 %v830, %v998
      %v1000 = vpop.f32.mrf.mxu0
      %v1001 = vadd.f32 %v832, %v1000
      %1002 = vmatmul.bf16.gmra.mxu0 %v704
      %v1003 = vpop.f32.mrf.mxu0
      %v1004 = vadd.f32 %v835, %v1003
      %v1005 = vpop.f32.mrf.mxu0
      %v1006 = vadd.f32 %v837, %v1005
      %1007 = vmatmul.bf16.gmra.mxu0 %v707
      %v1008 = vpop.f32.mrf.mxu0
      %v1009 = vadd.f32 %v840, %v1008
      %v1010 = vpop.f32.mrf.mxu0
      %v1011 = vadd.f32 %v842, %v1010
      %1012 = vmatmul.bf16.gmra.mxu0 %v710
      %v1013 = vpop.f32.mrf.mxu0
      %v1014 = vadd.f32 %v845, %v1013
      %v1015 = vpop.f32.mrf.mxu0
      %v1016 = vadd.f32 %v847, %v1015
      %1017 = vmatmul.bf16.gmra.mxu0 %v713
      %v1018 = vpop.f32.mrf.mxu0
      %v1019 = vadd.f32 %v850, %v1018
      %v1020 = vpop.f32.mrf.mxu0
      %v1021 = vadd.f32 %v852, %v1020
      %1022 = vmatmul.bf16.gmra.mxu0 %v716
      %v1023 = vpop.f32.mrf.mxu0
      %v1024 = vadd.f32 %v855, %v1023
      %v1025 = vpop.f32.mrf.mxu0
      %v1026 = vadd.f32 %v857, %v1025
      %1027 = vmatmul.bf16.gmra.mxu0 %v719
      %v1028 = vpop.f32.mrf.mxu0
      %v1029 = vadd.f32 %v860, %v1028
      %v1030 = vpop.f32.mrf.mxu0
      %v1031 = vadd.f32 %v862, %v1030
      %1032 = vmatmul.bf16.gmra.mxu0 %v722
      %v1033 = vpop.f32.mrf.mxu0
      %v1034 = vadd.f32 %v865, %v1033
      %v1035 = vpop.f32.mrf.mxu0
      %v1036 = vadd.f32 %v867, %v1035
      %1037 = vmatmul.bf16.gmra.mxu0 %v725
      %v1038 = vpop.f32.mrf.mxu0
      %v1039 = vadd.f32 %v870, %v1038
      %v1040 = vpop.f32.mrf.mxu0
      %v1041 = vadd.f32 %v872, %v1040
      %1042 = vmatmul.bf16.gmra.mxu0 %v728
      %v1043 = vpop.f32.mrf.mxu0
      %v1044 = vadd.f32 %v875, %v1043
      %v1045 = vpop.f32.mrf.mxu0
      %v1046 = vadd.f32 %v877, %v1045
      %1047 = vmatmul.bf16.gmra.mxu0 %v731
      %v1048 = vpop.f32.mrf.mxu0
      %v1049 = vadd.f32 %v880, %v1048
      %v1050 = vpop.f32.mrf.mxu0
      %v1051 = vadd.f32 %v882, %v1050
      %1052 = vmatmul.bf16.gmra.mxu0 %v734
      %v1053 = vpop.f32.mrf.mxu0
      %v1054 = vadd.f32 %v885, %v1053
      %v1055 = vpop.f32.mrf.mxu0
      %v1056 = vadd.f32 %v887, %v1055
      %1057 = vmatmul.bf16.gmra.mxu0 %v737
      %v1058 = vpop.f32.mrf.mxu0
      %v1059 = vadd.f32 %v890, %v1058
      %v1060 = vpop.f32.mrf.mxu0
      %v1061 = vadd.f32 %v892, %v1060
      %1062 = vmatmul.bf16.gmra.mxu0 %v740
      %v1063 = vpop.f32.mrf.mxu0
      %v1064 = vadd.f32 %v895, %v1063
      %v1065 = vpop.f32.mrf.mxu0
      %v1066 = vadd.f32 %v897, %v1065
      %1067 = vmatmul.bf16.gmra.mxu0 %v743
      %v1068 = vpop.f32.mrf.mxu0
      %v1069 = vadd.f32 %v900, %v1068
      %v1070 = vpop.f32.mrf.mxu0
      %v1071 = vadd.f32 %v902, %v1070
      %1072 = vmatmul.bf16.gmra.mxu0 %v746
      %v1073 = vpop.f32.mrf.mxu0
      %v1074 = vadd.f32 %v905, %v1073
      %v1075 = vpop.f32.mrf.mxu0
      %v1076 = vadd.f32 %v907, %v1075
      %1077 = vmatmul.bf16.gmra.mxu0 %v749
      %v1078 = vpop.f32.mrf.mxu0
      %v1079 = vadd.f32 %v910, %v1078
      %v1080 = vpop.f32.mrf.mxu0
      %v1081 = vadd.f32 %v912, %v1080
      %1082 = vmatmul.bf16.gmra.mxu0 %v752
      %v1083 = vpop.f32.mrf.mxu0
      %v1084 = vadd.f32 %v915, %v1083
      %v1085 = vpop.f32.mrf.mxu0
      %v1086 = vadd.f32 %v917, %v1085
      %1087 = vmatmul.bf16.gmra.mxu0 %v755
      %v1088 = vpop.f32.mrf.mxu0
      %v1089 = vadd.f32 %v920, %v1088
      %v1090 = vpop.f32.mrf.mxu0
      %v1091 = vadd.f32 %v922, %v1090
      %1092 = vmatmul.bf16.gmra.mxu0 %v758
      %v1093 = vpop.f32.mrf.mxu0
      %v1094 = vadd.f32 %v925, %v1093
      %v1095 = vpop.f32.mrf.mxu0
      %v1096 = vadd.f32 %v927, %v1095
      %1097 = vdwg.mxu0
      %v1098 = vpack.c.bf16 %v939, %v939
      %v1099 = vpack.c.bf16 %v941, %v941
      %v1100 = vpack.c.bf16 %v944, %v944
      %v1101 = vpack.c.bf16 %v946, %v946
      %v1102 = vpack.c.bf16 %v949, %v949
      %v1103 = vpack.c.bf16 %v951, %v951
      %v1104 = vpack.c.bf16 %v954, %v954
      %v1105 = vpack.c.bf16 %v956, %v956
      %v1106 = vpack.c.bf16 %v959, %v959
      %v1107 = vpack.c.bf16 %v961, %v961
      %v1108 = vpack.c.bf16 %v964, %v964
      %v1109 = vpack.c.bf16 %v966, %v966
      %v1110 = vpack.c.bf16 %v969, %v969
      %v1111 = vpack.c.bf16 %v971, %v971
      %v1112 = vpack.c.bf16 %v974, %v974
      %v1113 = vpack.c.bf16 %v976, %v976
      %v1114 = vpack.c.bf16 %v979, %v979
      %v1115 = vpack.c.bf16 %v981, %v981
      %v1116 = vpack.c.bf16 %v984, %v984
      %v1117 = vpack.c.bf16 %v986, %v986
      %v1118 = vpack.c.bf16 %v989, %v989
      %v1119 = vpack.c.bf16 %v991, %v991
      %v1120 = vpack.c.bf16 %v994, %v994
      %v1121 = vpack.c.bf16 %v996, %v996
      %v1122 = vpack.c.bf16 %v999, %v999
      %v1123 = vpack.c.bf16 %v1001, %v1001
      %v1124 = vpack.c.bf16 %v1004, %v1004
      %v1125 = vpack.c.bf16 %v1006, %v1006
      %v1126 = vpack.c.bf16 %v1009, %v1009
      %v1127 = vpack.c.bf16 %v1011, %v1011
      %v1128 = vpack.c.bf16 %v1014, %v1014
      %v1129 = vpack.c.bf16 %v1016, %v1016
      %v1130 = vpack.c.bf16 %v1019, %v1019
      %v1131 = vpack.c.bf16 %v1021, %v1021
      %v1132 = vpack.c.bf16 %v1024, %v1024
      %v1133 = vpack.c.bf16 %v1026, %v1026
      %v1134 = vpack.c.bf16 %v1029, %v1029
      %v1135 = vpack.c.bf16 %v1031, %v1031
      %v1136 = vpack.c.bf16 %v1034, %v1034
      %v1137 = vpack.c.bf16 %v1036, %v1036
      %v1138 = vpack.c.bf16 %v1039, %v1039
      %v1139 = vpack.c.bf16 %v1041, %v1041
      %v1140 = vpack.c.bf16 %v1044, %v1044
      %v1141 = vpack.c.bf16 %v1046, %v1046
      %v1142 = vpack.c.bf16 %v1049, %v1049
      %v1143 = vpack.c.bf16 %v1051, %v1051
      %v1144 = vpack.c.bf16 %v1054, %v1054
      %v1145 = vpack.c.bf16 %v1056, %v1056
      %v1146 = vpack.c.bf16 %v1059, %v1059
      %v1147 = vpack.c.bf16 %v1061, %v1061
      %v1148 = vpack.c.bf16 %v1064, %v1064
      %v1149 = vpack.c.bf16 %v1066, %v1066
      %v1150 = vpack.c.bf16 %v1069, %v1069
      %v1151 = vpack.c.bf16 %v1071, %v1071
      %v1152 = vpack.c.bf16 %v1074, %v1074
      %v1153 = vpack.c.bf16 %v1076, %v1076
      %v1154 = vpack.c.bf16 %v1079, %v1079
      %v1155 = vpack.c.bf16 %v1081, %v1081
      %v1156 = vpack.c.bf16 %v1084, %v1084
      %v1157 = vpack.c.bf16 %v1086, %v1086
      %v1158 = vpack.c.bf16 %v1089, %v1089
      %v1159 = vpack.c.bf16 %v1091, %v1091
      %v1160 = vpack.c.bf16 %v1094, %v1094
      %v1161 = vpack.c.bf16 %v1096, %v1096
      %1162 = vst [vmem:[%s232] sm:$0xf] %v1098
      %1163 = vst [vmem:[%s232 + $0x4] sm:$0xf] %v1099
      %1164 = vst [vmem:[%s232 + $0x8] sm:$0xf] %v1100
      %1165 = vst [vmem:[%s232 + $0xc] sm:$0xf] %v1101
      %1166 = vst [vmem:[%s232 + $0x10] sm:$0xf] %v1102
      %1167 = vst [vmem:[%s232 + $0x14] sm:$0xf] %v1103
      %1168 = vst [vmem:[%s232 + $0x18] sm:$0xf] %v1104
      %1169 = vst [vmem:[%s232 + $0x1c] sm:$0xf] %v1105
      %1170 = vst [vmem:[%s232 + $0x20] sm:$0xf] %v1106
      %1171 = vst [vmem:[%s232 + $0x24] sm:$0xf] %v1107
      %1172 = vst [vmem:[%s232 + $0x28] sm:$0xf] %v1108
      %1173 = vst [vmem:[%s232 + $0x2c] sm:$0xf] %v1109
      %1174 = vst [vmem:[%s232 + $0x30] sm:$0xf] %v1110
      %1175 = vst [vmem:[%s232 + $0x34] sm:$0xf] %v1111
      %1176 = vst [vmem:[%s232 + $0x38] sm:$0xf] %v1112
      %1177 = vst [vmem:[%s232 + $0x3c] sm:$0xf] %v1113
      %1178 = vst [vmem:[%s232 + $0x40] sm:$0xf] %v1114
      %1179 = vst [vmem:[%s232 + $0x44] sm:$0xf] %v1115
      %1180 = vst [vmem:[%s232 + $0x48] sm:$0xf] %v1116
      %1181 = vst [vmem:[%s232 + $0x4c] sm:$0xf] %v1117
      %1182 = vst [vmem:[%s232 + $0x50] sm:$0xf] %v1118
      %1183 = vst [vmem:[%s232 + $0x54] sm:$0xf] %v1119
      %1184 = vst [vmem:[%s232 + $0x58] sm:$0xf] %v1120
      %1185 = vst [vmem:[%s232 + $0x5c] sm:$0xf] %v1121
      %1186 = vst [vmem:[%s232 + $0x60] sm:$0xf] %v1122
      %1187 = vst [vmem:[%s232 + $0x64] sm:$0xf] %v1123
      %1188 = vst [vmem:[%s232 + $0x68] sm:$0xf] %v1124
      %1189 = vst [vmem:[%s232 + $0x6c] sm:$0xf] %v1125
      %1190 = vst [vmem:[%s232 + $0x70] sm:$0xf] %v1126
      %1191 = vst [vmem:[%s232 + $0x74] sm:$0xf] %v1127
      %1192 = vst [vmem:[%s232 + $0x78] sm:$0xf] %v1128
      %1193 = vst [vmem:[%s232 + $0x7c] sm:$0xf] %v1129
      %1194 = vst [vmem:[%s232 + $0x80] sm:$0xf] %v1130
      %1195 = vst [vmem:[%s232 + $0x84] sm:$0xf] %v1131
      %1196 = vst [vmem:[%s232 + $0x88] sm:$0xf] %v1132
      %1197 = vst [vmem:[%s232 + $0x8c] sm:$0xf] %v1133
      %1198 = vst [vmem:[%s232 + $0x90] sm:$0xf] %v1134
      %1199 = vst [vmem:[%s232 + $0x94] sm:$0xf] %v1135
      %1200 = vst [vmem:[%s232 + $0x98] sm:$0xf] %v1136
      %1201 = vst [vmem:[%s232 + $0x9c] sm:$0xf] %v1137
      %1202 = vst [vmem:[%s232 + $0xa0] sm:$0xf] %v1138
      %1203 = vst [vmem:[%s232 + $0xa4] sm:$0xf] %v1139
      %1204 = vst [vmem:[%s232 + $0xa8] sm:$0xf] %v1140
      %1205 = vst [vmem:[%s232 + $0xac] sm:$0xf] %v1141
      %1206 = vst [vmem:[%s232 + $0xb0] sm:$0xf] %v1142
      %1207 = vst [vmem:[%s232 + $0xb4] sm:$0xf] %v1143
      %1208 = vst [vmem:[%s232 + $0xb8] sm:$0xf] %v1144
      %1209 = vst [vmem:[%s232 + $0xbc] sm:$0xf] %v1145
      %1210 = vst [vmem:[%s232 + $0xc0] sm:$0xf] %v1146
      %1211 = vst [vmem:[%s232 + $0xc4] sm:$0xf] %v1147
      %1212 = vst [vmem:[%s232 + $0xc8] sm:$0xf] %v1148
      %1213 = vst [vmem:[%s232 + $0xcc] sm:$0xf] %v1149
      %1214 = vst [vmem:[%s232 + $0xd0] sm:$0xf] %v1150
      %1215 = vst [vmem:[%s232 + $0xd4] sm:$0xf] %v1151
      %1216 = vst [vmem:[%s232 + $0xd8] sm:$0xf] %v1152
      %1217 = vst [vmem:[%s232 + $0xdc] sm:$0xf] %v1153
      %1218 = vst [vmem:[%s232 + $0xe0] sm:$0xf] %v1154
      %1219 = vst [vmem:[%s232 + $0xe4] sm:$0xf] %v1155
      %1220 = vst [vmem:[%s232 + $0xe8] sm:$0xf] %v1156
      %1221 = vst [vmem:[%s232 + $0xec] sm:$0xf] %v1157
      %1222 = vst [vmem:[%s232 + $0xf0] sm:$0xf] %v1158
      %1223 = vst [vmem:[%s232 + $0xf4] sm:$0xf] %v1159
      %1224 = vst [vmem:[%s232 + $0xf8] sm:$0xf] %v1160
      %1225 = vst [vmem:[%s232 + $0xfc] sm:$0xf] %v1161
      %s1226 = smul.u32 64, %s23
      %p1227 = scmp.lt.s32.totalorder %s1226, 191
      %s1228 = scalar_select %p1227, %s1226, 191
      %s1229 = smul.addr %s1228, 4
      %s1230 = scalar_lea.vmem %s4, %s1229
      // Predicated region
      $region33: #{_forward.10} parent=31 // pred_check
        %p1231 = pneg %p123
      $region34: #{_forward.10} parent=31 // pred_check_branch
        %1233 = sbr.rel (%p1231) target = $region36
      $region35: #{_forward.10} parent=31 // pred_region
        %s1234 = smul.u32 64, %s23
      $region36: #{_forward.10} parent=31 // pred_fallthru
        _
    $region32: #{_forward.10} parent=5 // pred_fallthru
      _
    %p1235 = scmp.le.s32.totalorder 2, %s18
    // Predicated region
    $region37: #{_forward.10} parent=5 // pred_check
      %p1236 = pneg %p1235
    $region38: #{_forward.10} parent=5 // pred_check_branch
      %1238 = sbr.rel (%p1236) target = $region40
    $region39: #{_forward.10} parent=5 // pred_region
      %s1239 = ssub.s32 %s18, 2
      // Predicated region
      $region41: #{_forward.10} parent=39 // pred_check
        %p1240 = pneg %p129
      $region42: #{_forward.10} parent=39 // pred_check_branch
        %1242 = sbr.rel (%p1240) target = $region44
      $region43: #{_forward.10} parent=39 // pred_region
        %s1243 = smul.u32 64, %s24
        %p1244 = scmp.lt.s32.totalorder %s1243, 191
        %s1245 = scalar_select %p1244, %s1243, 191
        %s1246 = smul.addr %s1245, 4
        %s1247 = scalar_lea.vmem %s4, %s1246
      $region44: #{_forward.10} parent=39 // pred_fallthru
        _
    $region40: #{_forward.10} parent=5 // pred_fallthru
      _
  $region6: #{_forward.10} parent=0 // loop_footer
    %s22 = sadd.s32 1, %s18
  $region7: #{_forward.10} parent=0 // loop_footer_branch
    %17 = sbr.rel target = $region3
  $region8: #{_forward.10} parent=0 // loop_exit
    _

// kernel: _forward.11
$region0: #{_forward.11}
  #allocation0 [shape = 'u32[]', space=smem, size = 0x4, offset = 0x4, fixed_abs, tag = 'smem constant byte address 0x4 - core index']
  #allocation1 [shape = 'u32[72,128]{1,0:T(1,128)}', space=vmem, size = 0x9000, scoped, tag = 'internal scratch']
  #allocation2 [shape = 's32[1]{0}', space=sflag, size = 0x4, scoped, tag = 'scoped memory for _forward.11']
  #allocation3 [shape = 's32[1]{0:T(128)S(6)}', space=smem, size = 0x200, scoped, tag = 'prefetched SMEM operand 0']
  %s0 = inlined_call_operand.<no memory space> [shape: s32[1], index: 0, kind: input, shape index: {}]
  %s1 = inlined_call_operand.vmem [shape: bf16[512,144], index: 1, kind: input, shape index: {}]
  %s2 = inlined_call_operand.vmem [shape: bf16[1,144,128], index: 2, kind: input, shape index: {}]
  %s3 = inlined_call_operand.vmem [shape: f32[1,1,128], index: 3, kind: input, shape index: {}]
  %s4 = inlined_call_operand.vmem [shape: bf16[512,128], index: 4, kind: output, shape index: {}]
  %s5 = sld [smem:[#allocation0]]
  $region22: #{_forward.11} parent=0
    _
  %s7 = ssub.s32 1, %s5
  %s8 = scalar_select 0, %s7, %s5
  %9 = sst [smem:[#allocation3]] %s0
  // Predicated region
  $region2: #{_forward.11} parent=0 // pred_check
    _
  $region3: #{_forward.11} parent=0 // pred_check_branch
    %11 = sbr.rel (0) target = $region5
  $region4: #{_forward.11} parent=0 // pred_region
    _
  $region5: #{_forward.11} parent=0 // pred_fallthru
    _
  // Predicated region
  $region6: #{_forward.11} parent=0 // pred_check
    _
  $region7: #{_forward.11} parent=0 // pred_check_branch
    %13 = sbr.rel (0) target = $region9
  $region8: #{_forward.11} parent=0 // pred_region
    %s14 = sld [smem:[#allocation3]]
    %p15 = scmp.lt.s32.totalorder %s14, 0
    %s16 = scalar_select %p15, %s14, 0
    %s17 = smul.addr %s16, 18
    %s18 = smul.addr %s17, 4
    %s19 = scalar_lea.vmem %s2, %s18
    %s20 = sld [smem:[#allocation3]]
  $region9: #{_forward.11} parent=0 // pred_fallthru
    _
  // Predicated region
  $region10: #{_forward.11} parent=0 // pred_check
    _
  $region11: #{_forward.11} parent=0 // pred_check_branch
    %22 = sbr.rel (0) target = $region13
  $region12: #{_forward.11} parent=0 // pred_region
    %s23 = sld [smem:[#allocation3]]
    %p24 = scmp.lt.s32.totalorder %s23, 0
    %s25 = scalar_select %p24, %s23, 0
    %s26 = scalar_lea.vmem %s3, %s25
    %s27 = sld [smem:[#allocation3]]
  $region13: #{_forward.11} parent=0 // pred_fallthru
    _
  %s28 = sld [smem:[#allocation3]]
  %p29 = scmp.lt.s32.totalorder %s28, 0
  %s30 = scalar_select %p29, %s28, 0
  %s31 = smul.addr %s30, 18
  %s32 = smul.addr %s31, 4
  %s33 = scalar_lea.vmem %s2, %s32
  %s34 = sld [smem:[#allocation3]]
  %p35 = scmp.lt.s32.totalorder %s34, 0
  %s36 = scalar_select %p35, %s34, 0
  %s37 = scalar_lea.vmem %s3, %s36
  %s38 = sld [smem:[#allocation3]]
  %p39 = scmp.lt.s32.totalorder %s38, 0
  %s40 = scalar_select %p39, %s38, 0
  %s41 = smul.addr %s40, 18
  %s42 = smul.addr %s41, 4
  %s43 = scalar_lea.vmem %s2, %s42
  %s44 = sld [smem:[#allocation3]]
  %s45 = sld [smem:[#allocation3]]
  %p46 = scmp.lt.s32.totalorder %s45, 0
  %s47 = scalar_select %p46, %s45, 0
  %s48 = scalar_lea.vmem %s3, %s47
  %s49 = sld [smem:[#allocation3]]
  %v51 = vld [vmem:[%s1] sm:$0xff]
  %v52 = vld [vmem:[%s1 + $0x8] sm:$0xff]
  %v53 = vld [vmem:[%s1 + $0x10] sm:$0xff]
  %v54 = vld [vmem:[%s1 + $0x18] sm:$0xff]
  %v55 = vld [vmem:[%s1 + $0x20] sm:$0xff]
  %v56 = vld [vmem:[%s1 + $0x28] sm:$0xff]
  %v57 = vld [vmem:[%s1 + $0x30] sm:$0xff]
  %v58 = vld [vmem:[%s1 + $0x38] sm:$0xff]
  %v59 = vld [vmem:[%s1 + $0x40] sm:$0xff]
  %v60 = vld [vmem:[%s1 + $0x48] sm:$0xff]
  %v61 = vld [vmem:[%s1 + $0x50] sm:$0xff]
  %v62 = vld [vmem:[%s1 + $0x58] sm:$0xff]
  %v63 = vld [vmem:[%s1 + $0x60] sm:$0xff]
  %v64 = vld [vmem:[%s1 + $0x68] sm:$0xff]
  %v65 = vld [vmem:[%s1 + $0x70] sm:$0xff]
  %v66 = vld [vmem:[%s1 + $0x78] sm:$0xff]
  %v67 = vld [vmem:[%s1 + $0x80] sm:$0xff]
  %v68 = vld [vmem:[%s1 + $0x88] sm:$0xff]
  %v69 = vld [vmem:[%s1 + $0x90] sm:$0xff]
  %v70 = vld [vmem:[%s1 + $0x98] sm:$0xff]
  %v71 = vld [vmem:[%s1 + $0xa0] sm:$0xff]
  %v72 = vld [vmem:[%s1 + $0xa8] sm:$0xff]
  %v73 = vld [vmem:[%s1 + $0xb0] sm:$0xff]
  %v74 = vld [vmem:[%s1 + $0xb8] sm:$0xff]
  %v75 = vld [vmem:[%s1 + $0xc0] sm:$0xff]
  %v76 = vld [vmem:[%s1 + $0xc8] sm:$0xff]
  %v77 = vld [vmem:[%s1 + $0xd0] sm:$0xff]
  %v78 = vld [vmem:[%s1 + $0xd8] sm:$0xff]
  %v79 = vld [vmem:[%s1 + $0xe0] sm:$0xff]
  %v80 = vld [vmem:[%s1 + $0xe8] sm:$0xff]
  %v81 = vld [vmem:[%s1 + $0xf0] sm:$0xff]
  %v82 = vld [vmem:[%s1 + $0xf8] sm:$0xff]
  %v83 = vld [vmem:[%s1 + $0x100] sm:$0xff]
  %v84 = vld [vmem:[%s1 + $0x108] sm:$0xff]
  %v85 = vld [vmem:[%s1 + $0x110] sm:$0xff]
  %v86 = vld [vmem:[%s1 + $0x118] sm:$0xff]
  %v87 = vld [vmem:[%s1 + $0x120] sm:$0xff]
  %v88 = vld [vmem:[%s1 + $0x128] sm:$0xff]
  %v89 = vld [vmem:[%s1 + $0x130] sm:$0xff]
  %v90 = vld [vmem:[%s1 + $0x138] sm:$0xff]
  %v91 = vld [vmem:[%s1 + $0x140] sm:$0xff]
  %v92 = vld [vmem:[%s1 + $0x148] sm:$0xff]
  %v93 = vld [vmem:[%s1 + $0x150] sm:$0xff]
  %v94 = vld [vmem:[%s1 + $0x158] sm:$0xff]
  %v95 = vld [vmem:[%s1 + $0x160] sm:$0xff]
  %v96 = vld [vmem:[%s1 + $0x168] sm:$0xff]
  %v97 = vld [vmem:[%s1 + $0x170] sm:$0xff]
  %v98 = vld [vmem:[%s1 + $0x178] sm:$0xff]
  %v99 = vld [vmem:[%s1 + $0x180] sm:$0xff]
  %v100 = vld [vmem:[%s1 + $0x188] sm:$0xff]
  %v101 = vld [vmem:[%s1 + $0x190] sm:$0xff]
  %v102 = vld [vmem:[%s1 + $0x198] sm:$0xff]
  %v103 = vld [vmem:[%s1 + $0x1a0] sm:$0xff]
  %v104 = vld [vmem:[%s1 + $0x1a8] sm:$0xff]
  %v105 = vld [vmem:[%s1 + $0x1b0] sm:$0xff]
  %v106 = vld [vmem:[%s1 + $0x1b8] sm:$0xff]
  %v107 = vld [vmem:[%s1 + $0x1c0] sm:$0xff]
  %v108 = vld [vmem:[%s1 + $0x1c8] sm:$0xff]
  %v109 = vld [vmem:[%s1 + $0x1d0] sm:$0xff]
  %v110 = vld [vmem:[%s1 + $0x1d8] sm:$0xff]
  %v111 = vld [vmem:[%s1 + $0x1e0] sm:$0xff]
  %v112 = vld [vmem:[%s1 + $0x1e8] sm:$0xff]
  %v113 = vld [vmem:[%s1 + $0x1f0] sm:$0xff]
  %v114 = vld [vmem:[%s1 + $0x1f8] sm:$0xff]
  %v115 = vld [vmem:[%s43] sm:$0xf]
  %v116 = vld [vmem:[%s43 + $0x4] sm:$0xf]
  %v117 = vld [vmem:[%s43 + $0x8] sm:$0xf]
  %v118 = vld [vmem:[%s43 + $0xc] sm:$0xf]
  %v119 = vld [vmem:[%s43 + $0x10] sm:$0xf]
  %v120 = vld [vmem:[%s43 + $0x14] sm:$0xf]
  %v121 = vld [vmem:[%s43 + $0x18] sm:$0xf]
  %v122 = vld [vmem:[%s43 + $0x1c] sm:$0xf]
  %v123 = vld [vmem:[%s43 + $0x20] sm:$0xf]
  %v124 = vld [vmem:[%s43 + $0x24] sm:$0xf]
  %v125 = vld [vmem:[%s43 + $0x28] sm:$0xf]
  %v126 = vld [vmem:[%s43 + $0x2c] sm:$0xf]
  %v127 = vld [vmem:[%s43 + $0x30] sm:$0xf]
  %v128 = vld [vmem:[%s43 + $0x34] sm:$0xf]
  %v129 = vld [vmem:[%s43 + $0x38] sm:$0xf]
  %v130 = vld [vmem:[%s43 + $0x3c] sm:$0xf]
  %v131 = vld [vmem:[%s43 + $0x40] sm:$0xf]
  %v132 = vld [vmem:[%s43 + $0x44] sm:$0xf]
  %v133 = vld [vmem:[%s48] sm:$0x1]
  %v135 = vperm.slane %v133, 0
  %v201 = vunpack.c.l.b16 %v51
  %v202 = vunpack.c.h.b16 %v51
  %v203 = vunpack.c.l.b16 %v52
  %v204 = vunpack.c.h.b16 %v52
  %v205 = vunpack.c.l.b16 %v53
  %v206 = vunpack.c.h.b16 %v53
  %v207 = vunpack.c.l.b16 %v54
  %v208 = vunpack.c.h.b16 %v54
  %v209 = vunpack.c.l.b16 %v55
  %v210 = vunpack.c.h.b16 %v55
  %v211 = vunpack.c.l.b16 %v56
  %v212 = vunpack.c.h.b16 %v56
  %v213 = vunpack.c.l.b16 %v57
  %v214 = vunpack.c.h.b16 %v57
  %v215 = vunpack.c.l.b16 %v58
  %v216 = vunpack.c.h.b16 %v58
  %v217 = vunpack.c.l.b16 %v59
  %v218 = vunpack.c.h.b16 %v59
  %v219 = vunpack.c.l.b16 %v60
  %v220 = vunpack.c.h.b16 %v60
  %v221 = vunpack.c.l.b16 %v61
  %v222 = vunpack.c.h.b16 %v61
  %v223 = vunpack.c.l.b16 %v62
  %v224 = vunpack.c.h.b16 %v62
  %v225 = vunpack.c.l.b16 %v63
  %v226 = vunpack.c.h.b16 %v63
  %v227 = vunpack.c.l.b16 %v64
  %v228 = vunpack.c.h.b16 %v64
  %v229 = vunpack.c.l.b16 %v65
  %v230 = vunpack.c.h.b16 %v65
  %v231 = vunpack.c.l.b16 %v66
  %v232 = vunpack.c.h.b16 %v66
  %v233 = vunpack.c.l.b16 %v67
  %v234 = vunpack.c.h.b16 %v67
  %v235 = vunpack.c.l.b16 %v68
  %v236 = vunpack.c.h.b16 %v68
  %v237 = vunpack.c.l.b16 %v69
  %v238 = vunpack.c.h.b16 %v69
  %v239 = vunpack.c.l.b16 %v70
  %v240 = vunpack.c.h.b16 %v70
  %v241 = vunpack.c.l.b16 %v71
  %v242 = vunpack.c.h.b16 %v71
  %v243 = vunpack.c.l.b16 %v72
  %v244 = vunpack.c.h.b16 %v72
  %v245 = vunpack.c.l.b16 %v73
  %v246 = vunpack.c.h.b16 %v73
  %v247 = vunpack.c.l.b16 %v74
  %v248 = vunpack.c.h.b16 %v74
  %v249 = vunpack.c.l.b16 %v75
  %v250 = vunpack.c.h.b16 %v75
  %v251 = vunpack.c.l.b16 %v76
  %v252 = vunpack.c.h.b16 %v76
  %v253 = vunpack.c.l.b16 %v77
  %v254 = vunpack.c.h.b16 %v77
  %v255 = vunpack.c.l.b16 %v78
  %v256 = vunpack.c.h.b16 %v78
  %v257 = vunpack.c.l.b16 %v79
  %v258 = vunpack.c.h.b16 %v79
  %v259 = vunpack.c.l.b16 %v80
  %v260 = vunpack.c.h.b16 %v80
  %v261 = vunpack.c.l.b16 %v81
  %v262 = vunpack.c.h.b16 %v81
  %v263 = vunpack.c.l.b16 %v82
  %v264 = vunpack.c.h.b16 %v82
  %v265 = vunpack.c.l.b16 %v83
  %v266 = vunpack.c.h.b16 %v83
  %v267 = vunpack.c.l.b16 %v84
  %v268 = vunpack.c.h.b16 %v84
  %v269 = vunpack.c.l.b16 %v85
  %v270 = vunpack.c.h.b16 %v85
  %v271 = vunpack.c.l.b16 %v86
  %v272 = vunpack.c.h.b16 %v86
  %v273 = vunpack.c.l.b16 %v87
  %v274 = vunpack.c.h.b16 %v87
  %v275 = vunpack.c.l.b16 %v88
  %v276 = vunpack.c.h.b16 %v88
  %v277 = vunpack.c.l.b16 %v89
  %v278 = vunpack.c.h.b16 %v89
  %v279 = vunpack.c.l.b16 %v90
  %v280 = vunpack.c.h.b16 %v90
  %v281 = vunpack.c.l.b16 %v91
  %v282 = vunpack.c.h.b16 %v91
  %v283 = vunpack.c.l.b16 %v92
  %v284 = vunpack.c.h.b16 %v92
  %v285 = vunpack.c.l.b16 %v93
  %v286 = vunpack.c.h.b16 %v93
  %v287 = vunpack.c.l.b16 %v94
  %v288 = vunpack.c.h.b16 %v94
  %v289 = vunpack.c.l.b16 %v95
  %v290 = vunpack.c.h.b16 %v95
  %v291 = vunpack.c.l.b16 %v96
  %v292 = vunpack.c.h.b16 %v96
  %v293 = vunpack.c.l.b16 %v97
  %v294 = vunpack.c.h.b16 %v97
  %v295 = vunpack.c.l.b16 %v98
  %v296 = vunpack.c.h.b16 %v98
  %v297 = vunpack.c.l.b16 %v99
  %v298 = vunpack.c.h.b16 %v99
  %v299 = vunpack.c.l.b16 %v100
  %v300 = vunpack.c.h.b16 %v100
  %v301 = vunpack.c.l.b16 %v101
  %v302 = vunpack.c.h.b16 %v101
  %v303 = vunpack.c.l.b16 %v102
  %v304 = vunpack.c.h.b16 %v102
  %v305 = vunpack.c.l.b16 %v103
  %v306 = vunpack.c.h.b16 %v103
  %v307 = vunpack.c.l.b16 %v104
  %v308 = vunpack.c.h.b16 %v104
  %v309 = vunpack.c.l.b16 %v105
  %v310 = vunpack.c.h.b16 %v105
  %v311 = vunpack.c.l.b16 %v106
  %v312 = vunpack.c.h.b16 %v106
  %v313 = vunpack.c.l.b16 %v107
  %v314 = vunpack.c.h.b16 %v107
  %v315 = vunpack.c.l.b16 %v108
  %v316 = vunpack.c.h.b16 %v108
  %v317 = vunpack.c.l.b16 %v109
  %v318 = vunpack.c.h.b16 %v109
  %v319 = vunpack.c.l.b16 %v110
  %v320 = vunpack.c.h.b16 %v110
  %v321 = vunpack.c.l.b16 %v111
  %v322 = vunpack.c.h.b16 %v111
  %v323 = vunpack.c.l.b16 %v112
  %v324 = vunpack.c.h.b16 %v112
  %v325 = vunpack.c.l.b16 %v113
  %v326 = vunpack.c.h.b16 %v113
  %v327 = vunpack.c.l.b16 %v114
  %v328 = vunpack.c.h.b16 %v114
  %v329 = vpack.c.b16 %v203, %v201
  %v330 = vpack.c.b16 %v204, %v202
  %v331 = vpack.c.b16 %v207, %v205
  %v332 = vpack.c.b16 %v208, %v206
  %v333 = vpack.c.b16 %v211, %v209
  %v334 = vpack.c.b16 %v212, %v210
  %v335 = vpack.c.b16 %v215, %v213
  %v336 = vpack.c.b16 %v216, %v214
  %v337 = vpack.c.b16 %v219, %v217
  %v338 = vpack.c.b16 %v220, %v218
  %v339 = vpack.c.b16 %v223, %v221
  %v340 = vpack.c.b16 %v224, %v222
  %v341 = vpack.c.b16 %v227, %v225
  %v342 = vpack.c.b16 %v228, %v226
  %v343 = vpack.c.b16 %v231, %v229
  %v344 = vpack.c.b16 %v232, %v230
  %v345 = vpack.c.b16 %v235, %v233
  %v346 = vpack.c.b16 %v236, %v234
  %v347 = vpack.c.b16 %v239, %v237
  %v348 = vpack.c.b16 %v240, %v238
  %v349 = vpack.c.b16 %v243, %v241
  %v350 = vpack.c.b16 %v244, %v242
  %v351 = vpack.c.b16 %v247, %v245
  %v352 = vpack.c.b16 %v248, %v246
  %v353 = vpack.c.b16 %v251, %v249
  %v354 = vpack.c.b16 %v252, %v250
  %v355 = vpack.c.b16 %v255, %v253
  %v356 = vpack.c.b16 %v256, %v254
  %v357 = vpack.c.b16 %v259, %v257
  %v358 = vpack.c.b16 %v260, %v258
  %v359 = vpack.c.b16 %v263, %v261
  %v360 = vpack.c.b16 %v264, %v262
  %v361 = vpack.c.b16 %v267, %v265
  %v362 = vpack.c.b16 %v268, %v266
  %v363 = vpack.c.b16 %v271, %v269
  %v364 = vpack.c.b16 %v272, %v270
  %v365 = vpack.c.b16 %v275, %v273
  %v366 = vpack.c.b16 %v276, %v274
  %v367 = vpack.c.b16 %v279, %v277
  %v368 = vpack.c.b16 %v280, %v278
  %v369 = vpack.c.b16 %v283, %v281
  %v370 = vpack.c.b16 %v284, %v282
  %v371 = vpack.c.b16 %v287, %v285
  %v372 = vpack.c.b16 %v288, %v286
  %v373 = vpack.c.b16 %v291, %v289
  %v374 = vpack.c.b16 %v292, %v290
  %v375 = vpack.c.b16 %v295, %v293
  %v376 = vpack.c.b16 %v296, %v294
  %v377 = vpack.c.b16 %v299, %v297
  %v378 = vpack.c.b16 %v300, %v298
  %v379 = vpack.c.b16 %v303, %v301
  %v380 = vpack.c.b16 %v304, %v302
  %v381 = vpack.c.b16 %v307, %v305
  %v382 = vpack.c.b16 %v308, %v306
  %v383 = vpack.c.b16 %v311, %v309
  %v384 = vpack.c.b16 %v312, %v310
  %v385 = vpack.c.b16 %v315, %v313
  %v386 = vpack.c.b16 %v316, %v314
  %v387 = vpack.c.b16 %v319, %v317
  %v388 = vpack.c.b16 %v320, %v318
  %v389 = vpack.c.b16 %v323, %v321
  %v390 = vpack.c.b16 %v324, %v322
  %v391 = vpack.c.b16 %v327, %v325
  %v392 = vpack.c.b16 %v328, %v326
  %v443 = vunpack.c.l.b16 %v115
  %v444 = vunpack.c.l.b16 %v116
  %v445 = vunpack.c.l.b16 %v117
  %v446 = vunpack.c.l.b16 %v118
  %v447 = vunpack.c.l.b16 %v119
  %v448 = vunpack.c.l.b16 %v120
  %v449 = vunpack.c.l.b16 %v121
  %v450 = vunpack.c.l.b16 %v122
  %v451 = vunpack.c.l.b16 %v123
  %v452 = vunpack.c.l.b16 %v124
  %v453 = vunpack.c.l.b16 %v125
  %v454 = vunpack.c.l.b16 %v126
  %v455 = vunpack.c.l.b16 %v127
  %v456 = vunpack.c.l.b16 %v128
  %v457 = vunpack.c.l.b16 %v129
  %v458 = vunpack.c.l.b16 %v130
  %v459 = vunpack.c.l.b16 %v131
  %v460 = vunpack.c.l.b16 %v132
  %v461 = vpack.c.b16 %v444, %v443
  %v462 = vpack.c.b16 %v446, %v445
  %v463 = vpack.c.b16 %v448, %v447
  %v464 = vpack.c.b16 %v450, %v449
  %v465 = vpack.c.b16 %v452, %v451
  %v466 = vpack.c.b16 %v454, %v453
  %v467 = vpack.c.b16 %v456, %v455
  %v468 = vpack.c.b16 %v458, %v457
  %v469 = vpack.c.b16 %v460, %v459
  %vm479 = vcmask 130048
  %v481 = vsel %vm479, %v330, 0
  %v484 = vsel %vm479, %v332, 0
  %v487 = vsel %vm479, %v334, 0
  %v490 = vsel %vm479, %v336, 0
  %v493 = vsel %vm479, %v338, 0
  %v496 = vsel %vm479, %v340, 0
  %v499 = vsel %vm479, %v342, 0
  %v502 = vsel %vm479, %v344, 0
  %v505 = vsel %vm479, %v346, 0
  %v508 = vsel %vm479, %v348, 0
  %v511 = vsel %vm479, %v350, 0
  %v514 = vsel %vm479, %v352, 0
  %v517 = vsel %vm479, %v354, 0
  %v520 = vsel %vm479, %v356, 0
  %v523 = vsel %vm479, %v358, 0
  %v526 = vsel %vm479, %v360, 0
  %v529 = vsel %vm479, %v362, 0
  %v532 = vsel %vm479, %v364, 0
  %v535 = vsel %vm479, %v366, 0
  %v538 = vsel %vm479, %v368, 0
  %v541 = vsel %vm479, %v370, 0
  %v544 = vsel %vm479, %v372, 0
  %v547 = vsel %vm479, %v374, 0
  %v550 = vsel %vm479, %v376, 0
  %v553 = vsel %vm479, %v378, 0
  %v556 = vsel %vm479, %v380, 0
  %v559 = vsel %vm479, %v382, 0
  %v562 = vsel %vm479, %v384, 0
  %v565 = vsel %vm479, %v386, 0
  %v568 = vsel %vm479, %v388, 0
  %v571 = vsel %vm479, %v390, 0
  %v574 = vsel %vm479, %v392, 0
  %576 = vmatpush.bf16.msra.mxu0 %v468
  %577 = vmatpush.bf16.msra.mxu0 %v467
  %578 = vmatpush.bf16.msra.mxu0 %v466
  %579 = vmatpush.bf16.msra.mxu0 %v465
  %580 = vmatpush.bf16.msra.mxu0 %v464
  %581 = vmatpush.bf16.msra.mxu0 %v463
  %582 = vmatpush.bf16.msra.mxu0 %v462
  %583 = vmatpush.bf16.msra.mxu0 %v461
  %584 = vmatmul.bf16.gmra.mxu0 %v329
  %v585 = vpop.f32.mrf.mxu0
  %v586 = vadd.f32 %v135, %v585
  %v587 = vpop.f32.mrf.mxu0
  %v588 = vadd.f32 %v135, %v587
  %589 = vmatmul.bf16.gmra.mxu0 %v331
  %v590 = vpop.f32.mrf.mxu0
  %v591 = vadd.f32 %v135, %v590
  %v592 = vpop.f32.mrf.mxu0
  %v593 = vadd.f32 %v135, %v592
  %594 = vmatmul.bf16.gmra.mxu0 %v333
  %v595 = vpop.f32.mrf.mxu0
  %v596 = vadd.f32 %v135, %v595
  %v597 = vpop.f32.mrf.mxu0
  %v598 = vadd.f32 %v135, %v597
  %599 = vmatmul.bf16.gmra.mxu0 %v335
  %v600 = vpop.f32.mrf.mxu0
  %v601 = vadd.f32 %v135, %v600
  %v602 = vpop.f32.mrf.mxu0
  %v603 = vadd.f32 %v135, %v602
  %604 = vmatmul.bf16.gmra.mxu0 %v337
  %v605 = vpop.f32.mrf.mxu0
  %v606 = vadd.f32 %v135, %v605
  %v607 = vpop.f32.mrf.mxu0
  %v608 = vadd.f32 %v135, %v607
  %609 = vmatmul.bf16.gmra.mxu0 %v339
  %v610 = vpop.f32.mrf.mxu0
  %v611 = vadd.f32 %v135, %v610
  %v612 = vpop.f32.mrf.mxu0
  %v613 = vadd.f32 %v135, %v612
  %614 = vmatmul.bf16.gmra.mxu0 %v341
  %v615 = vpop.f32.mrf.mxu0
  %v616 = vadd.f32 %v135, %v615
  %v617 = vpop.f32.mrf.mxu0
  %v618 = vadd.f32 %v135, %v617
  %619 = vmatmul.bf16.gmra.mxu0 %v343
  %v620 = vpop.f32.mrf.mxu0
  %v621 = vadd.f32 %v135, %v620
  %v622 = vpop.f32.mrf.mxu0
  %v623 = vadd.f32 %v135, %v622
  %624 = vmatmul.bf16.gmra.mxu0 %v345
  %v625 = vpop.f32.mrf.mxu0
  %v626 = vadd.f32 %v135, %v625
  %v627 = vpop.f32.mrf.mxu0
  %v628 = vadd.f32 %v135, %v627
  %629 = vmatmul.bf16.gmra.mxu0 %v347
  %v630 = vpop.f32.mrf.mxu0
  %v631 = vadd.f32 %v135, %v630
  %v632 = vpop.f32.mrf.mxu0
  %v633 = vadd.f32 %v135, %v632
  %634 = vmatmul.bf16.gmra.mxu0 %v349
  %v635 = vpop.f32.mrf.mxu0
  %v636 = vadd.f32 %v135, %v635
  %v637 = vpop.f32.mrf.mxu0
  %v638 = vadd.f32 %v135, %v637
  %639 = vmatmul.bf16.gmra.mxu0 %v351
  %v640 = vpop.f32.mrf.mxu0
  %v641 = vadd.f32 %v135, %v640
  %v642 = vpop.f32.mrf.mxu0
  %v643 = vadd.f32 %v135, %v642
  %644 = vmatmul.bf16.gmra.mxu0 %v353
  %v645 = vpop.f32.mrf.mxu0
  %v646 = vadd.f32 %v135, %v645
  %v647 = vpop.f32.mrf.mxu0
  %v648 = vadd.f32 %v135, %v647
  %649 = vmatmul.bf16.gmra.mxu0 %v355
  %v650 = vpop.f32.mrf.mxu0
  %v651 = vadd.f32 %v135, %v650
  %v652 = vpop.f32.mrf.mxu0
  %v653 = vadd.f32 %v135, %v652
  %654 = vmatmul.bf16.gmra.mxu0 %v357
  %v655 = vpop.f32.mrf.mxu0
  %v656 = vadd.f32 %v135, %v655
  %v657 = vpop.f32.mrf.mxu0
  %v658 = vadd.f32 %v135, %v657
  %659 = vmatmul.bf16.gmra.mxu0 %v359
  %v660 = vpop.f32.mrf.mxu0
  %v661 = vadd.f32 %v135, %v660
  %v662 = vpop.f32.mrf.mxu0
  %v663 = vadd.f32 %v135, %v662
  %664 = vmatmul.bf16.gmra.mxu0 %v361
  %v665 = vpop.f32.mrf.mxu0
  %v666 = vadd.f32 %v135, %v665
  %v667 = vpop.f32.mrf.mxu0
  %v668 = vadd.f32 %v135, %v667
  %669 = vmatmul.bf16.gmra.mxu0 %v363
  %v670 = vpop.f32.mrf.mxu0
  %v671 = vadd.f32 %v135, %v670
  %v672 = vpop.f32.mrf.mxu0
  %v673 = vadd.f32 %v135, %v672
  %674 = vmatmul.bf16.gmra.mxu0 %v365
  %v675 = vpop.f32.mrf.mxu0
  %v676 = vadd.f32 %v135, %v675
  %v677 = vpop.f32.mrf.mxu0
  %v678 = vadd.f32 %v135, %v677
  %679 = vmatmul.bf16.gmra.mxu0 %v367
  %v680 = vpop.f32.mrf.mxu0
  %v681 = vadd.f32 %v135, %v680
  %v682 = vpop.f32.mrf.mxu0
  %v683 = vadd.f32 %v135, %v682
  %684 = vmatmul.bf16.gmra.mxu0 %v369
  %v685 = vpop.f32.mrf.mxu0
  %v686 = vadd.f32 %v135, %v685
  %v687 = vpop.f32.mrf.mxu0
  %v688 = vadd.f32 %v135, %v687
  %689 = vmatmul.bf16.gmra.mxu0 %v371
  %v690 = vpop.f32.mrf.mxu0
  %v691 = vadd.f32 %v135, %v690
  %v692 = vpop.f32.mrf.mxu0
  %v693 = vadd.f32 %v135, %v692
  %694 = vmatmul.bf16.gmra.mxu0 %v373
  %v695 = vpop.f32.mrf.mxu0
  %v696 = vadd.f32 %v135, %v695
  %v697 = vpop.f32.mrf.mxu0
  %v698 = vadd.f32 %v135, %v697
  %699 = vmatmul.bf16.gmra.mxu0 %v375
  %v700 = vpop.f32.mrf.mxu0
  %v701 = vadd.f32 %v135, %v700
  %v702 = vpop.f32.mrf.mxu0
  %v703 = vadd.f32 %v135, %v702
  %704 = vmatmul.bf16.gmra.mxu0 %v377
  %v705 = vpop.f32.mrf.mxu0
  %v706 = vadd.f32 %v135, %v705
  %v707 = vpop.f32.mrf.mxu0
  %v708 = vadd.f32 %v135, %v707
  %709 = vmatmul.bf16.gmra.mxu0 %v379
  %v710 = vpop.f32.mrf.mxu0
  %v711 = vadd.f32 %v135, %v710
  %v712 = vpop.f32.mrf.mxu0
  %v713 = vadd.f32 %v135, %v712
  %714 = vmatmul.bf16.gmra.mxu0 %v381
  %v715 = vpop.f32.mrf.mxu0
  %v716 = vadd.f32 %v135, %v715
  %v717 = vpop.f32.mrf.mxu0
  %v718 = vadd.f32 %v135, %v717
  %719 = vmatmul.bf16.gmra.mxu0 %v383
  %v720 = vpop.f32.mrf.mxu0
  %v721 = vadd.f32 %v135, %v720
  %v722 = vpop.f32.mrf.mxu0
  %v723 = vadd.f32 %v135, %v722
  %724 = vmatmul.bf16.gmra.mxu0 %v385
  %v725 = vpop.f32.mrf.mxu0
  %v726 = vadd.f32 %v135, %v725
  %v727 = vpop.f32.mrf.mxu0
  %v728 = vadd.f32 %v135, %v727
  %729 = vmatmul.bf16.gmra.mxu0 %v387
  %v730 = vpop.f32.mrf.mxu0
  %v731 = vadd.f32 %v135, %v730
  %v732 = vpop.f32.mrf.mxu0
  %v733 = vadd.f32 %v135, %v732
  %734 = vmatmul.bf16.gmra.mxu0 %v389
  %v735 = vpop.f32.mrf.mxu0
  %v736 = vadd.f32 %v135, %v735
  %v737 = vpop.f32.mrf.mxu0
  %v738 = vadd.f32 %v135, %v737
  %739 = vmatmul.bf16.gmra.mxu0 %v391
  %v740 = vpop.f32.mrf.mxu0
  %v741 = vadd.f32 %v135, %v740
  %v742 = vpop.f32.mrf.mxu0
  %v743 = vadd.f32 %v135, %v742
  %744 = vdwg.mxu0
  %745 = vmatpush.bf16.msra.mxu0 0
  %746 = vmatpush.bf16.msra.mxu0 0
  %747 = vmatpush.bf16.msra.mxu0 0
  %748 = vmatpush.bf16.msra.mxu0 0
  %749 = vmatpush.bf16.msra.mxu0 0
  %750 = vmatpush.bf16.msra.mxu0 0
  %751 = vmatpush.bf16.msra.mxu0 0
  %752 = vmatpush.bf16.msra.mxu0 %v469
  %753 = vmatmul.bf16.gmra.mxu0 %v481
  %v754 = vpop.f32.mrf.mxu0
  %v755 = vadd.f32 %v586, %v754
  %v756 = vpop.f32.mrf.mxu0
  %v757 = vadd.f32 %v588, %v756
  %758 = vmatmul.bf16.gmra.mxu0 %v484
  %v759 = vpop.f32.mrf.mxu0
  %v760 = vadd.f32 %v591, %v759
  %v761 = vpop.f32.mrf.mxu0
  %v762 = vadd.f32 %v593, %v761
  %763 = vmatmul.bf16.gmra.mxu0 %v487
  %v764 = vpop.f32.mrf.mxu0
  %v765 = vadd.f32 %v596, %v764
  %v766 = vpop.f32.mrf.mxu0
  %v767 = vadd.f32 %v598, %v766
  %768 = vmatmul.bf16.gmra.mxu0 %v490
  %v769 = vpop.f32.mrf.mxu0
  %v770 = vadd.f32 %v601, %v769
  %v771 = vpop.f32.mrf.mxu0
  %v772 = vadd.f32 %v603, %v771
  %773 = vmatmul.bf16.gmra.mxu0 %v493
  %v774 = vpop.f32.mrf.mxu0
  %v775 = vadd.f32 %v606, %v774
  %v776 = vpop.f32.mrf.mxu0
  %v777 = vadd.f32 %v608, %v776
  %778 = vmatmul.bf16.gmra.mxu0 %v496
  %v779 = vpop.f32.mrf.mxu0
  %v780 = vadd.f32 %v611, %v779
  %v781 = vpop.f32.mrf.mxu0
  %v782 = vadd.f32 %v613, %v781
  %783 = vmatmul.bf16.gmra.mxu0 %v499
  %v784 = vpop.f32.mrf.mxu0
  %v785 = vadd.f32 %v616, %v784
  %v786 = vpop.f32.mrf.mxu0
  %v787 = vadd.f32 %v618, %v786
  %788 = vmatmul.bf16.gmra.mxu0 %v502
  %v789 = vpop.f32.mrf.mxu0
  %v790 = vadd.f32 %v621, %v789
  %v791 = vpop.f32.mrf.mxu0
  %v792 = vadd.f32 %v623, %v791
  %793 = vmatmul.bf16.gmra.mxu0 %v505
  %v794 = vpop.f32.mrf.mxu0
  %v795 = vadd.f32 %v626, %v794
  %v796 = vpop.f32.mrf.mxu0
  %v797 = vadd.f32 %v628, %v796
  %798 = vmatmul.bf16.gmra.mxu0 %v508
  %v799 = vpop.f32.mrf.mxu0
  %v800 = vadd.f32 %v631, %v799
  %v801 = vpop.f32.mrf.mxu0
  %v802 = vadd.f32 %v633, %v801
  %803 = vmatmul.bf16.gmra.mxu0 %v511
  %v804 = vpop.f32.mrf.mxu0
  %v805 = vadd.f32 %v636, %v804
  %v806 = vpop.f32.mrf.mxu0
  %v807 = vadd.f32 %v638, %v806
  %808 = vmatmul.bf16.gmra.mxu0 %v514
  %v809 = vpop.f32.mrf.mxu0
  %v810 = vadd.f32 %v641, %v809
  %v811 = vpop.f32.mrf.mxu0
  %v812 = vadd.f32 %v643, %v811
  %813 = vmatmul.bf16.gmra.mxu0 %v517
  %v814 = vpop.f32.mrf.mxu0
  %v815 = vadd.f32 %v646, %v814
  %v816 = vpop.f32.mrf.mxu0
  %v817 = vadd.f32 %v648, %v816
  %818 = vmatmul.bf16.gmra.mxu0 %v520
  %v819 = vpop.f32.mrf.mxu0
  %v820 = vadd.f32 %v651, %v819
  %v821 = vpop.f32.mrf.mxu0
  %v822 = vadd.f32 %v653, %v821
  %823 = vmatmul.bf16.gmra.mxu0 %v523
  %v824 = vpop.f32.mrf.mxu0
  %v825 = vadd.f32 %v656, %v824
  %v826 = vpop.f32.mrf.mxu0
  %v827 = vadd.f32 %v658, %v826
  %828 = vmatmul.bf16.gmra.mxu0 %v526
  %v829 = vpop.f32.mrf.mxu0
  %v830 = vadd.f32 %v661, %v829
  %v831 = vpop.f32.mrf.mxu0
  %v832 = vadd.f32 %v663, %v831
  %833 = vmatmul.bf16.gmra.mxu0 %v529
  %v834 = vpop.f32.mrf.mxu0
  %v835 = vadd.f32 %v666, %v834
  %v836 = vpop.f32.mrf.mxu0
  %v837 = vadd.f32 %v668, %v836
  %838 = vmatmul.bf16.gmra.mxu0 %v532
  %v839 = vpop.f32.mrf.mxu0
  %v840 = vadd.f32 %v671, %v839
  %v841 = vpop.f32.mrf.mxu0
  %v842 = vadd.f32 %v673, %v841
  %843 = vmatmul.bf16.gmra.mxu0 %v535
  %v844 = vpop.f32.mrf.mxu0
  %v845 = vadd.f32 %v676, %v844
  %v846 = vpop.f32.mrf.mxu0
  %v847 = vadd.f32 %v678, %v846
  %848 = vmatmul.bf16.gmra.mxu0 %v538
  %v849 = vpop.f32.mrf.mxu0
  %v850 = vadd.f32 %v681, %v849
  %v851 = vpop.f32.mrf.mxu0
  %v852 = vadd.f32 %v683, %v851
  %853 = vmatmul.bf16.gmra.mxu0 %v541
  %v854 = vpop.f32.mrf.mxu0
  %v855 = vadd.f32 %v686, %v854
  %v856 = vpop.f32.mrf.mxu0
  %v857 = vadd.f32 %v688, %v856
  %858 = vmatmul.bf16.gmra.mxu0 %v544
  %v859 = vpop.f32.mrf.mxu0
  %v860 = vadd.f32 %v691, %v859
  %v861 = vpop.f32.mrf.mxu0
  %v862 = vadd.f32 %v693, %v861
  %863 = vmatmul.bf16.gmra.mxu0 %v547
  %v864 = vpop.f32.mrf.mxu0
  %v865 = vadd.f32 %v696, %v864
  %v866 = vpop.f32.mrf.mxu0
  %v867 = vadd.f32 %v698, %v866
  %868 = vmatmul.bf16.gmra.mxu0 %v550
  %v869 = vpop.f32.mrf.mxu0
  %v870 = vadd.f32 %v701, %v869
  %v871 = vpop.f32.mrf.mxu0
  %v872 = vadd.f32 %v703, %v871
  %873 = vmatmul.bf16.gmra.mxu0 %v553
  %v874 = vpop.f32.mrf.mxu0
  %v875 = vadd.f32 %v706, %v874
  %v876 = vpop.f32.mrf.mxu0
  %v877 = vadd.f32 %v708, %v876
  %878 = vmatmul.bf16.gmra.mxu0 %v556
  %v879 = vpop.f32.mrf.mxu0
  %v880 = vadd.f32 %v711, %v879
  %v881 = vpop.f32.mrf.mxu0
  %v882 = vadd.f32 %v713, %v881
  %883 = vmatmul.bf16.gmra.mxu0 %v559
  %v884 = vpop.f32.mrf.mxu0
  %v885 = vadd.f32 %v716, %v884
  %v886 = vpop.f32.mrf.mxu0
  %v887 = vadd.f32 %v718, %v886
  %888 = vmatmul.bf16.gmra.mxu0 %v562
  %v889 = vpop.f32.mrf.mxu0
  %v890 = vadd.f32 %v721, %v889
  %v891 = vpop.f32.mrf.mxu0
  %v892 = vadd.f32 %v723, %v891
  %893 = vmatmul.bf16.gmra.mxu0 %v565
  %v894 = vpop.f32.mrf.mxu0
  %v895 = vadd.f32 %v726, %v894
  %v896 = vpop.f32.mrf.mxu0
  %v897 = vadd.f32 %v728, %v896
  %898 = vmatmul.bf16.gmra.mxu0 %v568
  %v899 = vpop.f32.mrf.mxu0
  %v900 = vadd.f32 %v731, %v899
  %v901 = vpop.f32.mrf.mxu0
  %v902 = vadd.f32 %v733, %v901
  %903 = vmatmul.bf16.gmra.mxu0 %v571
  %v904 = vpop.f32.mrf.mxu0
  %v905 = vadd.f32 %v736, %v904
  %v906 = vpop.f32.mrf.mxu0
  %v907 = vadd.f32 %v738, %v906
  %908 = vmatmul.bf16.gmra.mxu0 %v574
  %v909 = vpop.f32.mrf.mxu0
  %v910 = vadd.f32 %v741, %v909
  %v911 = vpop.f32.mrf.mxu0
  %v912 = vadd.f32 %v743, %v911
  %913 = vdwg.mxu0
  %v914 = vmax.f32 %v755, 0.0
  %v915 = vmax.f32 %v757, 0.0
  %v916 = vmax.f32 %v760, 0.0
  %v917 = vmax.f32 %v762, 0.0
  %v918 = vmax.f32 %v765, 0.0
  %v919 = vmax.f32 %v767, 0.0
  %v920 = vmax.f32 %v770, 0.0
  %v921 = vmax.f32 %v772, 0.0
  %v922 = vmax.f32 %v775, 0.0
  %v923 = vmax.f32 %v777, 0.0
  %v924 = vmax.f32 %v780, 0.0
  %v925 = vmax.f32 %v782, 0.0
  %v926 = vmax.f32 %v785, 0.0
  %v927 = vmax.f32 %v787, 0.0
  %v928 = vmax.f32 %v790, 0.0
  %v929 = vmax.f32 %v792, 0.0
  %v930 = vmax.f32 %v795, 0.0
  %v931 = vmax.f32 %v797, 0.0
  %v932 = vmax.f32 %v800, 0.0
  %v933 = vmax.f32 %v802, 0.0
  %v934 = vmax.f32 %v805, 0.0
  %v935 = vmax.f32 %v807, 0.0
  %v936 = vmax.f32 %v810, 0.0
  %v937 = vmax.f32 %v812, 0.0
  %v938 = vmax.f32 %v815, 0.0
  %v939 = vmax.f32 %v817, 0.0
  %v940 = vmax.f32 %v820, 0.0
  %v941 = vmax.f32 %v822, 0.0
  %v942 = vmax.f32 %v825, 0.0
  %v943 = vmax.f32 %v827, 0.0
  %v944 = vmax.f32 %v830, 0.0
  %v945 = vmax.f32 %v832, 0.0
  %v946 = vmax.f32 %v835, 0.0
  %v947 = vmax.f32 %v837, 0.0
  %v948 = vmax.f32 %v840, 0.0
  %v949 = vmax.f32 %v842, 0.0
  %v950 = vmax.f32 %v845, 0.0
  %v951 = vmax.f32 %v847, 0.0
  %v952 = vmax.f32 %v850, 0.0
  %v953 = vmax.f32 %v852, 0.0
  %v954 = vmax.f32 %v855, 0.0
  %v955 = vmax.f32 %v857, 0.0
  %v956 = vmax.f32 %v860, 0.0
  %v957 = vmax.f32 %v862, 0.0
  %v958 = vmax.f32 %v865, 0.0
  %v959 = vmax.f32 %v867, 0.0
  %v960 = vmax.f32 %v870, 0.0
  %v961 = vmax.f32 %v872, 0.0
  %v962 = vmax.f32 %v875, 0.0
  %v963 = vmax.f32 %v877, 0.0
  %v964 = vmax.f32 %v880, 0.0
  %v965 = vmax.f32 %v882, 0.0
  %v966 = vmax.f32 %v885, 0.0
  %v967 = vmax.f32 %v887, 0.0
  %v968 = vmax.f32 %v890, 0.0
  %v969 = vmax.f32 %v892, 0.0
  %v970 = vmax.f32 %v895, 0.0
  %v971 = vmax.f32 %v897, 0.0
  %v972 = vmax.f32 %v900, 0.0
  %v973 = vmax.f32 %v902, 0.0
  %v974 = vmax.f32 %v905, 0.0
  %v975 = vmax.f32 %v907, 0.0
  %v976 = vmax.f32 %v910, 0.0
  %v977 = vmax.f32 %v912, 0.0
  %v978 = vpack.c.bf16 %v914, %v914
  %v979 = vpack.c.bf16 %v915, %v915
  %v980 = vpack.c.bf16 %v916, %v916
  %v981 = vpack.c.bf16 %v917, %v917
  %v982 = vpack.c.bf16 %v918, %v918
  %v983 = vpack.c.bf16 %v919, %v919
  %v984 = vpack.c.bf16 %v920, %v920
  %v985 = vpack.c.bf16 %v921, %v921
  %v986 = vpack.c.bf16 %v922, %v922
  %v987 = vpack.c.bf16 %v923, %v923
  %v988 = vpack.c.bf16 %v924, %v924
  %v989 = vpack.c.bf16 %v925, %v925
  %v990 = vpack.c.bf16 %v926, %v926
  %v991 = vpack.c.bf16 %v927, %v927
  %v992 = vpack.c.bf16 %v928, %v928
  %v993 = vpack.c.bf16 %v929, %v929
  %v994 = vpack.c.bf16 %v930, %v930
  %v995 = vpack.c.bf16 %v931, %v931
  %v996 = vpack.c.bf16 %v932, %v932
  %v997 = vpack.c.bf16 %v933, %v933
  %v998 = vpack.c.bf16 %v934, %v934
  %v999 = vpack.c.bf16 %v935, %v935
  %v1000 = vpack.c.bf16 %v936, %v936
  %v1001 = vpack.c.bf16 %v937, %v937
  %v1002 = vpack.c.bf16 %v938, %v938
  %v1003 = vpack.c.bf16 %v939, %v939
  %v1004 = vpack.c.bf16 %v940, %v940
  %v1005 = vpack.c.bf16 %v941, %v941
  %v1006 = vpack.c.bf16 %v942, %v942
  %v1007 = vpack.c.bf16 %v943, %v943
  %v1008 = vpack.c.bf16 %v944, %v944
  %v1009 = vpack.c.bf16 %v945, %v945
  %v1010 = vpack.c.bf16 %v946, %v946
  %v1011 = vpack.c.bf16 %v947, %v947
  %v1012 = vpack.c.bf16 %v948, %v948
  %v1013 = vpack.c.bf16 %v949, %v949
  %v1014 = vpack.c.bf16 %v950, %v950
  %v1015 = vpack.c.bf16 %v951, %v951
  %v1016 = vpack.c.bf16 %v952, %v952
  %v1017 = vpack.c.bf16 %v953, %v953
  %v1018 = vpack.c.bf16 %v954, %v954
  %v1019 = vpack.c.bf16 %v955, %v955
  %v1020 = vpack.c.bf16 %v956, %v956
  %v1021 = vpack.c.bf16 %v957, %v957
  %v1022 = vpack.c.bf16 %v958, %v958
  %v1023 = vpack.c.bf16 %v959, %v959
  %v1024 = vpack.c.bf16 %v960, %v960
  %v1025 = vpack.c.bf16 %v961, %v961
  %v1026 = vpack.c.bf16 %v962, %v962
  %v1027 = vpack.c.bf16 %v963, %v963
  %v1028 = vpack.c.bf16 %v964, %v964
  %v1029 = vpack.c.bf16 %v965, %v965
  %v1030 = vpack.c.bf16 %v966, %v966
  %v1031 = vpack.c.bf16 %v967, %v967
  %v1032 = vpack.c.bf16 %v968, %v968
  %v1033 = vpack.c.bf16 %v969, %v969
  %v1034 = vpack.c.bf16 %v970, %v970
  %v1035 = vpack.c.bf16 %v971, %v971
  %v1036 = vpack.c.bf16 %v972, %v972
  %v1037 = vpack.c.bf16 %v973, %v973
  %v1038 = vpack.c.bf16 %v974, %v974
  %v1039 = vpack.c.bf16 %v975, %v975
  %v1040 = vpack.c.bf16 %v976, %v976
  %v1041 = vpack.c.bf16 %v977, %v977
  %1042 = vst [vmem:[%s4] sm:$0xf] %v978
  %1043 = vst [vmem:[%s4 + $0x4] sm:$0xf] %v979
  %1044 = vst [vmem:[%s4 + $0x8] sm:$0xf] %v980
  %1045 = vst [vmem:[%s4 + $0xc] sm:$0xf] %v981
  %1046 = vst [vmem:[%s4 + $0x10] sm:$0xf] %v982
  %1047 = vst [vmem:[%s4 + $0x14] sm:$0xf] %v983
  %1048 = vst [vmem:[%s4 + $0x18] sm:$0xf] %v984
  %1049 = vst [vmem:[%s4 + $0x1c] sm:$0xf] %v985
  %1050 = vst [vmem:[%s4 + $0x20] sm:$0xf] %v986
  %1051 = vst [vmem:[%s4 + $0x24] sm:$0xf] %v987
  %1052 = vst [vmem:[%s4 + $0x28] sm:$0xf] %v988
  %1053 = vst [vmem:[%s4 + $0x2c] sm:$0xf] %v989
  %1054 = vst [vmem:[%s4 + $0x30] sm:$0xf] %v990
  %1055 = vst [vmem:[%s4 + $0x34] sm:$0xf] %v991
  %1056 = vst [vmem:[%s4 + $0x38] sm:$0xf] %v992
  %1057 = vst [vmem:[%s4 + $0x3c] sm:$0xf] %v993
  %1058 = vst [vmem:[%s4 + $0x40] sm:$0xf] %v994
  %1059 = vst [vmem:[%s4 + $0x44] sm:$0xf] %v995
  %1060 = vst [vmem:[%s4 + $0x48] sm:$0xf] %v996
  %1061 = vst [vmem:[%s4 + $0x4c] sm:$0xf] %v997
  %1062 = vst [vmem:[%s4 + $0x50] sm:$0xf] %v998
  %1063 = vst [vmem:[%s4 + $0x54] sm:$0xf] %v999
  %1064 = vst [vmem:[%s4 + $0x58] sm:$0xf] %v1000
  %1065 = vst [vmem:[%s4 + $0x5c] sm:$0xf] %v1001
  %1066 = vst [vmem:[%s4 + $0x60] sm:$0xf] %v1002
  %1067 = vst [vmem:[%s4 + $0x64] sm:$0xf] %v1003
  %1068 = vst [vmem:[%s4 + $0x68] sm:$0xf] %v1004
  %1069 = vst [vmem:[%s4 + $0x6c] sm:$0xf] %v1005
  %1070 = vst [vmem:[%s4 + $0x70] sm:$0xf] %v1006
  %1071 = vst [vmem:[%s4 + $0x74] sm:$0xf] %v1007
  %1072 = vst [vmem:[%s4 + $0x78] sm:$0xf] %v1008
  %1073 = vst [vmem:[%s4 + $0x7c] sm:$0xf] %v1009
  %1074 = vst [vmem:[%s4 + $0x80] sm:$0xf] %v1010
  %1075 = vst [vmem:[%s4 + $0x84] sm:$0xf] %v1011
  %1076 = vst [vmem:[%s4 + $0x88] sm:$0xf] %v1012
  %1077 = vst [vmem:[%s4 + $0x8c] sm:$0xf] %v1013
  %1078 = vst [vmem:[%s4 + $0x90] sm:$0xf] %v1014
  %1079 = vst [vmem:[%s4 + $0x94] sm:$0xf] %v1015
  %1080 = vst [vmem:[%s4 + $0x98] sm:$0xf] %v1016
  %1081 = vst [vmem:[%s4 + $0x9c] sm:$0xf] %v1017
  %1082 = vst [vmem:[%s4 + $0xa0] sm:$0xf] %v1018
  %1083 = vst [vmem:[%s4 + $0xa4] sm:$0xf] %v1019
  %1084 = vst [vmem:[%s4 + $0xa8] sm:$0xf] %v1020
  %1085 = vst [vmem:[%s4 + $0xac] sm:$0xf] %v1021
  %1086 = vst [vmem:[%s4 + $0xb0] sm:$0xf] %v1022
  %1087 = vst [vmem:[%s4 + $0xb4] sm:$0xf] %v1023
  %1088 = vst [vmem:[%s4 + $0xb8] sm:$0xf] %v1024
  %1089 = vst [vmem:[%s4 + $0xbc] sm:$0xf] %v1025
  %1090 = vst [vmem:[%s4 + $0xc0] sm:$0xf] %v1026
  %1091 = vst [vmem:[%s4 + $0xc4] sm:$0xf] %v1027
  %1092 = vst [vmem:[%s4 + $0xc8] sm:$0xf] %v1028
  %1093 = vst [vmem:[%s4 + $0xcc] sm:$0xf] %v1029
  %1094 = vst [vmem:[%s4 + $0xd0] sm:$0xf] %v1030
  %1095 = vst [vmem:[%s4 + $0xd4] sm:$0xf] %v1031
  %1096 = vst [vmem:[%s4 + $0xd8] sm:$0xf] %v1032
  %1097 = vst [vmem:[%s4 + $0xdc] sm:$0xf] %v1033
  %1098 = vst [vmem:[%s4 + $0xe0] sm:$0xf] %v1034
  %1099 = vst [vmem:[%s4 + $0xe4] sm:$0xf] %v1035
  %1100 = vst [vmem:[%s4 + $0xe8] sm:$0xf] %v1036
  %1101 = vst [vmem:[%s4 + $0xec] sm:$0xf] %v1037
  %1102 = vst [vmem:[%s4 + $0xf0] sm:$0xf] %v1038
  %1103 = vst [vmem:[%s4 + $0xf4] sm:$0xf] %v1039
  %1104 = vst [vmem:[%s4 + $0xf8] sm:$0xf] %v1040
  %1105 = vst [vmem:[%s4 + $0xfc] sm:$0xf] %v1041
  // Predicated region
  $region14: #{_forward.11} parent=0 // pred_check
    _
  $region15: #{_forward.11} parent=0 // pred_check_branch
    %1107 = sbr.rel (0) target = $region17
  $region16: #{_forward.11} parent=0 // pred_region
    _
  $region17: #{_forward.11} parent=0 // pred_fallthru
    _
  // Predicated region
  $region18: #{_forward.11} parent=0 // pred_check
    _
  $region19: #{_forward.11} parent=0 // pred_check_branch
    %1109 = sbr.rel (0) target = $region21
  $region20: #{_forward.11} parent=0 // pred_region
    _
  $region21: #{_forward.11} parent=0 // pred_fallthru
    _

</llo_original>
